<compile_context>
chip_gen: v6e
topology: v6e:2x2x1
jax: 0.10.0
libtpu: 0.0.40
codegen_flags: <defaults>
</compile_context>

<pallas_src>
import functools
import jax
import jax.numpy as jnp
from jax.experimental import pallas as pl
from jax.experimental.pallas import tpu as pltpu

_EPS = 1e-5            # nn.InstanceNorm2d default eps
_LEAKY_SLOPE = 0.01    # nn.LeakyReLU default negative_slope
_SCALES = 4


# ----------------------------- in-kernel helpers -----------------------------
def _leaky_relu(v):
    return jnp.where(v >= 0, v, _LEAKY_SLOPE * v)


def _sigmoid(v):
    # 1/(1+exp(-v)) == 0.5*(tanh(v/2)+1); tanh runs on the EUP, never overflows.
    return 0.5 * (jnp.tanh(0.5 * v) + 1.0)


def _erf(v):
    # Abramowitz & Stegun 7.1.26 (max abs error ~1.5e-7); only exp/mul/add.
    a1, a2, a3 = 0.254829592, -0.284496736, 1.421413741
    a4, a5, p = -1.453152027, 1.061405429, 0.3275911
    av = jnp.abs(v)
    t = 1.0 / (1.0 + p * av)
    poly = ((((a5 * t + a4) * t + a3) * t + a2) * t + a1) * t
    y = 1.0 - poly * jnp.exp(-av * av)
    return jnp.where(v >= 0, y, -y)


def _gelu(v):
    # exact (erf-based) GELU, matching torch.nn.GELU() default
    return 0.5 * v * (1.0 + _erf(v * 0.7071067811865476))


def _instance_norm(v, Nb, HW):
    # v: (C, Nb*HW) f32 with Nb images side-by-side on the lane axis.
    # Per-image, per-channel normalization; one-pass stats, biased variance.
    parts = []
    for b in range(Nb):
        vb = v[:, b * HW:(b + 1) * HW]
        m = jnp.mean(vb, axis=1, keepdims=True)
        var = jnp.maximum(jnp.mean(vb * vb, axis=1, keepdims=True) - m * m, 0.0)
        parts.append((vb - m) * jax.lax.rsqrt(var + _EPS))
    return parts[0] if Nb == 1 else jnp.concatenate(parts, axis=1)


# --------------------------------- the kernel --------------------------------
def _res2net_kernel(x_ref, m_ref, wsa_ref, bsa_ref, w1_ref, w2_ref,
                    wc1_ref, bc1_ref, wc2_ref, bc2_ref, out_ref,
                    *, W, HW, Nb):
    P, NHW = out_ref.shape                     # (planes, Nb*H*W)
    Cs = P // _SCALES

    masks = m_ref[...]                         # (9, Nb*HW) border masks, f32

    def shift(v, t):
        # Spatial shift by (dy, dx) = (t//3 - 1, t%3 - 1) in flattened space:
        # XLU roll along lanes + zero the out-of-bounds / cross-image border.
        off = (t // 3 - 1) * W + (t % 3 - 1)
        if off == 0:
            return v                           # centre tap: mask is all ones
        rolled = pltpu.roll(v, shift=(-off) % NHW, axis=1)
        return rolled * masks[t:t + 1, :]

    # conv1 (1x1, no bias) -> InstanceNorm -> LeakyReLU
    h = jnp.dot(w1_ref[...], x_ref[...].astype(jnp.bfloat16),
                preferred_element_type=jnp.float32)           # (P, NHW)
    h = _leaky_relu(_instance_norm(h, Nb, HW))

    # Res2Net hierarchical 3x3 convs: im2col built as a value (no VMEM round
    # trip / masked stores), one bf16 MXU dot (Cs, 9*Cs) @ (9*Cs, NHW) / scale.
    ys = [h[0:Cs, :]]
    for s in range(1, _SCALES):
        chunk = h[s * Cs:(s + 1) * Cs, :]
        inp = chunk if s == 1 else chunk + ys[-1]
        patch = jnp.concatenate([shift(inp, t) for t in range(9)],
                                axis=0).astype(jnp.bfloat16)  # (9*Cs, NHW)
        acc = jnp.dot(w2_ref[s - 1], patch,
                      preferred_element_type=jnp.float32)     # (Cs, NHW)
        ys.append(_leaky_relu(_instance_norm(acc, Nb, HW)))

    # Spatial attention: stack the per-branch avg & max rows into one
    # (2*scales, NHW) slab -> a single roll per tap; per-tap weights are an
    # (8,1) column of the (8,9) table loaded once.
    am = jnp.concatenate(
        [jnp.mean(ys[s], axis=0, keepdims=True) for s in range(_SCALES)]
        + [jnp.max(ys[s], axis=0, keepdims=True) for s in range(_SCALES)],
        axis=0)                                               # (2*scales, NHW)
    wsa = wsa_ref[...]                                        # (2*scales, 9)
    att = jnp.zeros((_SCALES, NHW), jnp.float32)
    for t in range(9):
        rw = shift(am, t) * wsa[:, t:t + 1]                   # (2*scales, NHW)
        att = att + rw[0:_SCALES, :] + rw[_SCALES:2 * _SCALES, :]
    att = _sigmoid(att + bsa_ref[...])                        # (scales, NHW)

    # SA-weighted concat (value, lane-dense)
    cat = jnp.concatenate([ys[s] * att[s:s + 1, :] for s in range(_SCALES)],
                          axis=0)                             # (P, NHW)

    # Channel attention (GAP -> 1x1 -> GELU -> 1x1 -> sigmoid) + residual +
    # LeakyReLU, per image, stored with 128-aligned lane-dense slices.
    wc1 = wc1_ref[...]; bc1 = bc1_ref[...]
    wc2 = wc2_ref[...]; bc2 = bc2_ref[...]
    for b in range(Nb):
        lo, hi = b * HW, (b + 1) * HW
        cat_b = cat[:, lo:hi]
        pooled = jnp.mean(cat_b, axis=1, keepdims=True)                         # (P,1)
        z1 = jnp.sum(wc1 * pooled, axis=0, keepdims=True) + bc1                 # (1,Cr)
        z2 = jnp.sum(wc2 * _gelu(z1), axis=1, keepdims=True) + bc2              # (P,1)
        ca_scale = _sigmoid(z2)
        xb = x_ref[:, lo:hi].astype(jnp.float32)              # identity path
        out_ref[:, lo:hi] = _leaky_relu(cat_b * ca_scale + xb).astype(out_ref.dtype)


# --------------------------------- wrapper ------------------------------------
def init_params(key, inplanes, planes, scales=4, reduction=16):
    Cs = planes // scales
    Cr = planes // reduction
    assert planes % scales == 0 and Cr >= 1
    ks = jax.random.split(key, 8)
    s = 0.2
    return {
        # conv1: torch (planes, inplanes, 1, 1) -> (planes, inplanes)
        "w1": s * jax.random.normal(ks[0], (planes, inplanes), jnp.float32),
        # conv2[i]: torch (Cs, Cs, 3, 3) -> (scales-1, Cs, 9*Cs) with
        #   w2[i][co, (ky*3+kx)*Cs + ci] = torch_w[co, ci, ky, kx]
        "w2": s * jax.random.normal(ks[1], (scales - 1, Cs, 9 * Cs), jnp.float32),
        # SA conv: torch (1, 2, 3, 3) -> (9, 2): wsa[ky*3+kx, c]; bias -> (1, 1)
        "wsa": s * jax.random.normal(ks[2], (9, 2), jnp.float32),
        "bsa": s * jax.random.normal(ks[3], (1, 1), jnp.float32),
        # CA fc1: torch (Cr, planes, 1, 1) -> transposed (planes, Cr); bias (1, Cr)
        "wc1": s * jax.random.normal(ks[4], (planes, Cr), jnp.float32),
        "bc1": s * jax.random.normal(ks[5], (1, Cr), jnp.float32),
        # CA fc2: torch (planes, Cr, 1, 1) -> (planes, Cr); bias -> (planes, 1)
        "wc2": s * jax.random.normal(ks[6], (planes, Cr), jnp.float32),
        "bc2": s * jax.random.normal(ks[7], (planes, 1), jnp.float32),
    }


def _pick_batch_block(N, HW, max_lanes=4096):
    nb = 1
    for d in range(1, N + 1):
        if N % d == 0 and d * HW <= max_lanes:
            nb = d
    return nb


def res2net_bottleneck(x_nchw, params):
    N, Cin, H, W = x_nchw.shape
    P = params["w1"].shape[0]
    HW = H * W
    assert Cin == P, "downsample=None requires inplanes == planes"
    assert HW % 128 == 0, "H*W must be a multiple of 128 (pad for other shapes)"

    Nb = _pick_batch_block(N, HW)
    G = N // Nb
    NHW = Nb * HW

    # channels-major slab: (Cin, N*HW), images contiguous along the lane axis.
    x2 = x_nchw.reshape(N, Cin, HW).transpose(1, 0, 2).reshape(Cin, N * HW)

    # 3x3 same-padding border masks for one image, tiled over the Nb images of
    # a batch block (roll wrap across image boundaries lands on masked lanes).
    yy = jnp.arange(HW, dtype=jnp.int32) // W
    xx = jnp.arange(HW, dtype=jnp.int32) % W
    rows = []
    for dy in (-1, 0, 1):
        for dx in (-1, 0, 1):
            valid = ((yy + dy >= 0) & (yy + dy < H) &
                     (xx + dx >= 0) & (xx + dx < W))
            rows.append(valid.astype(jnp.float32))
    masks = jnp.tile(jnp.stack(rows, axis=0), (1, Nb))            # (9, Nb*HW)

    # SA weights as a (2*scales, 9) column table: rows 0:scales carry the
    # avg-channel weight, rows scales:2*scales the max-channel weight.
    wsa_col = jnp.concatenate(
        [jnp.broadcast_to(params["wsa"][:, 0][None, :], (_SCALES, 9)),
         jnp.broadcast_to(params["wsa"][:, 1][None, :], (_SCALES, 9))], axis=0)

    w1 = params["w1"].astype(jnp.bfloat16)      # MXU weights pre-cast to bf16
    w2 = params["w2"].astype(jnp.bfloat16)

    consts = [masks, wsa_col, params["bsa"], w1, w2,
              params["wc1"], params["bc1"], params["wc2"], params["bc2"]]

    def full_spec(a):
        nd = a.ndim
        return pl.BlockSpec(a.shape, lambda g, _nd=nd: (0,) * _nd)

    in_specs = [pl.BlockSpec((Cin, NHW), lambda g: (0, g))] + \
               [full_spec(a) for a in consts]

    out2 = pl.pallas_call(
        functools.partial(_res2net_kernel, W=W, HW=HW, Nb=Nb),
        out_shape=jax.ShapeDtypeStruct((P, N * HW), jnp.float32),
        grid=(G,),
        in_specs=in_specs,
        out_specs=pl.BlockSpec((P, NHW), lambda g: (0, g)),
        compiler_params=pltpu.CompilerParams(
            dimension_semantics=("parallel",),
            vmem_limit_bytes=32 * 1024 * 1024),
    )(x2, *consts)

    return out2.reshape(P, N, HW).transpose(1, 0, 2).reshape(N, P, H, W)


if __name__ == "__main__":
    key = jax.random.PRNGKey(0)
    kx, kp = jax.random.split(key)
    # inplanes = planes = 16 (divisible by scales=4; CA reduction 16 -> width 1)
    N, C, H, W = 2, 16, 16, 16
    x = jax.random.normal(kx, (N, C, H, W), jnp.float32)   # NCHW, like PyTorch
    params = init_params(kp, inplanes=C, planes=C)
    y = res2net_bottleneck(x, params)
    jax.block_until_ready(y)
    assert y.shape == (N, C, H, W) and bool(jnp.all(jnp.isfinite(y)))
    print("KERNEL_OK")
</pallas_src>

<mosaic_0001>
module attributes {stable_mosaic.version = 11 : i64} {
  func.func @_res2net_kernel(%arg0: i32, %arg1: memref<16x512xf32, #tpu.memory_space<vmem>>, %arg2: memref<9x512xf32, #tpu.memory_space<vmem>>, %arg3: memref<8x9xf32, #tpu.memory_space<vmem>>, %arg4: memref<1x1xf32, #tpu.memory_space<vmem>>, %arg5: memref<16x16xbf16, #tpu.memory_space<vmem>>, %arg6: memref<3x4x36xbf16, #tpu.memory_space<vmem>>, %arg7: memref<16x1xf32, #tpu.memory_space<vmem>>, %arg8: memref<1x1xf32, #tpu.memory_space<vmem>>, %arg9: memref<16x1xf32, #tpu.memory_space<vmem>>, %arg10: memref<16x1xf32, #tpu.memory_space<vmem>>, %arg11: memref<16x512xf32, #tpu.memory_space<vmem>>) attributes {dimension_semantics = [#tpu.dimension_semantics<parallel>], iteration_bounds = array<i64: 1>, scalar_prefetch = 0 : i64, scratch_operands = 0 : i64, tpu.core_type = #tpu.core_type<tc>, window_params = [{transform_indices = @transform_0, window_bounds = array<i64: 16, 512>}, {pipeline_mode = #tpu.pipeline_mode<synchronous>, transform_indices = @transform_1, window_bounds = array<i64: 9, 512>}, {pipeline_mode = #tpu.pipeline_mode<synchronous>, transform_indices = @transform_2, window_bounds = array<i64: 8, 9>}, {pipeline_mode = #tpu.pipeline_mode<synchronous>, transform_indices = @transform_3, window_bounds = array<i64: 1, 1>}, {pipeline_mode = #tpu.pipeline_mode<synchronous>, transform_indices = @transform_4, window_bounds = array<i64: 16, 16>}, {pipeline_mode = #tpu.pipeline_mode<synchronous>, transform_indices = @transform_5, window_bounds = array<i64: 3, 4, 36>}, {pipeline_mode = #tpu.pipeline_mode<synchronous>, transform_indices = @transform_6, window_bounds = array<i64: 16, 1>}, {pipeline_mode = #tpu.pipeline_mode<synchronous>, transform_indices = @transform_7, window_bounds = array<i64: 1, 1>}, {pipeline_mode = #tpu.pipeline_mode<synchronous>, transform_indices = @transform_8, window_bounds = array<i64: 16, 1>}, {pipeline_mode = #tpu.pipeline_mode<synchronous>, transform_indices = @transform_9, window_bounds = array<i64: 16, 1>}, {transform_indices = @transform_10, window_bounds = array<i64: 16, 512>}]} {
    %c0 = arith.constant 0 : index
    %c0_0 = arith.constant 0 : index
    %0 = vector.load %arg2[%c0, %c0_0] : memref<9x512xf32, #tpu.memory_space<vmem>>, vector<9x512xf32>
    %c0_1 = arith.constant 0 : index
    %c0_2 = arith.constant 0 : index
    %1 = vector.load %arg5[%c0_1, %c0_2] : memref<16x16xbf16, #tpu.memory_space<vmem>>, vector<16x16xbf16>
    %c0_3 = arith.constant 0 : index
    %c0_4 = arith.constant 0 : index
    %2 = vector.load %arg1[%c0_3, %c0_4] : memref<16x512xf32, #tpu.memory_space<vmem>>, vector<16x512xf32>
    %3 = arith.truncf %2 : vector<16x512xf32> to vector<16x512xbf16>
    %cst = arith.constant dense<0.000000e+00> : vector<16x512xf32>
    %4 = tpu.matmul %1, %3, %cst {dimension_numbers = #tpu.dot_dimension_numbers<[1], [0], [0], [1], [0, 0, 1, 1], [], []>} : vector<16x16xbf16>, vector<16x512xbf16>, vector<16x512xf32> -> vector<16x512xf32>
    %5 = vector.extract_strided_slice %4 {offsets = [0, 0], sizes = [16, 256], strides = [1, 1]} : vector<16x512xf32> to vector<16x256xf32>
    %cst_5 = arith.constant dense<0.000000e+00> : vector<16xf32>
    %6 = vector.multi_reduction <add>, %5, %cst_5 [1] : vector<16x256xf32> to vector<16xf32>
    %7 = vector.shape_cast %6 : vector<16xf32> to vector<16x1xf32>
    %cst_6 = arith.constant 2.560000e+02 : f32
    %8 = vector.broadcast %cst_6 : f32 to vector<16x1xf32>
    %9 = arith.divf %7, %8 : vector<16x1xf32>
    %10 = arith.mulf %5, %5 : vector<16x256xf32>
    %cst_7 = arith.constant dense<0.000000e+00> : vector<16xf32>
    %11 = vector.multi_reduction <add>, %10, %cst_7 [1] : vector<16x256xf32> to vector<16xf32>
    %12 = vector.shape_cast %11 : vector<16xf32> to vector<16x1xf32>
    %cst_8 = arith.constant 2.560000e+02 : f32
    %13 = vector.broadcast %cst_8 : f32 to vector<16x1xf32>
    %14 = arith.divf %12, %13 : vector<16x1xf32>
    %15 = arith.mulf %9, %9 : vector<16x1xf32>
    %16 = arith.subf %14, %15 : vector<16x1xf32>
    %cst_9 = arith.constant 0.000000e+00 : f32
    %17 = vector.broadcast %cst_9 : f32 to vector<16x1xf32>
    %18 = arith.maximumf %16, %17 : vector<16x1xf32>
    %19 = vector.broadcast %9 : vector<16x1xf32> to vector<16x256xf32>
    %20 = arith.subf %5, %19 : vector<16x256xf32>
    %cst_10 = arith.constant 9.99999974E-6 : f32
    %21 = vector.broadcast %cst_10 : f32 to vector<16x1xf32>
    %22 = arith.addf %18, %21 : vector<16x1xf32>
    %23 = math.rsqrt %22 : vector<16x1xf32>
    %24 = vector.broadcast %23 : vector<16x1xf32> to vector<16x256xf32>
    %25 = arith.mulf %20, %24 : vector<16x256xf32>
    %26 = vector.extract_strided_slice %4 {offsets = [0, 256], sizes = [16, 256], strides = [1, 1]} : vector<16x512xf32> to vector<16x256xf32>
    %cst_11 = arith.constant dense<0.000000e+00> : vector<16xf32>
    %27 = vector.multi_reduction <add>, %26, %cst_11 [1] : vector<16x256xf32> to vector<16xf32>
    %28 = vector.shape_cast %27 : vector<16xf32> to vector<16x1xf32>
    %cst_12 = arith.constant 2.560000e+02 : f32
    %29 = vector.broadcast %cst_12 : f32 to vector<16x1xf32>
    %30 = arith.divf %28, %29 : vector<16x1xf32>
    %31 = arith.mulf %26, %26 : vector<16x256xf32>
    %cst_13 = arith.constant dense<0.000000e+00> : vector<16xf32>
    %32 = vector.multi_reduction <add>, %31, %cst_13 [1] : vector<16x256xf32> to vector<16xf32>
    %33 = vector.shape_cast %32 : vector<16xf32> to vector<16x1xf32>
    %cst_14 = arith.constant 2.560000e+02 : f32
    %34 = vector.broadcast %cst_14 : f32 to vector<16x1xf32>
    %35 = arith.divf %33, %34 : vector<16x1xf32>
    %36 = arith.mulf %30, %30 : vector<16x1xf32>
    %37 = arith.subf %35, %36 : vector<16x1xf32>
    %cst_15 = arith.constant 0.000000e+00 : f32
    %38 = vector.broadcast %cst_15 : f32 to vector<16x1xf32>
    %39 = arith.maximumf %37, %38 : vector<16x1xf32>
    %40 = vector.broadcast %30 : vector<16x1xf32> to vector<16x256xf32>
    %41 = arith.subf %26, %40 : vector<16x256xf32>
    %cst_16 = arith.constant 9.99999974E-6 : f32
    %42 = vector.broadcast %cst_16 : f32 to vector<16x1xf32>
    %43 = arith.addf %39, %42 : vector<16x1xf32>
    %44 = math.rsqrt %43 : vector<16x1xf32>
    %45 = vector.broadcast %44 : vector<16x1xf32> to vector<16x256xf32>
    %46 = arith.mulf %41, %45 : vector<16x256xf32>
    %47 = tpu.concatenate %25, %46 in 1 : vector<16x256xf32>, vector<16x256xf32> -> vector<16x512xf32>
    %cst_17 = arith.constant 0.000000e+00 : f32
    %48 = vector.broadcast %cst_17 : f32 to vector<16x512xf32>
    %49 = arith.cmpf oge, %47, %48 : vector<16x512xf32>
    %cst_18 = arith.constant 0.00999999977 : f32
    %50 = vector.broadcast %cst_18 : f32 to vector<16x512xf32>
    %51 = arith.mulf %50, %47 : vector<16x512xf32>
    %52 = arith.select %49, %47, %51 : vector<16x512xi1>, vector<16x512xf32>
    %53 = vector.extract_strided_slice %52 {offsets = [0, 0], sizes = [4, 512], strides = [1, 1]} : vector<16x512xf32> to vector<4x512xf32>
    %54 = vector.extract_strided_slice %52 {offsets = [4, 0], sizes = [4, 512], strides = [1, 1]} : vector<16x512xf32> to vector<4x512xf32>
    %c17_i32 = arith.constant 17 : i32
    %55 = tpu.dynamic_rotate %54 by %c17_i32 dim 1 : vector<4x512xf32>, i32 -> vector<4x512xf32>
    %56 = vector.extract_strided_slice %0 {offsets = [0, 0], sizes = [1, 512], strides = [1, 1]} : vector<9x512xf32> to vector<1x512xf32>
    %57 = vector.broadcast %56 : vector<1x512xf32> to vector<4x512xf32>
    %58 = arith.mulf %55, %57 : vector<4x512xf32>
    %c16_i32 = arith.constant 16 : i32
    %59 = tpu.dynamic_rotate %54 by %c16_i32 dim 1 : vector<4x512xf32>, i32 -> vector<4x512xf32>
    %60 = vector.extract_strided_slice %0 {offsets = [1, 0], sizes = [1, 512], strides = [1, 1]} : vector<9x512xf32> to vector<1x512xf32>
    %61 = vector.broadcast %60 : vector<1x512xf32> to vector<4x512xf32>
    %62 = arith.mulf %59, %61 : vector<4x512xf32>
    %c15_i32 = arith.constant 15 : i32
    %63 = tpu.dynamic_rotate %54 by %c15_i32 dim 1 : vector<4x512xf32>, i32 -> vector<4x512xf32>
    %64 = vector.extract_strided_slice %0 {offsets = [2, 0], sizes = [1, 512], strides = [1, 1]} : vector<9x512xf32> to vector<1x512xf32>
    %65 = vector.broadcast %64 : vector<1x512xf32> to vector<4x512xf32>
    %66 = arith.mulf %63, %65 : vector<4x512xf32>
    %c1_i32 = arith.constant 1 : i32
    %67 = tpu.dynamic_rotate %54 by %c1_i32 dim 1 : vector<4x512xf32>, i32 -> vector<4x512xf32>
    %68 = vector.extract_strided_slice %0 {offsets = [3, 0], sizes = [1, 512], strides = [1, 1]} : vector<9x512xf32> to vector<1x512xf32>
    %69 = vector.broadcast %68 : vector<1x512xf32> to vector<4x512xf32>
    %70 = arith.mulf %67, %69 : vector<4x512xf32>
    %c511_i32 = arith.constant 511 : i32
    %71 = tpu.dynamic_rotate %54 by %c511_i32 dim 1 : vector<4x512xf32>, i32 -> vector<4x512xf32>
    %72 = vector.extract_strided_slice %0 {offsets = [5, 0], sizes = [1, 512], strides = [1, 1]} : vector<9x512xf32> to vector<1x512xf32>
    %73 = vector.broadcast %72 : vector<1x512xf32> to vector<4x512xf32>
    %74 = arith.mulf %71, %73 : vector<4x512xf32>
    %c497_i32 = arith.constant 497 : i32
    %75 = tpu.dynamic_rotate %54 by %c497_i32 dim 1 : vector<4x512xf32>, i32 -> vector<4x512xf32>
    %76 = vector.extract_strided_slice %0 {offsets = [6, 0], sizes = [1, 512], strides = [1, 1]} : vector<9x512xf32> to vector<1x512xf32>
    %77 = vector.broadcast %76 : vector<1x512xf32> to vector<4x512xf32>
    %78 = arith.mulf %75, %77 : vector<4x512xf32>
    %c496_i32 = arith.constant 496 : i32
    %79 = tpu.dynamic_rotate %54 by %c496_i32 dim 1 : vector<4x512xf32>, i32 -> vector<4x512xf32>
    %80 = vector.extract_strided_slice %0 {offsets = [7, 0], sizes = [1, 512], strides = [1, 1]} : vector<9x512xf32> to vector<1x512xf32>
    %81 = vector.broadcast %80 : vector<1x512xf32> to vector<4x512xf32>
    %82 = arith.mulf %79, %81 : vector<4x512xf32>
    %c495_i32 = arith.constant 495 : i32
    %83 = tpu.dynamic_rotate %54 by %c495_i32 dim 1 : vector<4x512xf32>, i32 -> vector<4x512xf32>
    %84 = vector.extract_strided_slice %0 {offsets = [8, 0], sizes = [1, 512], strides = [1, 1]} : vector<9x512xf32> to vector<1x512xf32>
    %85 = vector.broadcast %84 : vector<1x512xf32> to vector<4x512xf32>
    %86 = arith.mulf %83, %85 : vector<4x512xf32>
    %87 = tpu.concatenate %58, %62, %66, %70, %54, %74, %78, %82, %86 in 0 : vector<4x512xf32>, vector<4x512xf32>, vector<4x512xf32>, vector<4x512xf32>, vector<4x512xf32>, vector<4x512xf32>, vector<4x512xf32>, vector<4x512xf32>, vector<4x512xf32> -> vector<36x512xf32>
    %88 = arith.truncf %87 : vector<36x512xf32> to vector<36x512xbf16>
    %c0_19 = arith.constant 0 : index
    %c0_20 = arith.constant 0 : index
    %c0_21 = arith.constant 0 : index
    %89 = vector.load %arg6[%c0_19, %c0_20, %c0_21] : memref<3x4x36xbf16, #tpu.memory_space<vmem>>, vector<1x4x36xbf16>
    %90 = vector.shape_cast %89 : vector<1x4x36xbf16> to vector<4x36xbf16>
    %cst_22 = arith.constant dense<0.000000e+00> : vector<4x512xf32>
    %91 = tpu.matmul %90, %88, %cst_22 {dimension_numbers = #tpu.dot_dimension_numbers<[1], [0], [0], [1], [0, 0, 1, 1], [], []>} : vector<4x36xbf16>, vector<36x512xbf16>, vector<4x512xf32> -> vector<4x512xf32>
    %92 = vector.extract_strided_slice %91 {offsets = [0, 0], sizes = [4, 256], strides = [1, 1]} : vector<4x512xf32> to vector<4x256xf32>
    %cst_23 = arith.constant dense<0.000000e+00> : vector<4xf32>
    %93 = vector.multi_reduction <add>, %92, %cst_23 [1] : vector<4x256xf32> to vector<4xf32>
    %94 = vector.shape_cast %93 : vector<4xf32> to vector<4x1xf32>
    %cst_24 = arith.constant 2.560000e+02 : f32
    %95 = vector.broadcast %cst_24 : f32 to vector<4x1xf32>
    %96 = arith.divf %94, %95 : vector<4x1xf32>
    %97 = arith.mulf %92, %92 : vector<4x256xf32>
    %cst_25 = arith.constant dense<0.000000e+00> : vector<4xf32>
    %98 = vector.multi_reduction <add>, %97, %cst_25 [1] : vector<4x256xf32> to vector<4xf32>
    %99 = vector.shape_cast %98 : vector<4xf32> to vector<4x1xf32>
    %cst_26 = arith.constant 2.560000e+02 : f32
    %100 = vector.broadcast %cst_26 : f32 to vector<4x1xf32>
    %101 = arith.divf %99, %100 : vector<4x1xf32>
    %102 = arith.mulf %96, %96 : vector<4x1xf32>
    %103 = arith.subf %101, %102 : vector<4x1xf32>
    %cst_27 = arith.constant 0.000000e+00 : f32
    %104 = vector.broadcast %cst_27 : f32 to vector<4x1xf32>
    %105 = arith.maximumf %103, %104 : vector<4x1xf32>
    %106 = vector.broadcast %96 : vector<4x1xf32> to vector<4x256xf32>
    %107 = arith.subf %92, %106 : vector<4x256xf32>
    %cst_28 = arith.constant 9.99999974E-6 : f32
    %108 = vector.broadcast %cst_28 : f32 to vector<4x1xf32>
    %109 = arith.addf %105, %108 : vector<4x1xf32>
    %110 = math.rsqrt %109 : vector<4x1xf32>
    %111 = vector.broadcast %110 : vector<4x1xf32> to vector<4x256xf32>
    %112 = arith.mulf %107, %111 : vector<4x256xf32>
    %113 = vector.extract_strided_slice %91 {offsets = [0, 256], sizes = [4, 256], strides = [1, 1]} : vector<4x512xf32> to vector<4x256xf32>
    %cst_29 = arith.constant dense<0.000000e+00> : vector<4xf32>
    %114 = vector.multi_reduction <add>, %113, %cst_29 [1] : vector<4x256xf32> to vector<4xf32>
    %115 = vector.shape_cast %114 : vector<4xf32> to vector<4x1xf32>
    %cst_30 = arith.constant 2.560000e+02 : f32
    %116 = vector.broadcast %cst_30 : f32 to vector<4x1xf32>
    %117 = arith.divf %115, %116 : vector<4x1xf32>
    %118 = arith.mulf %113, %113 : vector<4x256xf32>
    %cst_31 = arith.constant dense<0.000000e+00> : vector<4xf32>
    %119 = vector.multi_reduction <add>, %118, %cst_31 [1] : vector<4x256xf32> to vector<4xf32>
    %120 = vector.shape_cast %119 : vector<4xf32> to vector<4x1xf32>
    %cst_32 = arith.constant 2.560000e+02 : f32
    %121 = vector.broadcast %cst_32 : f32 to vector<4x1xf32>
    %122 = arith.divf %120, %121 : vector<4x1xf32>
    %123 = arith.mulf %117, %117 : vector<4x1xf32>
    %124 = arith.subf %122, %123 : vector<4x1xf32>
    %cst_33 = arith.constant 0.000000e+00 : f32
    %125 = vector.broadcast %cst_33 : f32 to vector<4x1xf32>
    %126 = arith.maximumf %124, %125 : vector<4x1xf32>
    %127 = vector.broadcast %117 : vector<4x1xf32> to vector<4x256xf32>
    %128 = arith.subf %113, %127 : vector<4x256xf32>
    %cst_34 = arith.constant 9.99999974E-6 : f32
    %129 = vector.broadcast %cst_34 : f32 to vector<4x1xf32>
    %130 = arith.addf %126, %129 : vector<4x1xf32>
    %131 = math.rsqrt %130 : vector<4x1xf32>
    %132 = vector.broadcast %131 : vector<4x1xf32> to vector<4x256xf32>
    %133 = arith.mulf %128, %132 : vector<4x256xf32>
    %134 = tpu.concatenate %112, %133 in 1 : vector<4x256xf32>, vector<4x256xf32> -> vector<4x512xf32>
    %cst_35 = arith.constant 0.000000e+00 : f32
    %135 = vector.broadcast %cst_35 : f32 to vector<4x512xf32>
    %136 = arith.cmpf oge, %134, %135 : vector<4x512xf32>
    %cst_36 = arith.constant 0.00999999977 : f32
    %137 = vector.broadcast %cst_36 : f32 to vector<4x512xf32>
    %138 = arith.mulf %137, %134 : vector<4x512xf32>
    %139 = arith.select %136, %134, %138 : vector<4x512xi1>, vector<4x512xf32>
    %140 = vector.extract_strided_slice %52 {offsets = [8, 0], sizes = [4, 512], strides = [1, 1]} : vector<16x512xf32> to vector<4x512xf32>
    %141 = arith.addf %140, %139 : vector<4x512xf32>
    %c17_i32_37 = arith.constant 17 : i32
    %142 = tpu.dynamic_rotate %141 by %c17_i32_37 dim 1 : vector<4x512xf32>, i32 -> vector<4x512xf32>
    %143 = vector.extract_strided_slice %0 {offsets = [0, 0], sizes = [1, 512], strides = [1, 1]} : vector<9x512xf32> to vector<1x512xf32>
    %144 = vector.broadcast %143 : vector<1x512xf32> to vector<4x512xf32>
    %145 = arith.mulf %142, %144 : vector<4x512xf32>
    %c16_i32_38 = arith.constant 16 : i32
    %146 = tpu.dynamic_rotate %141 by %c16_i32_38 dim 1 : vector<4x512xf32>, i32 -> vector<4x512xf32>
    %147 = vector.extract_strided_slice %0 {offsets = [1, 0], sizes = [1, 512], strides = [1, 1]} : vector<9x512xf32> to vector<1x512xf32>
    %148 = vector.broadcast %147 : vector<1x512xf32> to vector<4x512xf32>
    %149 = arith.mulf %146, %148 : vector<4x512xf32>
    %c15_i32_39 = arith.constant 15 : i32
    %150 = tpu.dynamic_rotate %141 by %c15_i32_39 dim 1 : vector<4x512xf32>, i32 -> vector<4x512xf32>
    %151 = vector.extract_strided_slice %0 {offsets = [2, 0], sizes = [1, 512], strides = [1, 1]} : vector<9x512xf32> to vector<1x512xf32>
    %152 = vector.broadcast %151 : vector<1x512xf32> to vector<4x512xf32>
    %153 = arith.mulf %150, %152 : vector<4x512xf32>
    %c1_i32_40 = arith.constant 1 : i32
    %154 = tpu.dynamic_rotate %141 by %c1_i32_40 dim 1 : vector<4x512xf32>, i32 -> vector<4x512xf32>
    %155 = vector.extract_strided_slice %0 {offsets = [3, 0], sizes = [1, 512], strides = [1, 1]} : vector<9x512xf32> to vector<1x512xf32>
    %156 = vector.broadcast %155 : vector<1x512xf32> to vector<4x512xf32>
    %157 = arith.mulf %154, %156 : vector<4x512xf32>
    %c511_i32_41 = arith.constant 511 : i32
    %158 = tpu.dynamic_rotate %141 by %c511_i32_41 dim 1 : vector<4x512xf32>, i32 -> vector<4x512xf32>
    %159 = vector.extract_strided_slice %0 {offsets = [5, 0], sizes = [1, 512], strides = [1, 1]} : vector<9x512xf32> to vector<1x512xf32>
    %160 = vector.broadcast %159 : vector<1x512xf32> to vector<4x512xf32>
    %161 = arith.mulf %158, %160 : vector<4x512xf32>
    %c497_i32_42 = arith.constant 497 : i32
    %162 = tpu.dynamic_rotate %141 by %c497_i32_42 dim 1 : vector<4x512xf32>, i32 -> vector<4x512xf32>
    %163 = vector.extract_strided_slice %0 {offsets = [6, 0], sizes = [1, 512], strides = [1, 1]} : vector<9x512xf32> to vector<1x512xf32>
    %164 = vector.broadcast %163 : vector<1x512xf32> to vector<4x512xf32>
    %165 = arith.mulf %162, %164 : vector<4x512xf32>
    %c496_i32_43 = arith.constant 496 : i32
    %166 = tpu.dynamic_rotate %141 by %c496_i32_43 dim 1 : vector<4x512xf32>, i32 -> vector<4x512xf32>
    %167 = vector.extract_strided_slice %0 {offsets = [7, 0], sizes = [1, 512], strides = [1, 1]} : vector<9x512xf32> to vector<1x512xf32>
    %168 = vector.broadcast %167 : vector<1x512xf32> to vector<4x512xf32>
    %169 = arith.mulf %166, %168 : vector<4x512xf32>
    %c495_i32_44 = arith.constant 495 : i32
    %170 = tpu.dynamic_rotate %141 by %c495_i32_44 dim 1 : vector<4x512xf32>, i32 -> vector<4x512xf32>
    %171 = vector.extract_strided_slice %0 {offsets = [8, 0], sizes = [1, 512], strides = [1, 1]} : vector<9x512xf32> to vector<1x512xf32>
    %172 = vector.broadcast %171 : vector<1x512xf32> to vector<4x512xf32>
    %173 = arith.mulf %170, %172 : vector<4x512xf32>
    %174 = tpu.concatenate %145, %149, %153, %157, %141, %161, %165, %169, %173 in 0 : vector<4x512xf32>, vector<4x512xf32>, vector<4x512xf32>, vector<4x512xf32>, vector<4x512xf32>, vector<4x512xf32>, vector<4x512xf32>, vector<4x512xf32>, vector<4x512xf32> -> vector<36x512xf32>
    %175 = arith.truncf %174 : vector<36x512xf32> to vector<36x512xbf16>
    %c1 = arith.constant 1 : index
    %c0_45 = arith.constant 0 : index
    %c0_46 = arith.constant 0 : index
    %176 = vector.load %arg6[%c1, %c0_45, %c0_46] : memref<3x4x36xbf16, #tpu.memory_space<vmem>>, vector<1x4x36xbf16>
    %177 = vector.shape_cast %176 : vector<1x4x36xbf16> to vector<4x36xbf16>
    %cst_47 = arith.constant dense<0.000000e+00> : vector<4x512xf32>
    %178 = tpu.matmul %177, %175, %cst_47 {dimension_numbers = #tpu.dot_dimension_numbers<[1], [0], [0], [1], [0, 0, 1, 1], [], []>} : vector<4x36xbf16>, vector<36x512xbf16>, vector<4x512xf32> -> vector<4x512xf32>
    %179 = vector.extract_strided_slice %178 {offsets = [0, 0], sizes = [4, 256], strides = [1, 1]} : vector<4x512xf32> to vector<4x256xf32>
    %cst_48 = arith.constant dense<0.000000e+00> : vector<4xf32>
    %180 = vector.multi_reduction <add>, %179, %cst_48 [1] : vector<4x256xf32> to vector<4xf32>
    %181 = vector.shape_cast %180 : vector<4xf32> to vector<4x1xf32>
    %cst_49 = arith.constant 2.560000e+02 : f32
    %182 = vector.broadcast %cst_49 : f32 to vector<4x1xf32>
    %183 = arith.divf %181, %182 : vector<4x1xf32>
    %184 = arith.mulf %179, %179 : vector<4x256xf32>
    %cst_50 = arith.constant dense<0.000000e+00> : vector<4xf32>
    %185 = vector.multi_reduction <add>, %184, %cst_50 [1] : vector<4x256xf32> to vector<4xf32>
    %186 = vector.shape_cast %185 : vector<4xf32> to vector<4x1xf32>
    %cst_51 = arith.constant 2.560000e+02 : f32
    %187 = vector.broadcast %cst_51 : f32 to vector<4x1xf32>
    %188 = arith.divf %186, %187 : vector<4x1xf32>
    %189 = arith.mulf %183, %183 : vector<4x1xf32>
    %190 = arith.subf %188, %189 : vector<4x1xf32>
    %cst_52 = arith.constant 0.000000e+00 : f32
    %191 = vector.broadcast %cst_52 : f32 to vector<4x1xf32>
    %192 = arith.maximumf %190, %191 : vector<4x1xf32>
    %193 = vector.broadcast %183 : vector<4x1xf32> to vector<4x256xf32>
    %194 = arith.subf %179, %193 : vector<4x256xf32>
    %cst_53 = arith.constant 9.99999974E-6 : f32
    %195 = vector.broadcast %cst_53 : f32 to vector<4x1xf32>
    %196 = arith.addf %192, %195 : vector<4x1xf32>
    %197 = math.rsqrt %196 : vector<4x1xf32>
    %198 = vector.broadcast %197 : vector<4x1xf32> to vector<4x256xf32>
    %199 = arith.mulf %194, %198 : vector<4x256xf32>
    %200 = vector.extract_strided_slice %178 {offsets = [0, 256], sizes = [4, 256], strides = [1, 1]} : vector<4x512xf32> to vector<4x256xf32>
    %cst_54 = arith.constant dense<0.000000e+00> : vector<4xf32>
    %201 = vector.multi_reduction <add>, %200, %cst_54 [1] : vector<4x256xf32> to vector<4xf32>
    %202 = vector.shape_cast %201 : vector<4xf32> to vector<4x1xf32>
    %cst_55 = arith.constant 2.560000e+02 : f32
    %203 = vector.broadcast %cst_55 : f32 to vector<4x1xf32>
    %204 = arith.divf %202, %203 : vector<4x1xf32>
    %205 = arith.mulf %200, %200 : vector<4x256xf32>
    %cst_56 = arith.constant dense<0.000000e+00> : vector<4xf32>
    %206 = vector.multi_reduction <add>, %205, %cst_56 [1] : vector<4x256xf32> to vector<4xf32>
    %207 = vector.shape_cast %206 : vector<4xf32> to vector<4x1xf32>
    %cst_57 = arith.constant 2.560000e+02 : f32
    %208 = vector.broadcast %cst_57 : f32 to vector<4x1xf32>
    %209 = arith.divf %207, %208 : vector<4x1xf32>
    %210 = arith.mulf %204, %204 : vector<4x1xf32>
    %211 = arith.subf %209, %210 : vector<4x1xf32>
    %cst_58 = arith.constant 0.000000e+00 : f32
    %212 = vector.broadcast %cst_58 : f32 to vector<4x1xf32>
    %213 = arith.maximumf %211, %212 : vector<4x1xf32>
    %214 = vector.broadcast %204 : vector<4x1xf32> to vector<4x256xf32>
    %215 = arith.subf %200, %214 : vector<4x256xf32>
    %cst_59 = arith.constant 9.99999974E-6 : f32
    %216 = vector.broadcast %cst_59 : f32 to vector<4x1xf32>
    %217 = arith.addf %213, %216 : vector<4x1xf32>
    %218 = math.rsqrt %217 : vector<4x1xf32>
    %219 = vector.broadcast %218 : vector<4x1xf32> to vector<4x256xf32>
    %220 = arith.mulf %215, %219 : vector<4x256xf32>
    %221 = tpu.concatenate %199, %220 in 1 : vector<4x256xf32>, vector<4x256xf32> -> vector<4x512xf32>
    %cst_60 = arith.constant 0.000000e+00 : f32
    %222 = vector.broadcast %cst_60 : f32 to vector<4x512xf32>
    %223 = arith.cmpf oge, %221, %222 : vector<4x512xf32>
    %cst_61 = arith.constant 0.00999999977 : f32
    %224 = vector.broadcast %cst_61 : f32 to vector<4x512xf32>
    %225 = arith.mulf %224, %221 : vector<4x512xf32>
    %226 = arith.select %223, %221, %225 : vector<4x512xi1>, vector<4x512xf32>
    %227 = vector.extract_strided_slice %52 {offsets = [12, 0], sizes = [4, 512], strides = [1, 1]} : vector<16x512xf32> to vector<4x512xf32>
    %228 = arith.addf %227, %226 : vector<4x512xf32>
    %c17_i32_62 = arith.constant 17 : i32
    %229 = tpu.dynamic_rotate %228 by %c17_i32_62 dim 1 : vector<4x512xf32>, i32 -> vector<4x512xf32>
    %230 = vector.extract_strided_slice %0 {offsets = [0, 0], sizes = [1, 512], strides = [1, 1]} : vector<9x512xf32> to vector<1x512xf32>
    %231 = vector.broadcast %230 : vector<1x512xf32> to vector<4x512xf32>
    %232 = arith.mulf %229, %231 : vector<4x512xf32>
    %c16_i32_63 = arith.constant 16 : i32
    %233 = tpu.dynamic_rotate %228 by %c16_i32_63 dim 1 : vector<4x512xf32>, i32 -> vector<4x512xf32>
    %234 = vector.extract_strided_slice %0 {offsets = [1, 0], sizes = [1, 512], strides = [1, 1]} : vector<9x512xf32> to vector<1x512xf32>
    %235 = vector.broadcast %234 : vector<1x512xf32> to vector<4x512xf32>
    %236 = arith.mulf %233, %235 : vector<4x512xf32>
    %c15_i32_64 = arith.constant 15 : i32
    %237 = tpu.dynamic_rotate %228 by %c15_i32_64 dim 1 : vector<4x512xf32>, i32 -> vector<4x512xf32>
    %238 = vector.extract_strided_slice %0 {offsets = [2, 0], sizes = [1, 512], strides = [1, 1]} : vector<9x512xf32> to vector<1x512xf32>
    %239 = vector.broadcast %238 : vector<1x512xf32> to vector<4x512xf32>
    %240 = arith.mulf %237, %239 : vector<4x512xf32>
    %c1_i32_65 = arith.constant 1 : i32
    %241 = tpu.dynamic_rotate %228 by %c1_i32_65 dim 1 : vector<4x512xf32>, i32 -> vector<4x512xf32>
    %242 = vector.extract_strided_slice %0 {offsets = [3, 0], sizes = [1, 512], strides = [1, 1]} : vector<9x512xf32> to vector<1x512xf32>
    %243 = vector.broadcast %242 : vector<1x512xf32> to vector<4x512xf32>
    %244 = arith.mulf %241, %243 : vector<4x512xf32>
    %c511_i32_66 = arith.constant 511 : i32
    %245 = tpu.dynamic_rotate %228 by %c511_i32_66 dim 1 : vector<4x512xf32>, i32 -> vector<4x512xf32>
    %246 = vector.extract_strided_slice %0 {offsets = [5, 0], sizes = [1, 512], strides = [1, 1]} : vector<9x512xf32> to vector<1x512xf32>
    %247 = vector.broadcast %246 : vector<1x512xf32> to vector<4x512xf32>
    %248 = arith.mulf %245, %247 : vector<4x512xf32>
    %c497_i32_67 = arith.constant 497 : i32
    %249 = tpu.dynamic_rotate %228 by %c497_i32_67 dim 1 : vector<4x512xf32>, i32 -> vector<4x512xf32>
    %250 = vector.extract_strided_slice %0 {offsets = [6, 0], sizes = [1, 512], strides = [1, 1]} : vector<9x512xf32> to vector<1x512xf32>
    %251 = vector.broadcast %250 : vector<1x512xf32> to vector<4x512xf32>
    %252 = arith.mulf %249, %251 : vector<4x512xf32>
    %c496_i32_68 = arith.constant 496 : i32
    %253 = tpu.dynamic_rotate %228 by %c496_i32_68 dim 1 : vector<4x512xf32>, i32 -> vector<4x512xf32>
    %254 = vector.extract_strided_slice %0 {offsets = [7, 0], sizes = [1, 512], strides = [1, 1]} : vector<9x512xf32> to vector<1x512xf32>
    %255 = vector.broadcast %254 : vector<1x512xf32> to vector<4x512xf32>
    %256 = arith.mulf %253, %255 : vector<4x512xf32>
    %c495_i32_69 = arith.constant 495 : i32
    %257 = tpu.dynamic_rotate %228 by %c495_i32_69 dim 1 : vector<4x512xf32>, i32 -> vector<4x512xf32>
    %258 = vector.extract_strided_slice %0 {offsets = [8, 0], sizes = [1, 512], strides = [1, 1]} : vector<9x512xf32> to vector<1x512xf32>
    %259 = vector.broadcast %258 : vector<1x512xf32> to vector<4x512xf32>
    %260 = arith.mulf %257, %259 : vector<4x512xf32>
    %261 = tpu.concatenate %232, %236, %240, %244, %228, %248, %252, %256, %260 in 0 : vector<4x512xf32>, vector<4x512xf32>, vector<4x512xf32>, vector<4x512xf32>, vector<4x512xf32>, vector<4x512xf32>, vector<4x512xf32>, vector<4x512xf32>, vector<4x512xf32> -> vector<36x512xf32>
    %262 = arith.truncf %261 : vector<36x512xf32> to vector<36x512xbf16>
    %c2 = arith.constant 2 : index
    %c0_70 = arith.constant 0 : index
    %c0_71 = arith.constant 0 : index
    %263 = vector.load %arg6[%c2, %c0_70, %c0_71] : memref<3x4x36xbf16, #tpu.memory_space<vmem>>, vector<1x4x36xbf16>
    %264 = vector.shape_cast %263 : vector<1x4x36xbf16> to vector<4x36xbf16>
    %cst_72 = arith.constant dense<0.000000e+00> : vector<4x512xf32>
    %265 = tpu.matmul %264, %262, %cst_72 {dimension_numbers = #tpu.dot_dimension_numbers<[1], [0], [0], [1], [0, 0, 1, 1], [], []>} : vector<4x36xbf16>, vector<36x512xbf16>, vector<4x512xf32> -> vector<4x512xf32>
    %266 = vector.extract_strided_slice %265 {offsets = [0, 0], sizes = [4, 256], strides = [1, 1]} : vector<4x512xf32> to vector<4x256xf32>
    %cst_73 = arith.constant dense<0.000000e+00> : vector<4xf32>
    %267 = vector.multi_reduction <add>, %266, %cst_73 [1] : vector<4x256xf32> to vector<4xf32>
    %268 = vector.shape_cast %267 : vector<4xf32> to vector<4x1xf32>
    %cst_74 = arith.constant 2.560000e+02 : f32
    %269 = vector.broadcast %cst_74 : f32 to vector<4x1xf32>
    %270 = arith.divf %268, %269 : vector<4x1xf32>
    %271 = arith.mulf %266, %266 : vector<4x256xf32>
    %cst_75 = arith.constant dense<0.000000e+00> : vector<4xf32>
    %272 = vector.multi_reduction <add>, %271, %cst_75 [1] : vector<4x256xf32> to vector<4xf32>
    %273 = vector.shape_cast %272 : vector<4xf32> to vector<4x1xf32>
    %cst_76 = arith.constant 2.560000e+02 : f32
    %274 = vector.broadcast %cst_76 : f32 to vector<4x1xf32>
    %275 = arith.divf %273, %274 : vector<4x1xf32>
    %276 = arith.mulf %270, %270 : vector<4x1xf32>
    %277 = arith.subf %275, %276 : vector<4x1xf32>
    %cst_77 = arith.constant 0.000000e+00 : f32
    %278 = vector.broadcast %cst_77 : f32 to vector<4x1xf32>
    %279 = arith.maximumf %277, %278 : vector<4x1xf32>
    %280 = vector.broadcast %270 : vector<4x1xf32> to vector<4x256xf32>
    %281 = arith.subf %266, %280 : vector<4x256xf32>
    %cst_78 = arith.constant 9.99999974E-6 : f32
    %282 = vector.broadcast %cst_78 : f32 to vector<4x1xf32>
    %283 = arith.addf %279, %282 : vector<4x1xf32>
    %284 = math.rsqrt %283 : vector<4x1xf32>
    %285 = vector.broadcast %284 : vector<4x1xf32> to vector<4x256xf32>
    %286 = arith.mulf %281, %285 : vector<4x256xf32>
    %287 = vector.extract_strided_slice %265 {offsets = [0, 256], sizes = [4, 256], strides = [1, 1]} : vector<4x512xf32> to vector<4x256xf32>
    %cst_79 = arith.constant dense<0.000000e+00> : vector<4xf32>
    %288 = vector.multi_reduction <add>, %287, %cst_79 [1] : vector<4x256xf32> to vector<4xf32>
    %289 = vector.shape_cast %288 : vector<4xf32> to vector<4x1xf32>
    %cst_80 = arith.constant 2.560000e+02 : f32
    %290 = vector.broadcast %cst_80 : f32 to vector<4x1xf32>
    %291 = arith.divf %289, %290 : vector<4x1xf32>
    %292 = arith.mulf %287, %287 : vector<4x256xf32>
    %cst_81 = arith.constant dense<0.000000e+00> : vector<4xf32>
    %293 = vector.multi_reduction <add>, %292, %cst_81 [1] : vector<4x256xf32> to vector<4xf32>
    %294 = vector.shape_cast %293 : vector<4xf32> to vector<4x1xf32>
    %cst_82 = arith.constant 2.560000e+02 : f32
    %295 = vector.broadcast %cst_82 : f32 to vector<4x1xf32>
    %296 = arith.divf %294, %295 : vector<4x1xf32>
    %297 = arith.mulf %291, %291 : vector<4x1xf32>
    %298 = arith.subf %296, %297 : vector<4x1xf32>
    %cst_83 = arith.constant 0.000000e+00 : f32
    %299 = vector.broadcast %cst_83 : f32 to vector<4x1xf32>
    %300 = arith.maximumf %298, %299 : vector<4x1xf32>
    %301 = vector.broadcast %291 : vector<4x1xf32> to vector<4x256xf32>
    %302 = arith.subf %287, %301 : vector<4x256xf32>
    %cst_84 = arith.constant 9.99999974E-6 : f32
    %303 = vector.broadcast %cst_84 : f32 to vector<4x1xf32>
    %304 = arith.addf %300, %303 : vector<4x1xf32>
    %305 = math.rsqrt %304 : vector<4x1xf32>
    %306 = vector.broadcast %305 : vector<4x1xf32> to vector<4x256xf32>
    %307 = arith.mulf %302, %306 : vector<4x256xf32>
    %308 = tpu.concatenate %286, %307 in 1 : vector<4x256xf32>, vector<4x256xf32> -> vector<4x512xf32>
    %cst_85 = arith.constant 0.000000e+00 : f32
    %309 = vector.broadcast %cst_85 : f32 to vector<4x512xf32>
    %310 = arith.cmpf oge, %308, %309 : vector<4x512xf32>
    %cst_86 = arith.constant 0.00999999977 : f32
    %311 = vector.broadcast %cst_86 : f32 to vector<4x512xf32>
    %312 = arith.mulf %311, %308 : vector<4x512xf32>
    %313 = arith.select %310, %308, %312 : vector<4x512xi1>, vector<4x512xf32>
    %cst_87 = arith.constant dense<0.000000e+00> : vector<512xf32>
    %314 = vector.multi_reduction <add>, %53, %cst_87 [0] : vector<4x512xf32> to vector<512xf32>
    %315 = vector.shape_cast %314 : vector<512xf32> to vector<1x512xf32>
    %cst_88 = arith.constant 4.000000e+00 : f32
    %316 = vector.broadcast %cst_88 : f32 to vector<1x512xf32>
    %317 = arith.divf %315, %316 : vector<1x512xf32>
    %cst_89 = arith.constant dense<0.000000e+00> : vector<512xf32>
    %318 = vector.multi_reduction <add>, %139, %cst_89 [0] : vector<4x512xf32> to vector<512xf32>
    %319 = vector.shape_cast %318 : vector<512xf32> to vector<1x512xf32>
    %cst_90 = arith.constant 4.000000e+00 : f32
    %320 = vector.broadcast %cst_90 : f32 to vector<1x512xf32>
    %321 = arith.divf %319, %320 : vector<1x512xf32>
    %cst_91 = arith.constant dense<0.000000e+00> : vector<512xf32>
    %322 = vector.multi_reduction <add>, %226, %cst_91 [0] : vector<4x512xf32> to vector<512xf32>
    %323 = vector.shape_cast %322 : vector<512xf32> to vector<1x512xf32>
    %cst_92 = arith.constant 4.000000e+00 : f32
    %324 = vector.broadcast %cst_92 : f32 to vector<1x512xf32>
    %325 = arith.divf %323, %324 : vector<1x512xf32>
    %cst_93 = arith.constant dense<0.000000e+00> : vector<512xf32>
    %326 = vector.multi_reduction <add>, %313, %cst_93 [0] : vector<4x512xf32> to vector<512xf32>
    %327 = vector.shape_cast %326 : vector<512xf32> to vector<1x512xf32>
    %cst_94 = arith.constant 4.000000e+00 : f32
    %328 = vector.broadcast %cst_94 : f32 to vector<1x512xf32>
    %329 = arith.divf %327, %328 : vector<1x512xf32>
    %cst_95 = arith.constant dense<0xFF800000> : vector<512xf32>
    %330 = vector.multi_reduction <maximumf>, %53, %cst_95 [0] : vector<4x512xf32> to vector<512xf32>
    %331 = vector.shape_cast %330 : vector<512xf32> to vector<1x512xf32>
    %cst_96 = arith.constant dense<0xFF800000> : vector<512xf32>
    %332 = vector.multi_reduction <maximumf>, %139, %cst_96 [0] : vector<4x512xf32> to vector<512xf32>
    %333 = vector.shape_cast %332 : vector<512xf32> to vector<1x512xf32>
    %cst_97 = arith.constant dense<0xFF800000> : vector<512xf32>
    %334 = vector.multi_reduction <maximumf>, %226, %cst_97 [0] : vector<4x512xf32> to vector<512xf32>
    %335 = vector.shape_cast %334 : vector<512xf32> to vector<1x512xf32>
    %cst_98 = arith.constant dense<0xFF800000> : vector<512xf32>
    %336 = vector.multi_reduction <maximumf>, %313, %cst_98 [0] : vector<4x512xf32> to vector<512xf32>
    %337 = vector.shape_cast %336 : vector<512xf32> to vector<1x512xf32>
    %338 = tpu.concatenate %317, %321, %325, %329, %331, %333, %335, %337 in 0 : vector<1x512xf32>, vector<1x512xf32>, vector<1x512xf32>, vector<1x512xf32>, vector<1x512xf32>, vector<1x512xf32>, vector<1x512xf32>, vector<1x512xf32> -> vector<8x512xf32>
    %c0_99 = arith.constant 0 : index
    %c0_100 = arith.constant 0 : index
    %339 = vector.load %arg3[%c0_99, %c0_100] : memref<8x9xf32, #tpu.memory_space<vmem>>, vector<8x9xf32>
    %cst_101 = arith.constant 0.000000e+00 : f32
    %340 = vector.broadcast %cst_101 : f32 to vector<4x512xf32>
    %c17_i32_102 = arith.constant 17 : i32
    %341 = tpu.dynamic_rotate %338 by %c17_i32_102 dim 1 : vector<8x512xf32>, i32 -> vector<8x512xf32>
    %342 = vector.extract_strided_slice %0 {offsets = [0, 0], sizes = [1, 512], strides = [1, 1]} : vector<9x512xf32> to vector<1x512xf32>
    %343 = vector.broadcast %342 : vector<1x512xf32> to vector<8x512xf32>
    %344 = arith.mulf %341, %343 : vector<8x512xf32>
    %345 = vector.extract_strided_slice %339 {offsets = [0, 0], sizes = [8, 1], strides = [1, 1]} : vector<8x9xf32> to vector<8x1xf32>
    %346 = vector.broadcast %345 : vector<8x1xf32> to vector<8x512xf32>
    %347 = arith.mulf %344, %346 : vector<8x512xf32>
    %348 = vector.extract_strided_slice %347 {offsets = [0, 0], sizes = [4, 512], strides = [1, 1]} : vector<8x512xf32> to vector<4x512xf32>
    %349 = arith.addf %340, %348 : vector<4x512xf32>
    %350 = vector.extract_strided_slice %347 {offsets = [4, 0], sizes = [4, 512], strides = [1, 1]} : vector<8x512xf32> to vector<4x512xf32>
    %351 = arith.addf %349, %350 : vector<4x512xf32>
    %c16_i32_103 = arith.constant 16 : i32
    %352 = tpu.dynamic_rotate %338 by %c16_i32_103 dim 1 : vector<8x512xf32>, i32 -> vector<8x512xf32>
    %353 = vector.extract_strided_slice %0 {offsets = [1, 0], sizes = [1, 512], strides = [1, 1]} : vector<9x512xf32> to vector<1x512xf32>
    %354 = vector.broadcast %353 : vector<1x512xf32> to vector<8x512xf32>
    %355 = arith.mulf %352, %354 : vector<8x512xf32>
    %356 = vector.extract_strided_slice %339 {offsets = [0, 1], sizes = [8, 1], strides = [1, 1]} : vector<8x9xf32> to vector<8x1xf32>
    %357 = vector.broadcast %356 : vector<8x1xf32> to vector<8x512xf32>
    %358 = arith.mulf %355, %357 : vector<8x512xf32>
    %359 = vector.extract_strided_slice %358 {offsets = [0, 0], sizes = [4, 512], strides = [1, 1]} : vector<8x512xf32> to vector<4x512xf32>
    %360 = arith.addf %351, %359 : vector<4x512xf32>
    %361 = vector.extract_strided_slice %358 {offsets = [4, 0], sizes = [4, 512], strides = [1, 1]} : vector<8x512xf32> to vector<4x512xf32>
    %362 = arith.addf %360, %361 : vector<4x512xf32>
    %c15_i32_104 = arith.constant 15 : i32
    %363 = tpu.dynamic_rotate %338 by %c15_i32_104 dim 1 : vector<8x512xf32>, i32 -> vector<8x512xf32>
    %364 = vector.extract_strided_slice %0 {offsets = [2, 0], sizes = [1, 512], strides = [1, 1]} : vector<9x512xf32> to vector<1x512xf32>
    %365 = vector.broadcast %364 : vector<1x512xf32> to vector<8x512xf32>
    %366 = arith.mulf %363, %365 : vector<8x512xf32>
    %367 = vector.extract_strided_slice %339 {offsets = [0, 2], sizes = [8, 1], strides = [1, 1]} : vector<8x9xf32> to vector<8x1xf32>
    %368 = vector.broadcast %367 : vector<8x1xf32> to vector<8x512xf32>
    %369 = arith.mulf %366, %368 : vector<8x512xf32>
    %370 = vector.extract_strided_slice %369 {offsets = [0, 0], sizes = [4, 512], strides = [1, 1]} : vector<8x512xf32> to vector<4x512xf32>
    %371 = arith.addf %362, %370 : vector<4x512xf32>
    %372 = vector.extract_strided_slice %369 {offsets = [4, 0], sizes = [4, 512], strides = [1, 1]} : vector<8x512xf32> to vector<4x512xf32>
    %373 = arith.addf %371, %372 : vector<4x512xf32>
    %c1_i32_105 = arith.constant 1 : i32
    %374 = tpu.dynamic_rotate %338 by %c1_i32_105 dim 1 : vector<8x512xf32>, i32 -> vector<8x512xf32>
    %375 = vector.extract_strided_slice %0 {offsets = [3, 0], sizes = [1, 512], strides = [1, 1]} : vector<9x512xf32> to vector<1x512xf32>
    %376 = vector.broadcast %375 : vector<1x512xf32> to vector<8x512xf32>
    %377 = arith.mulf %374, %376 : vector<8x512xf32>
    %378 = vector.extract_strided_slice %339 {offsets = [0, 3], sizes = [8, 1], strides = [1, 1]} : vector<8x9xf32> to vector<8x1xf32>
    %379 = vector.broadcast %378 : vector<8x1xf32> to vector<8x512xf32>
    %380 = arith.mulf %377, %379 : vector<8x512xf32>
    %381 = vector.extract_strided_slice %380 {offsets = [0, 0], sizes = [4, 512], strides = [1, 1]} : vector<8x512xf32> to vector<4x512xf32>
    %382 = arith.addf %373, %381 : vector<4x512xf32>
    %383 = vector.extract_strided_slice %380 {offsets = [4, 0], sizes = [4, 512], strides = [1, 1]} : vector<8x512xf32> to vector<4x512xf32>
    %384 = arith.addf %382, %383 : vector<4x512xf32>
    %385 = vector.extract_strided_slice %339 {offsets = [0, 4], sizes = [8, 1], strides = [1, 1]} : vector<8x9xf32> to vector<8x1xf32>
    %386 = vector.broadcast %385 : vector<8x1xf32> to vector<8x512xf32>
    %387 = arith.mulf %338, %386 : vector<8x512xf32>
    %388 = vector.extract_strided_slice %387 {offsets = [0, 0], sizes = [4, 512], strides = [1, 1]} : vector<8x512xf32> to vector<4x512xf32>
    %389 = arith.addf %384, %388 : vector<4x512xf32>
    %390 = vector.extract_strided_slice %387 {offsets = [4, 0], sizes = [4, 512], strides = [1, 1]} : vector<8x512xf32> to vector<4x512xf32>
    %391 = arith.addf %389, %390 : vector<4x512xf32>
    %c511_i32_106 = arith.constant 511 : i32
    %392 = tpu.dynamic_rotate %338 by %c511_i32_106 dim 1 : vector<8x512xf32>, i32 -> vector<8x512xf32>
    %393 = vector.extract_strided_slice %0 {offsets = [5, 0], sizes = [1, 512], strides = [1, 1]} : vector<9x512xf32> to vector<1x512xf32>
    %394 = vector.broadcast %393 : vector<1x512xf32> to vector<8x512xf32>
    %395 = arith.mulf %392, %394 : vector<8x512xf32>
    %396 = vector.extract_strided_slice %339 {offsets = [0, 5], sizes = [8, 1], strides = [1, 1]} : vector<8x9xf32> to vector<8x1xf32>
    %397 = vector.broadcast %396 : vector<8x1xf32> to vector<8x512xf32>
    %398 = arith.mulf %395, %397 : vector<8x512xf32>
    %399 = vector.extract_strided_slice %398 {offsets = [0, 0], sizes = [4, 512], strides = [1, 1]} : vector<8x512xf32> to vector<4x512xf32>
    %400 = arith.addf %391, %399 : vector<4x512xf32>
    %401 = vector.extract_strided_slice %398 {offsets = [4, 0], sizes = [4, 512], strides = [1, 1]} : vector<8x512xf32> to vector<4x512xf32>
    %402 = arith.addf %400, %401 : vector<4x512xf32>
    %c497_i32_107 = arith.constant 497 : i32
    %403 = tpu.dynamic_rotate %338 by %c497_i32_107 dim 1 : vector<8x512xf32>, i32 -> vector<8x512xf32>
    %404 = vector.extract_strided_slice %0 {offsets = [6, 0], sizes = [1, 512], strides = [1, 1]} : vector<9x512xf32> to vector<1x512xf32>
    %405 = vector.broadcast %404 : vector<1x512xf32> to vector<8x512xf32>
    %406 = arith.mulf %403, %405 : vector<8x512xf32>
    %407 = vector.extract_strided_slice %339 {offsets = [0, 6], sizes = [8, 1], strides = [1, 1]} : vector<8x9xf32> to vector<8x1xf32>
    %408 = vector.broadcast %407 : vector<8x1xf32> to vector<8x512xf32>
    %409 = arith.mulf %406, %408 : vector<8x512xf32>
    %410 = vector.extract_strided_slice %409 {offsets = [0, 0], sizes = [4, 512], strides = [1, 1]} : vector<8x512xf32> to vector<4x512xf32>
    %411 = arith.addf %402, %410 : vector<4x512xf32>
    %412 = vector.extract_strided_slice %409 {offsets = [4, 0], sizes = [4, 512], strides = [1, 1]} : vector<8x512xf32> to vector<4x512xf32>
    %413 = arith.addf %411, %412 : vector<4x512xf32>
    %c496_i32_108 = arith.constant 496 : i32
    %414 = tpu.dynamic_rotate %338 by %c496_i32_108 dim 1 : vector<8x512xf32>, i32 -> vector<8x512xf32>
    %415 = vector.extract_strided_slice %0 {offsets = [7, 0], sizes = [1, 512], strides = [1, 1]} : vector<9x512xf32> to vector<1x512xf32>
    %416 = vector.broadcast %415 : vector<1x512xf32> to vector<8x512xf32>
    %417 = arith.mulf %414, %416 : vector<8x512xf32>
    %418 = vector.extract_strided_slice %339 {offsets = [0, 7], sizes = [8, 1], strides = [1, 1]} : vector<8x9xf32> to vector<8x1xf32>
    %419 = vector.broadcast %418 : vector<8x1xf32> to vector<8x512xf32>
    %420 = arith.mulf %417, %419 : vector<8x512xf32>
    %421 = vector.extract_strided_slice %420 {offsets = [0, 0], sizes = [4, 512], strides = [1, 1]} : vector<8x512xf32> to vector<4x512xf32>
    %422 = arith.addf %413, %421 : vector<4x512xf32>
    %423 = vector.extract_strided_slice %420 {offsets = [4, 0], sizes = [4, 512], strides = [1, 1]} : vector<8x512xf32> to vector<4x512xf32>
    %424 = arith.addf %422, %423 : vector<4x512xf32>
    %c495_i32_109 = arith.constant 495 : i32
    %425 = tpu.dynamic_rotate %338 by %c495_i32_109 dim 1 : vector<8x512xf32>, i32 -> vector<8x512xf32>
    %426 = vector.extract_strided_slice %0 {offsets = [8, 0], sizes = [1, 512], strides = [1, 1]} : vector<9x512xf32> to vector<1x512xf32>
    %427 = vector.broadcast %426 : vector<1x512xf32> to vector<8x512xf32>
    %428 = arith.mulf %425, %427 : vector<8x512xf32>
    %429 = vector.extract_strided_slice %339 {offsets = [0, 8], sizes = [8, 1], strides = [1, 1]} : vector<8x9xf32> to vector<8x1xf32>
    %430 = vector.broadcast %429 : vector<8x1xf32> to vector<8x512xf32>
    %431 = arith.mulf %428, %430 : vector<8x512xf32>
    %432 = vector.extract_strided_slice %431 {offsets = [0, 0], sizes = [4, 512], strides = [1, 1]} : vector<8x512xf32> to vector<4x512xf32>
    %433 = arith.addf %424, %432 : vector<4x512xf32>
    %434 = vector.extract_strided_slice %431 {offsets = [4, 0], sizes = [4, 512], strides = [1, 1]} : vector<8x512xf32> to vector<4x512xf32>
    %435 = arith.addf %433, %434 : vector<4x512xf32>
    %c0_110 = arith.constant 0 : index
    %c0_111 = arith.constant 0 : index
    %436 = vector.load %arg4[%c0_110, %c0_111] : memref<1x1xf32, #tpu.memory_space<vmem>>, vector<1x1xf32>
    %437 = vector.broadcast %436 : vector<1x1xf32> to vector<4x512xf32>
    %438 = arith.addf %435, %437 : vector<4x512xf32>
    %cst_112 = arith.constant 5.000000e-01 : f32
    %439 = vector.broadcast %cst_112 : f32 to vector<4x512xf32>
    %440 = arith.mulf %439, %438 : vector<4x512xf32>
    %441 = math.tanh %440 : vector<4x512xf32>
    %cst_113 = arith.constant 1.000000e+00 : f32
    %442 = vector.broadcast %cst_113 : f32 to vector<4x512xf32>
    %443 = arith.addf %441, %442 : vector<4x512xf32>
    %cst_114 = arith.constant 5.000000e-01 : f32
    %444 = vector.broadcast %cst_114 : f32 to vector<4x512xf32>
    %445 = arith.mulf %444, %443 : vector<4x512xf32>
    %446 = vector.extract_strided_slice %445 {offsets = [0, 0], sizes = [1, 512], strides = [1, 1]} : vector<4x512xf32> to vector<1x512xf32>
    %447 = vector.broadcast %446 : vector<1x512xf32> to vector<4x512xf32>
    %448 = arith.mulf %53, %447 : vector<4x512xf32>
    %449 = vector.extract_strided_slice %445 {offsets = [1, 0], sizes = [1, 512], strides = [1, 1]} : vector<4x512xf32> to vector<1x512xf32>
    %450 = vector.broadcast %449 : vector<1x512xf32> to vector<4x512xf32>
    %451 = arith.mulf %139, %450 : vector<4x512xf32>
    %452 = vector.extract_strided_slice %445 {offsets = [2, 0], sizes = [1, 512], strides = [1, 1]} : vector<4x512xf32> to vector<1x512xf32>
    %453 = vector.broadcast %452 : vector<1x512xf32> to vector<4x512xf32>
    %454 = arith.mulf %226, %453 : vector<4x512xf32>
    %455 = vector.extract_strided_slice %445 {offsets = [3, 0], sizes = [1, 512], strides = [1, 1]} : vector<4x512xf32> to vector<1x512xf32>
    %456 = vector.broadcast %455 : vector<1x512xf32> to vector<4x512xf32>
    %457 = arith.mulf %313, %456 : vector<4x512xf32>
    %458 = tpu.concatenate %448, %451, %454, %457 in 0 : vector<4x512xf32>, vector<4x512xf32>, vector<4x512xf32>, vector<4x512xf32> -> vector<16x512xf32>
    %c0_115 = arith.constant 0 : index
    %c0_116 = arith.constant 0 : index
    %459 = vector.load %arg7[%c0_115, %c0_116] : memref<16x1xf32, #tpu.memory_space<vmem>>, vector<16x1xf32>
    %c0_117 = arith.constant 0 : index
    %c0_118 = arith.constant 0 : index
    %460 = vector.load %arg8[%c0_117, %c0_118] : memref<1x1xf32, #tpu.memory_space<vmem>>, vector<1x1xf32>
    %c0_119 = arith.constant 0 : index
    %c0_120 = arith.constant 0 : index
    %461 = vector.load %arg9[%c0_119, %c0_120] : memref<16x1xf32, #tpu.memory_space<vmem>>, vector<16x1xf32>
    %c0_121 = arith.constant 0 : index
    %c0_122 = arith.constant 0 : index
    %462 = vector.load %arg10[%c0_121, %c0_122] : memref<16x1xf32, #tpu.memory_space<vmem>>, vector<16x1xf32>
    %463 = vector.extract_strided_slice %458 {offsets = [0, 0], sizes = [16, 256], strides = [1, 1]} : vector<16x512xf32> to vector<16x256xf32>
    %cst_123 = arith.constant dense<0.000000e+00> : vector<16xf32>
    %464 = vector.multi_reduction <add>, %463, %cst_123 [1] : vector<16x256xf32> to vector<16xf32>
    %465 = vector.shape_cast %464 : vector<16xf32> to vector<16x1xf32>
    %cst_124 = arith.constant 2.560000e+02 : f32
    %466 = vector.broadcast %cst_124 : f32 to vector<16x1xf32>
    %467 = arith.divf %465, %466 : vector<16x1xf32>
    %468 = arith.mulf %459, %467 : vector<16x1xf32>
    %cst_125 = arith.constant dense<0.000000e+00> : vector<1xf32>
    %469 = vector.multi_reduction <add>, %468, %cst_125 [0] : vector<16x1xf32> to vector<1xf32>
    %470 = vector.shape_cast %469 : vector<1xf32> to vector<1x1xf32>
    %471 = arith.addf %470, %460 : vector<1x1xf32>
    %cst_126 = arith.constant 5.000000e-01 : f32
    %472 = vector.broadcast %cst_126 : f32 to vector<1x1xf32>
    %473 = arith.mulf %472, %471 : vector<1x1xf32>
    %cst_127 = arith.constant 0.707106769 : f32
    %474 = vector.broadcast %cst_127 : f32 to vector<1x1xf32>
    %475 = arith.mulf %471, %474 : vector<1x1xf32>
    %476 = math.absf %475 : vector<1x1xf32>
    %cst_128 = arith.constant 0.327591091 : f32
    %477 = vector.broadcast %cst_128 : f32 to vector<1x1xf32>
    %478 = arith.mulf %477, %476 : vector<1x1xf32>
    %cst_129 = arith.constant 1.000000e+00 : f32
    %479 = vector.broadcast %cst_129 : f32 to vector<1x1xf32>
    %480 = arith.addf %479, %478 : vector<1x1xf32>
    %cst_130 = arith.constant 1.000000e+00 : f32
    %481 = vector.broadcast %cst_130 : f32 to vector<1x1xf32>
    %482 = arith.divf %481, %480 : vector<1x1xf32>
    %cst_131 = arith.constant 1.06140542 : f32
    %483 = vector.broadcast %cst_131 : f32 to vector<1x1xf32>
    %484 = arith.mulf %483, %482 : vector<1x1xf32>
    %cst_132 = arith.constant -1.45315206 : f32
    %485 = vector.broadcast %cst_132 : f32 to vector<1x1xf32>
    %486 = arith.addf %484, %485 : vector<1x1xf32>
    %487 = arith.mulf %486, %482 : vector<1x1xf32>
    %cst_133 = arith.constant 1.42141378 : f32
    %488 = vector.broadcast %cst_133 : f32 to vector<1x1xf32>
    %489 = arith.addf %487, %488 : vector<1x1xf32>
    %490 = arith.mulf %489, %482 : vector<1x1xf32>
    %cst_134 = arith.constant -0.284496725 : f32
    %491 = vector.broadcast %cst_134 : f32 to vector<1x1xf32>
    %492 = arith.addf %490, %491 : vector<1x1xf32>
    %493 = arith.mulf %492, %482 : vector<1x1xf32>
    %cst_135 = arith.constant 0.254829586 : f32
    %494 = vector.broadcast %cst_135 : f32 to vector<1x1xf32>
    %495 = arith.addf %493, %494 : vector<1x1xf32>
    %496 = arith.mulf %495, %482 : vector<1x1xf32>
    %cst_136 = arith.constant 0.000000e+00 : f32
    %497 = vector.broadcast %cst_136 : f32 to vector<1x1xf32>
    %498 = arith.subf %497, %476 : vector<1x1xf32>
    %499 = arith.mulf %498, %476 : vector<1x1xf32>
    %500 = math.exp %499 : vector<1x1xf32>
    %501 = arith.mulf %496, %500 : vector<1x1xf32>
    %cst_137 = arith.constant 1.000000e+00 : f32
    %502 = vector.broadcast %cst_137 : f32 to vector<1x1xf32>
    %503 = arith.subf %502, %501 : vector<1x1xf32>
    %cst_138 = arith.constant 0.000000e+00 : f32
    %504 = vector.broadcast %cst_138 : f32 to vector<1x1xf32>
    %505 = arith.cmpf oge, %475, %504 : vector<1x1xf32>
    %cst_139 = arith.constant 0.000000e+00 : f32
    %506 = vector.broadcast %cst_139 : f32 to vector<1x1xf32>
    %507 = arith.subf %506, %503 : vector<1x1xf32>
    %508 = arith.select %505, %503, %507 : vector<1x1xi1>, vector<1x1xf32>
    %cst_140 = arith.constant 1.000000e+00 : f32
    %509 = vector.broadcast %cst_140 : f32 to vector<1x1xf32>
    %510 = arith.addf %509, %508 : vector<1x1xf32>
    %511 = arith.mulf %473, %510 : vector<1x1xf32>
    %512 = vector.broadcast %511 : vector<1x1xf32> to vector<16x1xf32>
    %513 = arith.mulf %461, %512 : vector<16x1xf32>
    %cst_141 = arith.constant dense<0.000000e+00> : vector<16xf32>
    %514 = vector.multi_reduction <add>, %513, %cst_141 [1] : vector<16x1xf32> to vector<16xf32>
    %515 = vector.shape_cast %514 : vector<16xf32> to vector<16x1xf32>
    %516 = arith.addf %515, %462 : vector<16x1xf32>
    %cst_142 = arith.constant 5.000000e-01 : f32
    %517 = vector.broadcast %cst_142 : f32 to vector<16x1xf32>
    %518 = arith.mulf %517, %516 : vector<16x1xf32>
    %519 = math.tanh %518 : vector<16x1xf32>
    %cst_143 = arith.constant 1.000000e+00 : f32
    %520 = vector.broadcast %cst_143 : f32 to vector<16x1xf32>
    %521 = arith.addf %519, %520 : vector<16x1xf32>
    %cst_144 = arith.constant 5.000000e-01 : f32
    %522 = vector.broadcast %cst_144 : f32 to vector<16x1xf32>
    %523 = arith.mulf %522, %521 : vector<16x1xf32>
    %c0_145 = arith.constant 0 : index
    %c0_146 = arith.constant 0 : index
    %524 = vector.load %arg1[%c0_145, %c0_146] : memref<16x512xf32, #tpu.memory_space<vmem>>, vector<16x256xf32>
    %525 = vector.broadcast %523 : vector<16x1xf32> to vector<16x256xf32>
    %526 = arith.mulf %463, %525 : vector<16x256xf32>
    %527 = arith.addf %526, %524 : vector<16x256xf32>
    %cst_147 = arith.constant 0.000000e+00 : f32
    %528 = vector.broadcast %cst_147 : f32 to vector<16x256xf32>
    %529 = arith.cmpf oge, %527, %528 : vector<16x256xf32>
    %cst_148 = arith.constant 0.00999999977 : f32
    %530 = vector.broadcast %cst_148 : f32 to vector<16x256xf32>
    %531 = arith.mulf %530, %527 : vector<16x256xf32>
    %532 = arith.select %529, %527, %531 : vector<16x256xi1>, vector<16x256xf32>
    %c0_149 = arith.constant 0 : index
    %c0_150 = arith.constant 0 : index
    %533 = vector.load %arg11[%c0_149, %c0_150] : memref<16x512xf32, #tpu.memory_space<vmem>>, vector<16x256xf32>
    tpu.vector_store %arg11[%c0_149, %c0_150], %532 {strides = array<i32>} : memref<16x512xf32, #tpu.memory_space<vmem>>, vector<16x256xf32>,
    %534 = vector.extract_strided_slice %458 {offsets = [0, 256], sizes = [16, 256], strides = [1, 1]} : vector<16x512xf32> to vector<16x256xf32>
    %cst_151 = arith.constant dense<0.000000e+00> : vector<16xf32>
    %535 = vector.multi_reduction <add>, %534, %cst_151 [1] : vector<16x256xf32> to vector<16xf32>
    %536 = vector.shape_cast %535 : vector<16xf32> to vector<16x1xf32>
    %cst_152 = arith.constant 2.560000e+02 : f32
    %537 = vector.broadcast %cst_152 : f32 to vector<16x1xf32>
    %538 = arith.divf %536, %537 : vector<16x1xf32>
    %539 = arith.mulf %459, %538 : vector<16x1xf32>
    %cst_153 = arith.constant dense<0.000000e+00> : vector<1xf32>
    %540 = vector.multi_reduction <add>, %539, %cst_153 [0] : vector<16x1xf32> to vector<1xf32>
    %541 = vector.shape_cast %540 : vector<1xf32> to vector<1x1xf32>
    %542 = arith.addf %541, %460 : vector<1x1xf32>
    %cst_154 = arith.constant 5.000000e-01 : f32
    %543 = vector.broadcast %cst_154 : f32 to vector<1x1xf32>
    %544 = arith.mulf %543, %542 : vector<1x1xf32>
    %cst_155 = arith.constant 0.707106769 : f32
    %545 = vector.broadcast %cst_155 : f32 to vector<1x1xf32>
    %546 = arith.mulf %542, %545 : vector<1x1xf32>
    %547 = math.absf %546 : vector<1x1xf32>
    %cst_156 = arith.constant 0.327591091 : f32
    %548 = vector.broadcast %cst_156 : f32 to vector<1x1xf32>
    %549 = arith.mulf %548, %547 : vector<1x1xf32>
    %cst_157 = arith.constant 1.000000e+00 : f32
    %550 = vector.broadcast %cst_157 : f32 to vector<1x1xf32>
    %551 = arith.addf %550, %549 : vector<1x1xf32>
    %cst_158 = arith.constant 1.000000e+00 : f32
    %552 = vector.broadcast %cst_158 : f32 to vector<1x1xf32>
    %553 = arith.divf %552, %551 : vector<1x1xf32>
    %cst_159 = arith.constant 1.06140542 : f32
    %554 = vector.broadcast %cst_159 : f32 to vector<1x1xf32>
    %555 = arith.mulf %554, %553 : vector<1x1xf32>
    %cst_160 = arith.constant -1.45315206 : f32
    %556 = vector.broadcast %cst_160 : f32 to vector<1x1xf32>
    %557 = arith.addf %555, %556 : vector<1x1xf32>
    %558 = arith.mulf %557, %553 : vector<1x1xf32>
    %cst_161 = arith.constant 1.42141378 : f32
    %559 = vector.broadcast %cst_161 : f32 to vector<1x1xf32>
    %560 = arith.addf %558, %559 : vector<1x1xf32>
    %561 = arith.mulf %560, %553 : vector<1x1xf32>
    %cst_162 = arith.constant -0.284496725 : f32
    %562 = vector.broadcast %cst_162 : f32 to vector<1x1xf32>
    %563 = arith.addf %561, %562 : vector<1x1xf32>
    %564 = arith.mulf %563, %553 : vector<1x1xf32>
    %cst_163 = arith.constant 0.254829586 : f32
    %565 = vector.broadcast %cst_163 : f32 to vector<1x1xf32>
    %566 = arith.addf %564, %565 : vector<1x1xf32>
    %567 = arith.mulf %566, %553 : vector<1x1xf32>
    %cst_164 = arith.constant 0.000000e+00 : f32
    %568 = vector.broadcast %cst_164 : f32 to vector<1x1xf32>
    %569 = arith.subf %568, %547 : vector<1x1xf32>
    %570 = arith.mulf %569, %547 : vector<1x1xf32>
    %571 = math.exp %570 : vector<1x1xf32>
    %572 = arith.mulf %567, %571 : vector<1x1xf32>
    %cst_165 = arith.constant 1.000000e+00 : f32
    %573 = vector.broadcast %cst_165 : f32 to vector<1x1xf32>
    %574 = arith.subf %573, %572 : vector<1x1xf32>
    %cst_166 = arith.constant 0.000000e+00 : f32
    %575 = vector.broadcast %cst_166 : f32 to vector<1x1xf32>
    %576 = arith.cmpf oge, %546, %575 : vector<1x1xf32>
    %cst_167 = arith.constant 0.000000e+00 : f32
    %577 = vector.broadcast %cst_167 : f32 to vector<1x1xf32>
    %578 = arith.subf %577, %574 : vector<1x1xf32>
    %579 = arith.select %576, %574, %578 : vector<1x1xi1>, vector<1x1xf32>
    %cst_168 = arith.constant 1.000000e+00 : f32
    %580 = vector.broadcast %cst_168 : f32 to vector<1x1xf32>
    %581 = arith.addf %580, %579 : vector<1x1xf32>
    %582 = arith.mulf %544, %581 : vector<1x1xf32>
    %583 = vector.broadcast %582 : vector<1x1xf32> to vector<16x1xf32>
    %584 = arith.mulf %461, %583 : vector<16x1xf32>
    %cst_169 = arith.constant dense<0.000000e+00> : vector<16xf32>
    %585 = vector.multi_reduction <add>, %584, %cst_169 [1] : vector<16x1xf32> to vector<16xf32>
    %586 = vector.shape_cast %585 : vector<16xf32> to vector<16x1xf32>
    %587 = arith.addf %586, %462 : vector<16x1xf32>
    %cst_170 = arith.constant 5.000000e-01 : f32
    %588 = vector.broadcast %cst_170 : f32 to vector<16x1xf32>
    %589 = arith.mulf %588, %587 : vector<16x1xf32>
    %590 = math.tanh %589 : vector<16x1xf32>
    %cst_171 = arith.constant 1.000000e+00 : f32
    %591 = vector.broadcast %cst_171 : f32 to vector<16x1xf32>
    %592 = arith.addf %590, %591 : vector<16x1xf32>
    %cst_172 = arith.constant 5.000000e-01 : f32
    %593 = vector.broadcast %cst_172 : f32 to vector<16x1xf32>
    %594 = arith.mulf %593, %592 : vector<16x1xf32>
    %c0_173 = arith.constant 0 : index
    %c256 = arith.constant 256 : index
    %595 = vector.load %arg1[%c0_173, %c256] : memref<16x512xf32, #tpu.memory_space<vmem>>, vector<16x256xf32>
    %596 = vector.broadcast %594 : vector<16x1xf32> to vector<16x256xf32>
    %597 = arith.mulf %534, %596 : vector<16x256xf32>
    %598 = arith.addf %597, %595 : vector<16x256xf32>
    %cst_174 = arith.constant 0.000000e+00 : f32
    %599 = vector.broadcast %cst_174 : f32 to vector<16x256xf32>
    %600 = arith.cmpf oge, %598, %599 : vector<16x256xf32>
    %cst_175 = arith.constant 0.00999999977 : f32
    %601 = vector.broadcast %cst_175 : f32 to vector<16x256xf32>
    %602 = arith.mulf %601, %598 : vector<16x256xf32>
    %603 = arith.select %600, %598, %602 : vector<16x256xi1>, vector<16x256xf32>
    %c0_176 = arith.constant 0 : index
    %c256_177 = arith.constant 256 : index
    %604 = vector.load %arg11[%c0_176, %c256_177] : memref<16x512xf32, #tpu.memory_space<vmem>>, vector<16x256xf32>
    tpu.vector_store %arg11[%c0_176, %c256_177], %603 {strides = array<i32>} : memref<16x512xf32, #tpu.memory_space<vmem>>, vector<16x256xf32>,
    return
  }
  func.func @transform_0(%arg0: i32) -> (i32, i32) {
    %c0_i32 = arith.constant 0 : i32
    %c0_i32_0 = arith.constant 0 : i32
    return %c0_i32, %arg0 : i32, i32
  }
  func.func @transform_1(%arg0: i32) -> (i32, i32) {
    %c0_i32 = arith.constant 0 : i32
    %c0_i32_0 = arith.constant 0 : i32
    %c0_i32_1 = arith.constant 0 : i32
    return %c0_i32, %c0_i32_0 : i32, i32
  }
  func.func @transform_2(%arg0: i32) -> (i32, i32) {
    %c0_i32 = arith.constant 0 : i32
    %c0_i32_0 = arith.constant 0 : i32
    %c0_i32_1 = arith.constant 0 : i32
    return %c0_i32, %c0_i32_0 : i32, i32
  }
  func.func @transform_3(%arg0: i32) -> (i32, i32) {
    %c0_i32 = arith.constant 0 : i32
    %c0_i32_0 = arith.constant 0 : i32
    %c0_i32_1 = arith.constant 0 : i32
    return %c0_i32, %c0_i32_0 : i32, i32
  }
  func.func @transform_4(%arg0: i32) -> (i32, i32) {
    %c0_i32 = arith.constant 0 : i32
    %c0_i32_0 = arith.constant 0 : i32
    %c0_i32_1 = arith.constant 0 : i32
    return %c0_i32, %c0_i32_0 : i32, i32
  }
  func.func @transform_5(%arg0: i32) -> (i32, i32, i32) {
    %c0_i32 = arith.constant 0 : i32
    %c0_i32_0 = arith.constant 0 : i32
    %c0_i32_1 = arith.constant 0 : i32
    %c0_i32_2 = arith.constant 0 : i32
    return %c0_i32, %c0_i32_0, %c0_i32_1 : i32, i32, i32
  }
  func.func @transform_6(%arg0: i32) -> (i32, i32) {
    %c0_i32 = arith.constant 0 : i32
    %c0_i32_0 = arith.constant 0 : i32
    %c0_i32_1 = arith.constant 0 : i32
    return %c0_i32, %c0_i32_0 : i32, i32
  }
  func.func @transform_7(%arg0: i32) -> (i32, i32) {
    %c0_i32 = arith.constant 0 : i32
    %c0_i32_0 = arith.constant 0 : i32
    %c0_i32_1 = arith.constant 0 : i32
    return %c0_i32, %c0_i32_0 : i32, i32
  }
  func.func @transform_8(%arg0: i32) -> (i32, i32) {
    %c0_i32 = arith.constant 0 : i32
    %c0_i32_0 = arith.constant 0 : i32
    %c0_i32_1 = arith.constant 0 : i32
    return %c0_i32, %c0_i32_0 : i32, i32
  }
  func.func @transform_9(%arg0: i32) -> (i32, i32) {
    %c0_i32 = arith.constant 0 : i32
    %c0_i32_0 = arith.constant 0 : i32
    %c0_i32_1 = arith.constant 0 : i32
    return %c0_i32, %c0_i32_0 : i32, i32
  }
  func.func @transform_10(%arg0: i32) -> (i32, i32) {
    %c0_i32 = arith.constant 0 : i32
    %c0_i32_0 = arith.constant 0 : i32
    return %c0_i32, %arg0 : i32, i32
  }
}

</mosaic_0001>

<llo_original>
// kernel: tpu_custom_call.1
$region0: #{tpu_custom_call.1}
  #allocation0 [shape = 'u32[]', space=smem, size = 0x4, offset = 0x4, fixed_abs, tag = 'smem constant byte address 0x4 - core index']
  #allocation1 [shape = 'u32[144,128]{1,0:T(1,128)}', space=vmem, size = 0x12000, scoped, tag = 'internal scratch']
  #allocation2 [shape = 'f32[1,1]{1,0:T(1,128)S(1)}', space=vmem, size = 0x200, scoped, tag = 'scoped memory for tpu_custom_call.1']
  #allocation3 [shape = 'f32[1,1]{1,0:T(1,128)S(1)}', space=vmem, size = 0x200, scoped, tag = 'scoped memory for tpu_custom_call.1']
  %s0 = inlined_call_operand.hbm [shape: f32[16,512], index: 0, kind: input, shape index: {}]
  %s1 = inlined_call_operand.hbm [shape: f32[9,512], index: 1, kind: input, shape index: {}]
  %s2 = inlined_call_operand.vmem [shape: f32[8,9], index: 2, kind: input, shape index: {}]
  %s3 = inlined_call_operand.<no memory space> [shape: f32[1,1], index: 3, kind: input, shape index: {}]
  %s4 = inlined_call_operand.vmem [shape: bf16[16,16], index: 4, kind: input, shape index: {}]
  %s5 = inlined_call_operand.vmem [shape: bf16[3,4,36], index: 5, kind: input, shape index: {}]
  %s6 = inlined_call_operand.vmem [shape: f32[16,1], index: 6, kind: input, shape index: {}]
  %s7 = inlined_call_operand.<no memory space> [shape: f32[1,1], index: 7, kind: input, shape index: {}]
  %s8 = inlined_call_operand.vmem [shape: f32[16,1], index: 8, kind: input, shape index: {}]
  %s9 = inlined_call_operand.vmem [shape: f32[16,1], index: 9, kind: input, shape index: {}]
  %s10 = inlined_call_operand.hbm [shape: f32[16,512], index: 10, kind: output, shape index: {}]
  %s11 = sld [smem:[#allocation0]]
  $region58: #{tpu_custom_call.1} parent=0
    _
  %s13 = ssub.s32 1, %s11
  %s14 = scalar_select 0, %s13, %s11
  %v15 = vstv %s3
  %16 = vst [vmem:[#allocation2] sm:$0x1] %v15
  %v17 = vstv %s7
  %18 = vst [vmem:[#allocation3] sm:$0x1] %v17
  $region1: #{tpu_custom_call.1} parent=0
    #allocation4 [shape = 'u8[32768]{0}', space=vmem, size = 0x8000, scoped, tag = 'input window, operand 0, single buffered']
    #allocation5 [shape = 's32[1]{0}', space=sflag, size = 0x4, scoped, tag = 'scoped memory for tpu_custom_call.1']
    #allocation6 [shape = 's32[1]{0}', space=sflag, size = 0x4, scoped, tag = 'scoped memory for tpu_custom_call.1']
    #allocation7 [shape = 'u8[32768]{0}', space=vmem, size = 0x8000, scoped, tag = 'input window, operand 1, single buffered']
    #allocation8 [shape = 's32[1]{0}', space=sflag, size = 0x4, scoped, tag = 'scoped memory for tpu_custom_call.1']
    #allocation9 [shape = 'u8[32768]{0}', space=vmem, size = 0x8000, scoped, tag = 'output window, operand 0, single buffered']
    %19 = vsyncpa [#allocation5], 0
    %20 = vsyncpa [#allocation8], 0
    %21 = vsyncpa [#allocation6], 0
    // Predicated region
    $region2: #{tpu_custom_call.1} parent=1 // pred_check
      _
    $region3: #{tpu_custom_call.1} parent=1 // pred_check_branch
      %23 = sbr.rel (0) target = $region5
    $region4: #{tpu_custom_call.1} parent=1 // pred_region
      %s25 = ssub.s32 1024, 1024
      %26 = vsyncadd [#allocation5], %s25
      %s27 = sshll.u32 [#allocation4], 4
      %s28 = int_to_ptr.vmem [resolvable:$true] %s27
      %33 = dma.hbm_to_vmem [thread:$0]  %s0, 1024, %s28, [#allocation5], 512, 512, 32
    $region5: #{tpu_custom_call.1} parent=1 // pred_fallthru
      _
    // Predicated region
    $region6: #{tpu_custom_call.1} parent=1 // pred_check
      _
    $region7: #{tpu_custom_call.1} parent=1 // pred_check_branch
      %35 = sbr.rel (0) target = $region9
    $region8: #{tpu_custom_call.1} parent=1 // pred_region
      %s37 = ssub.s32 1024, 1024
      %38 = vsyncadd [#allocation8], %s37
      %s39 = sshll.u32 [#allocation7], 4
      %s40 = int_to_ptr.vmem [resolvable:$true] %s39
      %45 = dma.hbm_to_vmem [thread:$0]  %s1, 1024, %s40, [#allocation8], 512, 512, 32
    $region9: #{tpu_custom_call.1} parent=1 // pred_fallthru
      _
    // Predicated region
    $region10: #{tpu_custom_call.1} parent=1 // pred_check
      _
    $region11: #{tpu_custom_call.1} parent=1 // pred_check_branch
      %47 = sbr.rel (0) target = $region13
    $region12: #{tpu_custom_call.1} parent=1 // pred_region
      _
    $region13: #{tpu_custom_call.1} parent=1 // pred_fallthru
      _
    // Predicated region
    $region14: #{tpu_custom_call.1} parent=1 // pred_check
      _
    $region15: #{tpu_custom_call.1} parent=1 // pred_check_branch
      %49 = sbr.rel (0) target = $region17
    $region16: #{tpu_custom_call.1} parent=1 // pred_region
      _
    $region17: #{tpu_custom_call.1} parent=1 // pred_fallthru
      _
    // Predicated region
    $region18: #{tpu_custom_call.1} parent=1 // pred_check
      _
    $region19: #{tpu_custom_call.1} parent=1 // pred_check_branch
      %51 = sbr.rel (0) target = $region21
    $region20: #{tpu_custom_call.1} parent=1 // pred_region
      _
    $region21: #{tpu_custom_call.1} parent=1 // pred_fallthru
      _
    // Predicated region
    $region22: #{tpu_custom_call.1} parent=1 // pred_check
      _
    $region23: #{tpu_custom_call.1} parent=1 // pred_check_branch
      %53 = sbr.rel (0) target = $region25
    $region24: #{tpu_custom_call.1} parent=1 // pred_region
      _
    $region25: #{tpu_custom_call.1} parent=1 // pred_fallthru
      _
    // Predicated region
    $region26: #{tpu_custom_call.1} parent=1 // pred_check
      _
    $region27: #{tpu_custom_call.1} parent=1 // pred_check_branch
      %55 = sbr.rel (0) target = $region29
    $region28: #{tpu_custom_call.1} parent=1 // pred_region
      _
    $region29: #{tpu_custom_call.1} parent=1 // pred_fallthru
      _
    // Predicated region
    $region30: #{tpu_custom_call.1} parent=1 // pred_check
      _
    $region31: #{tpu_custom_call.1} parent=1 // pred_check_branch
      %57 = sbr.rel (0) target = $region33
    $region32: #{tpu_custom_call.1} parent=1 // pred_region
      _
    $region33: #{tpu_custom_call.1} parent=1 // pred_fallthru
      _
    // Predicated region
    $region34: #{tpu_custom_call.1} parent=1 // pred_check
      _
    $region35: #{tpu_custom_call.1} parent=1 // pred_check_branch
      %59 = sbr.rel (0) target = $region37
    $region36: #{tpu_custom_call.1} parent=1 // pred_region
      _
    $region37: #{tpu_custom_call.1} parent=1 // pred_fallthru
      _
    // Predicated region
    $region38: #{tpu_custom_call.1} parent=1 // pred_check
      _
    $region39: #{tpu_custom_call.1} parent=1 // pred_check_branch
      %61 = sbr.rel (0) target = $region41
    $region40: #{tpu_custom_call.1} parent=1 // pred_region
      _
    $region41: #{tpu_custom_call.1} parent=1 // pred_fallthru
      _
    // Predicated region
    $region42: #{tpu_custom_call.1} parent=1 // pred_check
      _
    $region43: #{tpu_custom_call.1} parent=1 // pred_check_branch
      %63 = sbr.rel (0) target = $region45
    $region44: #{tpu_custom_call.1} parent=1 // pred_region
      %64 = dma.done [#allocation5], 1024
    $region45: #{tpu_custom_call.1} parent=1 // pred_fallthru
      _
    // Predicated region
    $region46: #{tpu_custom_call.1} parent=1 // pred_check
      _
    $region47: #{tpu_custom_call.1} parent=1 // pred_check_branch
      %66 = sbr.rel (0) target = $region49
    $region48: #{tpu_custom_call.1} parent=1 // pred_region
      %67 = dma.done [#allocation8], 1024
    $region49: #{tpu_custom_call.1} parent=1 // pred_fallthru
      _
    %v69 = vld [vmem:[#allocation7] sm:$0xff]
    %v70 = vld [vmem:[#allocation7 + $0x8] sm:$0xff]
    %v71 = vld [vmem:[#allocation7 + $0x10] sm:$0xff]
    %v72 = vld [vmem:[#allocation7 + $0x18] sm:$0xff]
    %v73 = vld [vmem:[#allocation7 + $0x20] sm:$0x1]
    %v74 = vld [vmem:[#allocation7 + $0x28] sm:$0x1]
    %v75 = vld [vmem:[#allocation7 + $0x30] sm:$0x1]
    %v76 = vld [vmem:[#allocation7 + $0x38] sm:$0x1]
    %v77 = vld [vmem:[%s4] sm:$0xf]
    %v78 = vld [vmem:[%s4 + $0x4] sm:$0xf]
    %v79 = vld [vmem:[#allocation4] sm:$0xff]
    %v80 = vld [vmem:[#allocation4 + $0x8] sm:$0xff]
    %v81 = vld [vmem:[#allocation4 + $0x10] sm:$0xff]
    %v82 = vld [vmem:[#allocation4 + $0x18] sm:$0xff]
    %v83 = vld [vmem:[#allocation4 + $0x20] sm:$0xff]
    %v84 = vld [vmem:[#allocation4 + $0x28] sm:$0xff]
    %v85 = vld [vmem:[#allocation4 + $0x30] sm:$0xff]
    %v86 = vld [vmem:[#allocation4 + $0x38] sm:$0xff]
    %v87 = vpack.c.bf16 %v83, %v79
    %v88 = vpack.c.bf16 %v84, %v80
    %v89 = vpack.c.bf16 %v85, %v81
    %v90 = vpack.c.bf16 %v86, %v82
    %v93 = vunpack.c.l.b16 %v77
    %v94 = vunpack.c.l.b16 %v78
    %v95 = vpack.c.b16 %v94, %v93
    %vm96 = vcmask 130048
    %v98 = vsel %vm96, %v95, 0
    %100 = vmatprep.subr.bf16.mxu0 0
    %101 = vmatpush1.bf16.msra.mxu0 0
    %102 = vmatprep.subr.bf16.mxu0 0
    %103 = vmatpush1.bf16.msra.mxu0 0
    %104 = vmatprep.subr.bf16.mxu0 0
    %105 = vmatpush1.bf16.msra.mxu0 0
    %106 = vmatprep.subr.bf16.mxu0 0
    %107 = vmatpush1.bf16.msra.mxu0 0
    %108 = vmatprep.subr.bf16.mxu0 0
    %109 = vmatpush1.bf16.msra.mxu0 0
    %110 = vmatprep.subr.bf16.mxu0 0
    %111 = vmatpush1.bf16.msra.mxu0 0
    %112 = vmatprep.subr.bf16.mxu0 0
    %113 = vmatpush1.bf16.msra.mxu0 0
    %114 = vmatprep.subr.bf16.mxu0 %v88
    %115 = vmatpush1.bf16.msra.mxu0 %v87
    %116 = vmatprep.subr.bf16.mxu0 0
    %117 = vmatpush2.bf16.msra.mxu0 0
    %118 = vmatprep.subr.bf16.mxu0 0
    %119 = vmatpush2.bf16.msra.mxu0 0
    %120 = vmatprep.subr.bf16.mxu0 0
    %121 = vmatpush2.bf16.msra.mxu0 0
    %122 = vmatprep.subr.bf16.mxu0 0
    %123 = vmatpush2.bf16.msra.mxu0 0
    %124 = vmatprep.subr.bf16.mxu0 0
    %125 = vmatpush2.bf16.msra.mxu0 0
    %126 = vmatprep.subr.bf16.mxu0 0
    %127 = vmatpush2.bf16.msra.mxu0 0
    %128 = vmatprep.subr.bf16.mxu0 0
    %129 = vmatpush2.bf16.msra.mxu0 0
    %130 = vmatprep.subr.bf16.mxu0 0
    %131 = vmatpush2.bf16.msra.mxu0 0
    %132 = vmatprep.mubr.bf16.mxu0 0
    %133 = vmatmul.mubr.bf16.gmra.mxu0 %v98
    %v134 = vpop.f32.mrf.mxu0
    %v135 = vadd.f32 0.0, %v134
    %v136 = vpop.f32.mrf.mxu0
    %v137 = vadd.f32 0.0, %v136
    %v138 = vpop.f32.mrf.mxu0
    %v139 = vadd.f32 0.0, %v138
    %v140 = vpop.f32.mrf.mxu0
    %v141 = vadd.f32 0.0, %v140
    %142 = vdwg.mxu0
    %143 = vmatprep.subr.bf16.mxu0 0
    %144 = vmatpush1.bf16.msra.mxu0 0
    %145 = vmatprep.subr.bf16.mxu0 0
    %146 = vmatpush1.bf16.msra.mxu0 0
    %147 = vmatprep.subr.bf16.mxu0 0
    %148 = vmatpush1.bf16.msra.mxu0 0
    %149 = vmatprep.subr.bf16.mxu0 0
    %150 = vmatpush1.bf16.msra.mxu0 0
    %151 = vmatprep.subr.bf16.mxu0 0
    %152 = vmatpush1.bf16.msra.mxu0 0
    %153 = vmatprep.subr.bf16.mxu0 0
    %154 = vmatpush1.bf16.msra.mxu0 0
    %155 = vmatprep.subr.bf16.mxu0 0
    %156 = vmatpush1.bf16.msra.mxu0 0
    %157 = vmatprep.subr.bf16.mxu0 %v90
    %158 = vmatpush1.bf16.msra.mxu0 %v89
    %159 = vmatprep.subr.bf16.mxu0 0
    %160 = vmatpush2.bf16.msra.mxu0 0
    %161 = vmatprep.subr.bf16.mxu0 0
    %162 = vmatpush2.bf16.msra.mxu0 0
    %163 = vmatprep.subr.bf16.mxu0 0
    %164 = vmatpush2.bf16.msra.mxu0 0
    %165 = vmatprep.subr.bf16.mxu0 0
    %166 = vmatpush2.bf16.msra.mxu0 0
    %167 = vmatprep.subr.bf16.mxu0 0
    %168 = vmatpush2.bf16.msra.mxu0 0
    %169 = vmatprep.subr.bf16.mxu0 0
    %170 = vmatpush2.bf16.msra.mxu0 0
    %171 = vmatprep.subr.bf16.mxu0 0
    %172 = vmatpush2.bf16.msra.mxu0 0
    %173 = vmatprep.subr.bf16.mxu0 0
    %174 = vmatpush2.bf16.msra.mxu0 0
    %175 = vmatprep.mubr.bf16.mxu0 0
    %176 = vmatmul.mubr.bf16.gmra.mxu0 %v98
    %v177 = vpop.f32.mrf.mxu0
    %v178 = vadd.f32 0.0, %v177
    %v179 = vpop.f32.mrf.mxu0
    %v180 = vadd.f32 0.0, %v179
    %v181 = vpop.f32.mrf.mxu0
    %v182 = vadd.f32 0.0, %v181
    %v183 = vpop.f32.mrf.mxu0
    %v184 = vadd.f32 0.0, %v183
    %185 = vdwg.mxu0
    %v186 = vadd.f32 %v135, %v137
    %187 = vadd.xlane.f32.xlu0 %v186
    %v188 = vpop.xlane.xlu0 %187
    %v189 = vadd.f32 %v139, %v141
    %190 = vadd.xlane.f32.xlu0 %v189
    %v191 = vpop.xlane.xlu0 %190
    %v192 = vrcp.pop 256.0
    %v193 = vmul.f32 %v188, %v192
    %v194 = vmul.f32 %v191, %v192
    %v195 = vmul.f32 %v135, %v135
    %v196 = vmul.f32 %v137, %v137
    %v197 = vmul.f32 %v139, %v139
    %v198 = vmul.f32 %v141, %v141
    %v199 = vadd.f32 %v195, %v196
    %200 = vadd.xlane.f32.xlu0 %v199
    %v201 = vpop.xlane.xlu0 %200
    %v202 = vadd.f32 %v197, %v198
    %203 = vadd.xlane.f32.xlu0 %v202
    %v204 = vpop.xlane.xlu0 %203
    %v205 = vmul.f32 %v201, %v192
    %v206 = vmul.f32 %v204, %v192
    %v207 = vmul.f32 %v193, %v193
    %v208 = vmul.f32 %v194, %v194
    %v209 = vsub.f32 %v205, %v207
    %v210 = vsub.f32 %v206, %v208
    %v211 = vmax.f32 %v209, 0.0
    %v212 = vmax.f32 %v210, 0.0
    %v213 = vsub.f32 %v135, %v193
    %v214 = vsub.f32 %v137, %v193
    %v215 = vsub.f32 %v139, %v194
    %v216 = vsub.f32 %v141, %v194
    %v217 = vadd.f32 %v211, 1e-05
    %v218 = vadd.f32 %v212, 1e-05
    %v219 = vrsqrt.pop %v217
    %v220 = vrsqrt.pop %v218
    %v221 = vmul.f32 %v213, %v219
    %v222 = vmul.f32 %v214, %v219
    %v223 = vmul.f32 %v215, %v220
    %v224 = vmul.f32 %v216, %v220
    %v225 = vadd.f32 %v178, %v180
    %226 = vadd.xlane.f32.xlu0 %v225
    %v227 = vpop.xlane.xlu0 %226
    %v228 = vadd.f32 %v182, %v184
    %229 = vadd.xlane.f32.xlu0 %v228
    %v230 = vpop.xlane.xlu0 %229
    %v231 = vmul.f32 %v227, %v192
    %v232 = vmul.f32 %v230, %v192
    %v233 = vmul.f32 %v178, %v178
    %v234 = vmul.f32 %v180, %v180
    %v235 = vmul.f32 %v182, %v182
    %v236 = vmul.f32 %v184, %v184
    %v237 = vadd.f32 %v233, %v234
    %238 = vadd.xlane.f32.xlu0 %v237
    %v239 = vpop.xlane.xlu0 %238
    %v240 = vadd.f32 %v235, %v236
    %241 = vadd.xlane.f32.xlu0 %v240
    %v242 = vpop.xlane.xlu0 %241
    %v243 = vmul.f32 %v239, %v192
    %v244 = vmul.f32 %v242, %v192
    %v245 = vmul.f32 %v231, %v231
    %v246 = vmul.f32 %v232, %v232
    %v247 = vsub.f32 %v243, %v245
    %v248 = vsub.f32 %v244, %v246
    %v249 = vmax.f32 %v247, 0.0
    %v250 = vmax.f32 %v248, 0.0
    %v251 = vsub.f32 %v178, %v231
    %v252 = vsub.f32 %v180, %v231
    %v253 = vsub.f32 %v182, %v232
    %v254 = vsub.f32 %v184, %v232
    %v255 = vadd.f32 %v249, 1e-05
    %v256 = vadd.f32 %v250, 1e-05
    %v257 = vrsqrt.pop %v255
    %v258 = vrsqrt.pop %v256
    %v259 = vmul.f32 %v251, %v257
    %v260 = vmul.f32 %v252, %v257
    %v261 = vmul.f32 %v253, %v258
    %v262 = vmul.f32 %v254, %v258
    %vm263 = vcmp.ge.f32.partialorder %v221, 0.0
    %vm264 = vcmp.ge.f32.partialorder %v222, 0.0
    %vm265 = vcmp.ge.f32.partialorder %v259, 0.0
    %vm266 = vcmp.ge.f32.partialorder %v260, 0.0
    %vm267 = vcmp.ge.f32.partialorder %v223, 0.0
    %vm268 = vcmp.ge.f32.partialorder %v224, 0.0
    %vm269 = vcmp.ge.f32.partialorder %v261, 0.0
    %vm270 = vcmp.ge.f32.partialorder %v262, 0.0
    %v271 = vmul.f32 %v221, 0.01
    %v272 = vmul.f32 %v222, 0.01
    %v273 = vmul.f32 %v259, 0.01
    %v274 = vmul.f32 %v260, 0.01
    %v275 = vmul.f32 %v223, 0.01
    %v276 = vmul.f32 %v224, 0.01
    %v277 = vmul.f32 %v261, 0.01
    %v278 = vmul.f32 %v262, 0.01
    %v279 = vsel %vm263, %v221, %v271
    %v280 = vsel %vm264, %v222, %v272
    %v281 = vsel %vm265, %v259, %v273
    %v282 = vsel %vm266, %v260, %v274
    %v283 = vsel %vm267, %v223, %v275
    %v284 = vsel %vm268, %v224, %v276
    %v285 = vsel %vm269, %v261, %v277
    %v286 = vsel %vm270, %v262, %v278
    %v291 = vrot.slane %v279, 4
    %v292 = vrot.slane %v280, 4
    %v293 = vrot.slane %v281, 4
    %v294 = vrot.slane %v282, 4
    %299 = vrot.lane.b32.xlu0 %v291, 17
    %v300 = vpop.permute.xlu0 %299
    %301 = vrot.lane.b32.xlu0 %v292, 17
    %v302 = vpop.permute.xlu0 %301
    %303 = vrot.lane.b32.xlu0 %v293, 17
    %v304 = vpop.permute.xlu0 %303
    %305 = vrot.lane.b32.xlu0 %v294, 17
    %v306 = vpop.permute.xlu0 %305
    %v307 = vlaneseq
    %v308 = vand.u32 %v307, 127
    %vm309 = vcmp.lt.s32.totalorder %v308, 17
    %v310 = vsel %vm309, %v304, %v306
    %v311 = vsel %vm309, %v302, %v304
    %v312 = vsel %vm309, %v300, %v302
    %v313 = vsel %vm309, %v306, %v300
    %v314 = vlaneseq
    %v315 = vshrl.u32 %v314, 7
    %v316 = vsub.s32 0, %v315
    %v317 = vrot.slane %v69, %v316
    %v318 = vlaneseq
    %v319 = vshrl.u32 %v318, 7
    %v320 = vsub.s32 0, %v319
    %v321 = vrot.slane %v70, %v320
    %v322 = vlaneseq
    %v323 = vshrl.u32 %v322, 7
    %v324 = vsub.s32 0, %v323
    %v325 = vrot.slane %v71, %v324
    %v326 = vlaneseq
    %v327 = vshrl.u32 %v326, 7
    %v328 = vsub.s32 0, %v327
    %v329 = vrot.slane %v72, %v328
    %v330 = vmul.f32 %v313, %v317
    %v331 = vmul.f32 %v312, %v321
    %v332 = vmul.f32 %v311, %v325
    %v333 = vmul.f32 %v310, %v329
    %334 = vrot.lane.b32.xlu0 %v291, 16
    %v335 = vpop.permute.xlu0 %334
    %336 = vrot.lane.b32.xlu0 %v292, 16
    %v337 = vpop.permute.xlu0 %336
    %338 = vrot.lane.b32.xlu0 %v293, 16
    %v339 = vpop.permute.xlu0 %338
    %340 = vrot.lane.b32.xlu0 %v294, 16
    %v341 = vpop.permute.xlu0 %340
    %vm342 = vcmp.lt.s32.totalorder %v308, 16
    %v343 = vsel %vm342, %v339, %v341
    %v344 = vsel %vm342, %v337, %v339
    %v345 = vsel %vm342, %v335, %v337
    %v346 = vsel %vm342, %v341, %v335
    %v347 = vlaneseq
    %v348 = vshrl.u32 %v347, 7
    %v349 = vsub.s32 1, %v348
    %v350 = vrot.slane %v69, %v349
    %v351 = vlaneseq
    %v352 = vshrl.u32 %v351, 7
    %v353 = vsub.s32 1, %v352
    %v354 = vrot.slane %v70, %v353
    %v355 = vlaneseq
    %v356 = vshrl.u32 %v355, 7
    %v357 = vsub.s32 1, %v356
    %v358 = vrot.slane %v71, %v357
    %v359 = vlaneseq
    %v360 = vshrl.u32 %v359, 7
    %v361 = vsub.s32 1, %v360
    %v362 = vrot.slane %v72, %v361
    %v363 = vmul.f32 %v346, %v350
    %v364 = vmul.f32 %v345, %v354
    %v365 = vmul.f32 %v344, %v358
    %v366 = vmul.f32 %v343, %v362
    %367 = vrot.lane.b32.xlu0 %v291, 15
    %v368 = vpop.permute.xlu0 %367
    %369 = vrot.lane.b32.xlu0 %v292, 15
    %v370 = vpop.permute.xlu0 %369
    %371 = vrot.lane.b32.xlu0 %v293, 15
    %v372 = vpop.permute.xlu0 %371
    %373 = vrot.lane.b32.xlu0 %v294, 15
    %v374 = vpop.permute.xlu0 %373
    %vm375 = vcmp.lt.s32.totalorder %v308, 15
    %v376 = vsel %vm375, %v372, %v374
    %v377 = vsel %vm375, %v370, %v372
    %v378 = vsel %vm375, %v368, %v370
    %v379 = vsel %vm375, %v374, %v368
    %v380 = vlaneseq
    %v381 = vshrl.u32 %v380, 7
    %v382 = vsub.s32 2, %v381
    %v383 = vrot.slane %v69, %v382
    %v384 = vlaneseq
    %v385 = vshrl.u32 %v384, 7
    %v386 = vsub.s32 2, %v385
    %v387 = vrot.slane %v70, %v386
    %v388 = vlaneseq
    %v389 = vshrl.u32 %v388, 7
    %v390 = vsub.s32 2, %v389
    %v391 = vrot.slane %v71, %v390
    %v392 = vlaneseq
    %v393 = vshrl.u32 %v392, 7
    %v394 = vsub.s32 2, %v393
    %v395 = vrot.slane %v72, %v394
    %v396 = vmul.f32 %v379, %v383
    %v397 = vmul.f32 %v378, %v387
    %v398 = vmul.f32 %v377, %v391
    %v399 = vmul.f32 %v376, %v395
    %400 = vrot.lane.b32.xlu0 %v291, 1
    %v401 = vpop.permute.xlu0 %400
    %402 = vrot.lane.b32.xlu0 %v292, 1
    %v403 = vpop.permute.xlu0 %402
    %404 = vrot.lane.b32.xlu0 %v293, 1
    %v405 = vpop.permute.xlu0 %404
    %406 = vrot.lane.b32.xlu0 %v294, 1
    %v407 = vpop.permute.xlu0 %406
    %vm408 = vcmp.lt.s32.totalorder %v308, 1
    %v409 = vsel %vm408, %v405, %v407
    %v410 = vsel %vm408, %v403, %v405
    %v411 = vsel %vm408, %v401, %v403
    %v412 = vsel %vm408, %v407, %v401
    %v413 = vlaneseq
    %v414 = vshrl.u32 %v413, 7
    %v415 = vsub.s32 3, %v414
    %v416 = vrot.slane %v69, %v415
    %v417 = vlaneseq
    %v418 = vshrl.u32 %v417, 7
    %v419 = vsub.s32 3, %v418
    %v420 = vrot.slane %v70, %v419
    %v421 = vlaneseq
    %v422 = vshrl.u32 %v421, 7
    %v423 = vsub.s32 3, %v422
    %v424 = vrot.slane %v71, %v423
    %v425 = vlaneseq
    %v426 = vshrl.u32 %v425, 7
    %v427 = vsub.s32 3, %v426
    %v428 = vrot.slane %v72, %v427
    %v429 = vmul.f32 %v412, %v416
    %v430 = vmul.f32 %v411, %v420
    %v431 = vmul.f32 %v410, %v424
    %v432 = vmul.f32 %v409, %v428
    %433 = vrot.lane.b32.xlu0 %v291, 127
    %v434 = vpop.permute.xlu0 %433
    %435 = vrot.lane.b32.xlu0 %v292, 127
    %v436 = vpop.permute.xlu0 %435
    %437 = vrot.lane.b32.xlu0 %v293, 127
    %v438 = vpop.permute.xlu0 %437
    %439 = vrot.lane.b32.xlu0 %v294, 127
    %v440 = vpop.permute.xlu0 %439
    %vm441 = vcmp.lt.s32.totalorder %v308, 127
    %v442 = vsel %vm441, %v438, %v440
    %v443 = vsel %vm441, %v436, %v438
    %v444 = vsel %vm441, %v434, %v436
    %v445 = vsel %vm441, %v440, %v434
    %v446 = vlaneseq
    %v447 = vshrl.u32 %v446, 7
    %v448 = vsub.s32 5, %v447
    %v449 = vrot.slane %v69, %v448
    %v450 = vlaneseq
    %v451 = vshrl.u32 %v450, 7
    %v452 = vsub.s32 5, %v451
    %v453 = vrot.slane %v70, %v452
    %v454 = vlaneseq
    %v455 = vshrl.u32 %v454, 7
    %v456 = vsub.s32 5, %v455
    %v457 = vrot.slane %v71, %v456
    %v458 = vlaneseq
    %v459 = vshrl.u32 %v458, 7
    %v460 = vsub.s32 5, %v459
    %v461 = vrot.slane %v72, %v460
    %v462 = vmul.f32 %v444, %v449
    %v463 = vmul.f32 %v443, %v453
    %v464 = vmul.f32 %v442, %v457
    %v465 = vmul.f32 %v445, %v461
    %466 = vrot.lane.b32.xlu0 %v291, 113
    %v467 = vpop.permute.xlu0 %466
    %468 = vrot.lane.b32.xlu0 %v292, 113
    %v469 = vpop.permute.xlu0 %468
    %470 = vrot.lane.b32.xlu0 %v293, 113
    %v471 = vpop.permute.xlu0 %470
    %472 = vrot.lane.b32.xlu0 %v294, 113
    %v473 = vpop.permute.xlu0 %472
    %vm474 = vcmp.lt.s32.totalorder %v308, 113
    %v475 = vsel %vm474, %v471, %v473
    %v476 = vsel %vm474, %v469, %v471
    %v477 = vsel %vm474, %v467, %v469
    %v478 = vsel %vm474, %v473, %v467
    %v479 = vlaneseq
    %v480 = vshrl.u32 %v479, 7
    %v481 = vsub.s32 6, %v480
    %v482 = vrot.slane %v69, %v481
    %v483 = vlaneseq
    %v484 = vshrl.u32 %v483, 7
    %v485 = vsub.s32 6, %v484
    %v486 = vrot.slane %v70, %v485
    %v487 = vlaneseq
    %v488 = vshrl.u32 %v487, 7
    %v489 = vsub.s32 6, %v488
    %v490 = vrot.slane %v71, %v489
    %v491 = vlaneseq
    %v492 = vshrl.u32 %v491, 7
    %v493 = vsub.s32 6, %v492
    %v494 = vrot.slane %v72, %v493
    %v495 = vmul.f32 %v477, %v482
    %v496 = vmul.f32 %v476, %v486
    %v497 = vmul.f32 %v475, %v490
    %v498 = vmul.f32 %v478, %v494
    %499 = vrot.lane.b32.xlu0 %v291, 112
    %v500 = vpop.permute.xlu0 %499
    %501 = vrot.lane.b32.xlu0 %v292, 112
    %v502 = vpop.permute.xlu0 %501
    %503 = vrot.lane.b32.xlu0 %v293, 112
    %v504 = vpop.permute.xlu0 %503
    %505 = vrot.lane.b32.xlu0 %v294, 112
    %v506 = vpop.permute.xlu0 %505
    %vm507 = vcmp.lt.s32.totalorder %v308, 112
    %v508 = vsel %vm507, %v504, %v506
    %v509 = vsel %vm507, %v502, %v504
    %v510 = vsel %vm507, %v500, %v502
    %v511 = vsel %vm507, %v506, %v500
    %v512 = vlaneseq
    %v513 = vshrl.u32 %v512, 7
    %v514 = vsub.s32 7, %v513
    %v515 = vrot.slane %v69, %v514
    %v516 = vlaneseq
    %v517 = vshrl.u32 %v516, 7
    %v518 = vsub.s32 7, %v517
    %v519 = vrot.slane %v70, %v518
    %v520 = vlaneseq
    %v521 = vshrl.u32 %v520, 7
    %v522 = vsub.s32 7, %v521
    %v523 = vrot.slane %v71, %v522
    %v524 = vlaneseq
    %v525 = vshrl.u32 %v524, 7
    %v526 = vsub.s32 7, %v525
    %v527 = vrot.slane %v72, %v526
    %v528 = vmul.f32 %v510, %v515
    %v529 = vmul.f32 %v509, %v519
    %v530 = vmul.f32 %v508, %v523
    %v531 = vmul.f32 %v511, %v527
    %532 = vrot.lane.b32.xlu0 %v291, 111
    %v533 = vpop.permute.xlu0 %532
    %534 = vrot.lane.b32.xlu0 %v292, 111
    %v535 = vpop.permute.xlu0 %534
    %536 = vrot.lane.b32.xlu0 %v293, 111
    %v537 = vpop.permute.xlu0 %536
    %538 = vrot.lane.b32.xlu0 %v294, 111
    %v539 = vpop.permute.xlu0 %538
    %vm540 = vcmp.lt.s32.totalorder %v308, 111
    %v541 = vsel %vm540, %v537, %v539
    %v542 = vsel %vm540, %v535, %v537
    %v543 = vsel %vm540, %v533, %v535
    %v544 = vsel %vm540, %v539, %v533
    %v545 = vlaneseq
    %v546 = vshrl.u32 %v545, 7
    %v547 = vsub.s32 0, %v546
    %v548 = vrot.slane %v73, %v547
    %v549 = vlaneseq
    %v550 = vshrl.u32 %v549, 7
    %v551 = vsub.s32 0, %v550
    %v552 = vrot.slane %v74, %v551
    %v553 = vlaneseq
    %v554 = vshrl.u32 %v553, 7
    %v555 = vsub.s32 0, %v554
    %v556 = vrot.slane %v75, %v555
    %v557 = vlaneseq
    %v558 = vshrl.u32 %v557, 7
    %v559 = vsub.s32 0, %v558
    %v560 = vrot.slane %v76, %v559
    %v561 = vmul.f32 %v543, %v548
    %v562 = vmul.f32 %v542, %v552
    %v563 = vmul.f32 %v541, %v556
    %v564 = vmul.f32 %v544, %v560
    %v569 = vrot.slane %v363, 4
    %v570 = vrot.slane %v364, 4
    %v571 = vrot.slane %v365, 4
    %v572 = vrot.slane %v366, 4
    %v581 = vrot.slane %v429, 4
    %v582 = vrot.slane %v430, 4
    %v583 = vrot.slane %v431, 4
    %v584 = vrot.slane %v432, 4
    %v593 = vrot.slane %v462, 4
    %v594 = vrot.slane %v463, 4
    %v595 = vrot.slane %v464, 4
    %v596 = vrot.slane %v465, 4
    %v605 = vrot.slane %v528, 4
    %v606 = vrot.slane %v529, 4
    %v607 = vrot.slane %v530, 4
    %v608 = vrot.slane %v531, 4
    %vm613 = vcmask 1043456
    %v614 = vsel %vm613, %v330, %v569
    %v615 = vsel %vm613, %v331, %v570
    %v616 = vsel %vm613, %v332, %v571
    %v617 = vsel %vm613, %v333, %v572
    %v618 = vsel %vm613, %v396, %v581
    %v619 = vsel %vm613, %v397, %v582
    %v620 = vsel %vm613, %v398, %v583
    %v621 = vsel %vm613, %v399, %v584
    %v622 = vsel %vm613, %v291, %v593
    %v623 = vsel %vm613, %v292, %v594
    %v624 = vsel %vm613, %v293, %v595
    %v625 = vsel %vm613, %v294, %v596
    %v626 = vsel %vm613, %v495, %v605
    %v627 = vsel %vm613, %v496, %v606
    %v628 = vsel %vm613, %v497, %v607
    %v629 = vsel %vm613, %v498, %v608
    %v630 = vpack.c.bf16 %v618, %v614
    %v631 = vpack.c.bf16 %v619, %v615
    %v632 = vpack.c.bf16 %v620, %v616
    %v633 = vpack.c.bf16 %v621, %v617
    %v634 = vpack.c.bf16 %v626, %v622
    %v635 = vpack.c.bf16 %v627, %v623
    %v636 = vpack.c.bf16 %v628, %v624
    %v637 = vpack.c.bf16 %v629, %v625
    %v638 = vpack.c.bf16 %v561, %v561
    %v639 = vpack.c.bf16 %v562, %v562
    %v640 = vpack.c.bf16 %v563, %v563
    %v641 = vpack.c.bf16 %v564, %v564
    %v642 = vld [vmem:[%s5] sm:$0x3]
    %vm643 = vcmask 293888
    %v645 = vsel %vm643, %v642, 0
    %vm647 = vcmask 1041408
    %v649 = vsel %vm647, %v638, 0
    %v652 = vsel %vm647, %v639, 0
    %v655 = vsel %vm647, %v640, 0
    %v658 = vsel %vm647, %v641, 0
    %660 = vmatprep.subr.bf16.mxu0 0
    %661 = vmatpush1.bf16.msra.mxu0 0
    %662 = vmatprep.subr.bf16.mxu0 0
    %663 = vmatpush1.bf16.msra.mxu0 0
    %664 = vmatprep.subr.bf16.mxu0 0
    %665 = vmatpush1.bf16.msra.mxu0 0
    %666 = vmatprep.subr.bf16.mxu0 0
    %667 = vmatpush1.bf16.msra.mxu0 0
    %668 = vmatprep.subr.bf16.mxu0 0
    %669 = vmatpush1.bf16.msra.mxu0 0
    %670 = vmatprep.subr.bf16.mxu0 %v652
    %671 = vmatpush1.bf16.msra.mxu0 %v649
    %672 = vmatprep.subr.bf16.mxu0 %v635
    %673 = vmatpush1.bf16.msra.mxu0 %v634
    %674 = vmatprep.subr.bf16.mxu0 %v631
    %675 = vmatpush1.bf16.msra.mxu0 %v630
    %676 = vmatprep.subr.bf16.mxu0 0
    %677 = vmatpush2.bf16.msra.mxu0 0
    %678 = vmatprep.subr.bf16.mxu0 0
    %679 = vmatpush2.bf16.msra.mxu0 0
    %680 = vmatprep.subr.bf16.mxu0 0
    %681 = vmatpush2.bf16.msra.mxu0 0
    %682 = vmatprep.subr.bf16.mxu0 0
    %683 = vmatpush2.bf16.msra.mxu0 0
    %684 = vmatprep.subr.bf16.mxu0 0
    %685 = vmatpush2.bf16.msra.mxu0 0
    %686 = vmatprep.subr.bf16.mxu0 0
    %687 = vmatpush2.bf16.msra.mxu0 0
    %688 = vmatprep.subr.bf16.mxu0 0
    %689 = vmatpush2.bf16.msra.mxu0 0
    %690 = vmatprep.subr.bf16.mxu0 0
    %691 = vmatpush2.bf16.msra.mxu0 0
    %692 = vmatprep.mubr.bf16.mxu0 0
    %693 = vmatmul.mubr.bf16.gmra.mxu0 %v645
    %v694 = vpop.f32.mrf.mxu0
    %v695 = vadd.f32 0.0, %v694
    %v696 = vpop.f32.mrf.mxu0
    %v697 = vadd.f32 0.0, %v696
    %v698 = vpop.f32.mrf.mxu0
    %v699 = vpop.f32.mrf.mxu0
    %700 = vdwg.mxu0
    %701 = vmatprep.subr.bf16.mxu0 0
    %702 = vmatpush1.bf16.msra.mxu0 0
    %703 = vmatprep.subr.bf16.mxu0 0
    %704 = vmatpush1.bf16.msra.mxu0 0
    %705 = vmatprep.subr.bf16.mxu0 0
    %706 = vmatpush1.bf16.msra.mxu0 0
    %707 = vmatprep.subr.bf16.mxu0 0
    %708 = vmatpush1.bf16.msra.mxu0 0
    %709 = vmatprep.subr.bf16.mxu0 0
    %710 = vmatpush1.bf16.msra.mxu0 0
    %711 = vmatprep.subr.bf16.mxu0 %v658
    %712 = vmatpush1.bf16.msra.mxu0 %v655
    %713 = vmatprep.subr.bf16.mxu0 %v637
    %714 = vmatpush1.bf16.msra.mxu0 %v636
    %715 = vmatprep.subr.bf16.mxu0 %v633
    %716 = vmatpush1.bf16.msra.mxu0 %v632
    %717 = vmatprep.subr.bf16.mxu0 0
    %718 = vmatpush2.bf16.msra.mxu0 0
    %719 = vmatprep.subr.bf16.mxu0 0
    %720 = vmatpush2.bf16.msra.mxu0 0
    %721 = vmatprep.subr.bf16.mxu0 0
    %722 = vmatpush2.bf16.msra.mxu0 0
    %723 = vmatprep.subr.bf16.mxu0 0
    %724 = vmatpush2.bf16.msra.mxu0 0
    %725 = vmatprep.subr.bf16.mxu0 0
    %726 = vmatpush2.bf16.msra.mxu0 0
    %727 = vmatprep.subr.bf16.mxu0 0
    %728 = vmatpush2.bf16.msra.mxu0 0
    %729 = vmatprep.subr.bf16.mxu0 0
    %730 = vmatpush2.bf16.msra.mxu0 0
    %731 = vmatprep.subr.bf16.mxu0 0
    %732 = vmatpush2.bf16.msra.mxu0 0
    %733 = vmatprep.mubr.bf16.mxu0 0
    %734 = vmatmul.mubr.bf16.gmra.mxu0 %v645
    %v735 = vpop.f32.mrf.mxu0
    %v736 = vadd.f32 0.0, %v735
    %v737 = vpop.f32.mrf.mxu0
    %v738 = vadd.f32 0.0, %v737
    %v739 = vpop.f32.mrf.mxu0
    %v740 = vpop.f32.mrf.mxu0
    %741 = vdwg.mxu0
    %v742 = vsel %vm613, %v695, 0.0
    %v743 = vsel %vm613, %v697, 0.0
    %v744 = vadd.f32 %v742, %v743
    %745 = vadd.xlane.f32.xlu0 %v744
    %v746 = vpop.xlane.xlu0 %745
    %v747 = vmul.f32 %v746, %v192
    %v748 = vmul.f32 %v695, %v695
    %v749 = vmul.f32 %v697, %v697
    %v750 = vsel %vm613, %v748, 0.0
    %v751 = vsel %vm613, %v749, 0.0
    %v752 = vadd.f32 %v750, %v751
    %753 = vadd.xlane.f32.xlu0 %v752
    %v754 = vpop.xlane.xlu0 %753
    %v755 = vmul.f32 %v754, %v192
    %v756 = vmul.f32 %v747, %v747
    %v757 = vsub.f32 %v755, %v756
    %v758 = vmax.f32 %v757, 0.0
    %v759 = vsub.f32 %v695, %v747
    %v760 = vsub.f32 %v697, %v747
    %v761 = vadd.f32 %v758, 1e-05
    %v762 = vrsqrt.pop %v761
    %v763 = vmul.f32 %v759, %v762
    %v764 = vmul.f32 %v760, %v762
    %v765 = vsel %vm613, %v736, 0.0
    %v766 = vsel %vm613, %v738, 0.0
    %v767 = vadd.f32 %v765, %v766
    %768 = vadd.xlane.f32.xlu0 %v767
    %v769 = vpop.xlane.xlu0 %768
    %v770 = vmul.f32 %v769, %v192
    %v771 = vmul.f32 %v736, %v736
    %v772 = vmul.f32 %v738, %v738
    %v773 = vsel %vm613, %v771, 0.0
    %v774 = vsel %vm613, %v772, 0.0
    %v775 = vadd.f32 %v773, %v774
    %776 = vadd.xlane.f32.xlu0 %v775
    %v777 = vpop.xlane.xlu0 %776
    %v778 = vmul.f32 %v777, %v192
    %v779 = vmul.f32 %v770, %v770
    %v780 = vsub.f32 %v778, %v779
    %v781 = vmax.f32 %v780, 0.0
    %v782 = vsub.f32 %v736, %v770
    %v783 = vsub.f32 %v738, %v770
    %v784 = vadd.f32 %v781, 1e-05
    %v785 = vrsqrt.pop %v784
    %v786 = vmul.f32 %v782, %v785
    %v787 = vmul.f32 %v783, %v785
    %vm788 = vcmp.ge.f32.partialorder %v763, 0.0
    %vm789 = vcmp.ge.f32.partialorder %v764, 0.0
    %vm790 = vcmp.ge.f32.partialorder %v786, 0.0
    %vm791 = vcmp.ge.f32.partialorder %v787, 0.0
    %v792 = vmul.f32 %v763, 0.01
    %v793 = vmul.f32 %v764, 0.01
    %v794 = vmul.f32 %v786, 0.01
    %v795 = vmul.f32 %v787, 0.01
    %v796 = vsel %vm788, %v763, %v792
    %v797 = vsel %vm789, %v764, %v793
    %v798 = vsel %vm790, %v786, %v794
    %v799 = vsel %vm791, %v787, %v795
    %v800 = vadd.f32 %v283, %v796
    %v801 = vadd.f32 %v284, %v797
    %v802 = vadd.f32 %v285, %v798
    %v803 = vadd.f32 %v286, %v799
    %804 = vrot.lane.b32.xlu0 %v800, 17
    %v805 = vpop.permute.xlu0 %804
    %806 = vrot.lane.b32.xlu0 %v801, 17
    %v807 = vpop.permute.xlu0 %806
    %808 = vrot.lane.b32.xlu0 %v802, 17
    %v809 = vpop.permute.xlu0 %808
    %810 = vrot.lane.b32.xlu0 %v803, 17
    %v811 = vpop.permute.xlu0 %810
    %v812 = vsel %vm309, %v809, %v811
    %v813 = vsel %vm309, %v807, %v809
    %v814 = vsel %vm309, %v805, %v807
    %v815 = vsel %vm309, %v811, %v805
    %v816 = vmul.f32 %v815, %v317
    %v817 = vmul.f32 %v814, %v321
    %v818 = vmul.f32 %v813, %v325
    %v819 = vmul.f32 %v812, %v329
    %820 = vrot.lane.b32.xlu0 %v800, 16
    %v821 = vpop.permute.xlu0 %820
    %822 = vrot.lane.b32.xlu0 %v801, 16
    %v823 = vpop.permute.xlu0 %822
    %824 = vrot.lane.b32.xlu0 %v802, 16
    %v825 = vpop.permute.xlu0 %824
    %826 = vrot.lane.b32.xlu0 %v803, 16
    %v827 = vpop.permute.xlu0 %826
    %v828 = vsel %vm342, %v825, %v827
    %v829 = vsel %vm342, %v823, %v825
    %v830 = vsel %vm342, %v821, %v823
    %v831 = vsel %vm342, %v827, %v821
    %v832 = vmul.f32 %v831, %v350
    %v833 = vmul.f32 %v830, %v354
    %v834 = vmul.f32 %v829, %v358
    %v835 = vmul.f32 %v828, %v362
    %836 = vrot.lane.b32.xlu0 %v800, 15
    %v837 = vpop.permute.xlu0 %836
    %838 = vrot.lane.b32.xlu0 %v801, 15
    %v839 = vpop.permute.xlu0 %838
    %840 = vrot.lane.b32.xlu0 %v802, 15
    %v841 = vpop.permute.xlu0 %840
    %842 = vrot.lane.b32.xlu0 %v803, 15
    %v843 = vpop.permute.xlu0 %842
    %v844 = vsel %vm375, %v841, %v843
    %v845 = vsel %vm375, %v839, %v841
    %v846 = vsel %vm375, %v837, %v839
    %v847 = vsel %vm375, %v843, %v837
    %v848 = vmul.f32 %v847, %v383
    %v849 = vmul.f32 %v846, %v387
    %v850 = vmul.f32 %v845, %v391
    %v851 = vmul.f32 %v844, %v395
    %852 = vrot.lane.b32.xlu0 %v800, 1
    %v853 = vpop.permute.xlu0 %852
    %854 = vrot.lane.b32.xlu0 %v801, 1
    %v855 = vpop.permute.xlu0 %854
    %856 = vrot.lane.b32.xlu0 %v802, 1
    %v857 = vpop.permute.xlu0 %856
    %858 = vrot.lane.b32.xlu0 %v803, 1
    %v859 = vpop.permute.xlu0 %858
    %v860 = vsel %vm408, %v857, %v859
    %v861 = vsel %vm408, %v855, %v857
    %v862 = vsel %vm408, %v853, %v855
    %v863 = vsel %vm408, %v859, %v853
    %v864 = vmul.f32 %v863, %v416
    %v865 = vmul.f32 %v862, %v420
    %v866 = vmul.f32 %v861, %v424
    %v867 = vmul.f32 %v860, %v428
    %868 = vrot.lane.b32.xlu0 %v800, 127
    %v869 = vpop.permute.xlu0 %868
    %870 = vrot.lane.b32.xlu0 %v801, 127
    %v871 = vpop.permute.xlu0 %870
    %872 = vrot.lane.b32.xlu0 %v802, 127
    %v873 = vpop.permute.xlu0 %872
    %874 = vrot.lane.b32.xlu0 %v803, 127
    %v875 = vpop.permute.xlu0 %874
    %v876 = vsel %vm441, %v873, %v875
    %v877 = vsel %vm441, %v871, %v873
    %v878 = vsel %vm441, %v869, %v871
    %v879 = vsel %vm441, %v875, %v869
    %v880 = vmul.f32 %v878, %v449
    %v881 = vmul.f32 %v877, %v453
    %v882 = vmul.f32 %v876, %v457
    %v883 = vmul.f32 %v879, %v461
    %884 = vrot.lane.b32.xlu0 %v800, 113
    %v885 = vpop.permute.xlu0 %884
    %886 = vrot.lane.b32.xlu0 %v801, 113
    %v887 = vpop.permute.xlu0 %886
    %888 = vrot.lane.b32.xlu0 %v802, 113
    %v889 = vpop.permute.xlu0 %888
    %890 = vrot.lane.b32.xlu0 %v803, 113
    %v891 = vpop.permute.xlu0 %890
    %v892 = vsel %vm474, %v889, %v891
    %v893 = vsel %vm474, %v887, %v889
    %v894 = vsel %vm474, %v885, %v887
    %v895 = vsel %vm474, %v891, %v885
    %v896 = vmul.f32 %v894, %v482
    %v897 = vmul.f32 %v893, %v486
    %v898 = vmul.f32 %v892, %v490
    %v899 = vmul.f32 %v895, %v494
    %900 = vrot.lane.b32.xlu0 %v800, 112
    %v901 = vpop.permute.xlu0 %900
    %902 = vrot.lane.b32.xlu0 %v801, 112
    %v903 = vpop.permute.xlu0 %902
    %904 = vrot.lane.b32.xlu0 %v802, 112
    %v905 = vpop.permute.xlu0 %904
    %906 = vrot.lane.b32.xlu0 %v803, 112
    %v907 = vpop.permute.xlu0 %906
    %v908 = vsel %vm507, %v905, %v907
    %v909 = vsel %vm507, %v903, %v905
    %v910 = vsel %vm507, %v901, %v903
    %v911 = vsel %vm507, %v907, %v901
    %v912 = vmul.f32 %v910, %v515
    %v913 = vmul.f32 %v909, %v519
    %v914 = vmul.f32 %v908, %v523
    %v915 = vmul.f32 %v911, %v527
    %916 = vrot.lane.b32.xlu0 %v800, 111
    %v917 = vpop.permute.xlu0 %916
    %918 = vrot.lane.b32.xlu0 %v801, 111
    %v919 = vpop.permute.xlu0 %918
    %920 = vrot.lane.b32.xlu0 %v802, 111
    %v921 = vpop.permute.xlu0 %920
    %922 = vrot.lane.b32.xlu0 %v803, 111
    %v923 = vpop.permute.xlu0 %922
    %v924 = vsel %vm540, %v921, %v923
    %v925 = vsel %vm540, %v919, %v921
    %v926 = vsel %vm540, %v917, %v919
    %v927 = vsel %vm540, %v923, %v917
    %v928 = vmul.f32 %v926, %v548
    %v929 = vmul.f32 %v925, %v552
    %v930 = vmul.f32 %v924, %v556
    %v931 = vmul.f32 %v927, %v560
    %v936 = vrot.slane %v832, 4
    %v937 = vrot.slane %v833, 4
    %v938 = vrot.slane %v834, 4
    %v939 = vrot.slane %v835, 4
    %v948 = vrot.slane %v864, 4
    %v949 = vrot.slane %v865, 4
    %v950 = vrot.slane %v866, 4
    %v951 = vrot.slane %v867, 4
    %v960 = vrot.slane %v880, 4
    %v961 = vrot.slane %v881, 4
    %v962 = vrot.slane %v882, 4
    %v963 = vrot.slane %v883, 4
    %v972 = vrot.slane %v912, 4
    %v973 = vrot.slane %v913, 4
    %v974 = vrot.slane %v914, 4
    %v975 = vrot.slane %v915, 4
    %v980 = vsel %vm613, %v816, %v936
    %v981 = vsel %vm613, %v817, %v937
    %v982 = vsel %vm613, %v818, %v938
    %v983 = vsel %vm613, %v819, %v939
    %v984 = vsel %vm613, %v848, %v948
    %v985 = vsel %vm613, %v849, %v949
    %v986 = vsel %vm613, %v850, %v950
    %v987 = vsel %vm613, %v851, %v951
    %v988 = vsel %vm613, %v800, %v960
    %v989 = vsel %vm613, %v801, %v961
    %v990 = vsel %vm613, %v802, %v962
    %v991 = vsel %vm613, %v803, %v963
    %v992 = vsel %vm613, %v896, %v972
    %v993 = vsel %vm613, %v897, %v973
    %v994 = vsel %vm613, %v898, %v974
    %v995 = vsel %vm613, %v899, %v975
    %v996 = vpack.c.bf16 %v984, %v980
    %v997 = vpack.c.bf16 %v985, %v981
    %v998 = vpack.c.bf16 %v986, %v982
    %v999 = vpack.c.bf16 %v987, %v983
    %v1000 = vpack.c.bf16 %v992, %v988
    %v1001 = vpack.c.bf16 %v993, %v989
    %v1002 = vpack.c.bf16 %v994, %v990
    %v1003 = vpack.c.bf16 %v995, %v991
    %v1004 = vpack.c.bf16 %v928, %v928
    %v1005 = vpack.c.bf16 %v929, %v929
    %v1006 = vpack.c.bf16 %v930, %v930
    %v1007 = vpack.c.bf16 %v931, %v931
    %s1008 = scalar_lea.vmem %s5, 2
    %v1009 = vld [vmem:[%s1008] sm:$0x3]
    %v1011 = vsel %vm643, %v1009, 0
    %v1014 = vsel %vm647, %v1004, 0
    %v1017 = vsel %vm647, %v1005, 0
    %v1020 = vsel %vm647, %v1006, 0
    %v1023 = vsel %vm647, %v1007, 0
    %1025 = vmatprep.subr.bf16.mxu0 0
    %1026 = vmatpush1.bf16.msra.mxu0 0
    %1027 = vmatprep.subr.bf16.mxu0 0
    %1028 = vmatpush1.bf16.msra.mxu0 0
    %1029 = vmatprep.subr.bf16.mxu0 0
    %1030 = vmatpush1.bf16.msra.mxu0 0
    %1031 = vmatprep.subr.bf16.mxu0 0
    %1032 = vmatpush1.bf16.msra.mxu0 0
    %1033 = vmatprep.subr.bf16.mxu0 0
    %1034 = vmatpush1.bf16.msra.mxu0 0
    %1035 = vmatprep.subr.bf16.mxu0 %v1017
    %1036 = vmatpush1.bf16.msra.mxu0 %v1014
    %1037 = vmatprep.subr.bf16.mxu0 %v1001
    %1038 = vmatpush1.bf16.msra.mxu0 %v1000
    %1039 = vmatprep.subr.bf16.mxu0 %v997
    %1040 = vmatpush1.bf16.msra.mxu0 %v996
    %1041 = vmatprep.subr.bf16.mxu0 0
    %1042 = vmatpush2.bf16.msra.mxu0 0
    %1043 = vmatprep.subr.bf16.mxu0 0
    %1044 = vmatpush2.bf16.msra.mxu0 0
    %1045 = vmatprep.subr.bf16.mxu0 0
    %1046 = vmatpush2.bf16.msra.mxu0 0
    %1047 = vmatprep.subr.bf16.mxu0 0
    %1048 = vmatpush2.bf16.msra.mxu0 0
    %1049 = vmatprep.subr.bf16.mxu0 0
    %1050 = vmatpush2.bf16.msra.mxu0 0
    %1051 = vmatprep.subr.bf16.mxu0 0
    %1052 = vmatpush2.bf16.msra.mxu0 0
    %1053 = vmatprep.subr.bf16.mxu0 0
    %1054 = vmatpush2.bf16.msra.mxu0 0
    %1055 = vmatprep.subr.bf16.mxu0 0
    %1056 = vmatpush2.bf16.msra.mxu0 0
    %1057 = vmatprep.mubr.bf16.mxu0 0
    %1058 = vmatmul.mubr.bf16.gmra.mxu0 %v1011
    %v1059 = vpop.f32.mrf.mxu0
    %v1060 = vadd.f32 0.0, %v1059
    %v1061 = vpop.f32.mrf.mxu0
    %v1062 = vadd.f32 0.0, %v1061
    %v1063 = vpop.f32.mrf.mxu0
    %v1064 = vpop.f32.mrf.mxu0
    %1065 = vdwg.mxu0
    %1066 = vmatprep.subr.bf16.mxu0 0
    %1067 = vmatpush1.bf16.msra.mxu0 0
    %1068 = vmatprep.subr.bf16.mxu0 0
    %1069 = vmatpush1.bf16.msra.mxu0 0
    %1070 = vmatprep.subr.bf16.mxu0 0
    %1071 = vmatpush1.bf16.msra.mxu0 0
    %1072 = vmatprep.subr.bf16.mxu0 0
    %1073 = vmatpush1.bf16.msra.mxu0 0
    %1074 = vmatprep.subr.bf16.mxu0 0
    %1075 = vmatpush1.bf16.msra.mxu0 0
    %1076 = vmatprep.subr.bf16.mxu0 %v1023
    %1077 = vmatpush1.bf16.msra.mxu0 %v1020
    %1078 = vmatprep.subr.bf16.mxu0 %v1003
    %1079 = vmatpush1.bf16.msra.mxu0 %v1002
    %1080 = vmatprep.subr.bf16.mxu0 %v999
    %1081 = vmatpush1.bf16.msra.mxu0 %v998
    %1082 = vmatprep.subr.bf16.mxu0 0
    %1083 = vmatpush2.bf16.msra.mxu0 0
    %1084 = vmatprep.subr.bf16.mxu0 0
    %1085 = vmatpush2.bf16.msra.mxu0 0
    %1086 = vmatprep.subr.bf16.mxu0 0
    %1087 = vmatpush2.bf16.msra.mxu0 0
    %1088 = vmatprep.subr.bf16.mxu0 0
    %1089 = vmatpush2.bf16.msra.mxu0 0
    %1090 = vmatprep.subr.bf16.mxu0 0
    %1091 = vmatpush2.bf16.msra.mxu0 0
    %1092 = vmatprep.subr.bf16.mxu0 0
    %1093 = vmatpush2.bf16.msra.mxu0 0
    %1094 = vmatprep.subr.bf16.mxu0 0
    %1095 = vmatpush2.bf16.msra.mxu0 0
    %1096 = vmatprep.subr.bf16.mxu0 0
    %1097 = vmatpush2.bf16.msra.mxu0 0
    %1098 = vmatprep.mubr.bf16.mxu0 0
    %1099 = vmatmul.mubr.bf16.gmra.mxu0 %v1011
    %v1100 = vpop.f32.mrf.mxu0
    %v1101 = vadd.f32 0.0, %v1100
    %v1102 = vpop.f32.mrf.mxu0
    %v1103 = vadd.f32 0.0, %v1102
    %v1104 = vpop.f32.mrf.mxu0
    %v1105 = vpop.f32.mrf.mxu0
    %1106 = vdwg.mxu0
    %v1107 = vsel %vm613, %v1060, 0.0
    %v1108 = vsel %vm613, %v1062, 0.0
    %v1109 = vadd.f32 %v1107, %v1108
    %1110 = vadd.xlane.f32.xlu0 %v1109
    %v1111 = vpop.xlane.xlu0 %1110
    %v1112 = vmul.f32 %v1111, %v192
    %v1113 = vmul.f32 %v1060, %v1060
    %v1114 = vmul.f32 %v1062, %v1062
    %v1115 = vsel %vm613, %v1113, 0.0
    %v1116 = vsel %vm613, %v1114, 0.0
    %v1117 = vadd.f32 %v1115, %v1116
    %1118 = vadd.xlane.f32.xlu0 %v1117
    %v1119 = vpop.xlane.xlu0 %1118
    %v1120 = vmul.f32 %v1119, %v192
    %v1121 = vmul.f32 %v1112, %v1112
    %v1122 = vsub.f32 %v1120, %v1121
    %v1123 = vmax.f32 %v1122, 0.0
    %v1124 = vsub.f32 %v1060, %v1112
    %v1125 = vsub.f32 %v1062, %v1112
    %v1126 = vadd.f32 %v1123, 1e-05
    %v1127 = vrsqrt.pop %v1126
    %v1128 = vmul.f32 %v1124, %v1127
    %v1129 = vmul.f32 %v1125, %v1127
    %v1130 = vsel %vm613, %v1101, 0.0
    %v1131 = vsel %vm613, %v1103, 0.0
    %v1132 = vadd.f32 %v1130, %v1131
    %1133 = vadd.xlane.f32.xlu0 %v1132
    %v1134 = vpop.xlane.xlu0 %1133
    %v1135 = vmul.f32 %v1134, %v192
    %v1136 = vmul.f32 %v1101, %v1101
    %v1137 = vmul.f32 %v1103, %v1103
    %v1138 = vsel %vm613, %v1136, 0.0
    %v1139 = vsel %vm613, %v1137, 0.0
    %v1140 = vadd.f32 %v1138, %v1139
    %1141 = vadd.xlane.f32.xlu0 %v1140
    %v1142 = vpop.xlane.xlu0 %1141
    %v1143 = vmul.f32 %v1142, %v192
    %v1144 = vmul.f32 %v1135, %v1135
    %v1145 = vsub.f32 %v1143, %v1144
    %v1146 = vmax.f32 %v1145, 0.0
    %v1147 = vsub.f32 %v1101, %v1135
    %v1148 = vsub.f32 %v1103, %v1135
    %v1149 = vadd.f32 %v1146, 1e-05
    %v1150 = vrsqrt.pop %v1149
    %v1151 = vmul.f32 %v1147, %v1150
    %v1152 = vmul.f32 %v1148, %v1150
    %vm1153 = vcmp.ge.f32.partialorder %v1128, 0.0
    %vm1154 = vcmp.ge.f32.partialorder %v1129, 0.0
    %vm1155 = vcmp.ge.f32.partialorder %v1151, 0.0
    %vm1156 = vcmp.ge.f32.partialorder %v1152, 0.0
    %v1157 = vmul.f32 %v1128, 0.01
    %v1158 = vmul.f32 %v1129, 0.01
    %v1159 = vmul.f32 %v1151, 0.01
    %v1160 = vmul.f32 %v1152, 0.01
    %v1161 = vsel %vm1153, %v1128, %v1157
    %v1162 = vsel %vm1154, %v1129, %v1158
    %v1163 = vsel %vm1155, %v1151, %v1159
    %v1164 = vsel %vm1156, %v1152, %v1160
    %v1169 = vrot.slane %v1161, 4
    %v1170 = vrot.slane %v1162, 4
    %v1171 = vrot.slane %v1163, 4
    %v1172 = vrot.slane %v1164, 4
    %v1177 = vadd.f32 %v283, %v1169
    %v1178 = vadd.f32 %v284, %v1170
    %v1179 = vadd.f32 %v285, %v1171
    %v1180 = vadd.f32 %v286, %v1172
    %v1185 = vrot.slane %v1177, 4
    %v1186 = vrot.slane %v1178, 4
    %v1187 = vrot.slane %v1179, 4
    %v1188 = vrot.slane %v1180, 4
    %1193 = vrot.lane.b32.xlu0 %v1185, 17
    %v1194 = vpop.permute.xlu0 %1193
    %1195 = vrot.lane.b32.xlu0 %v1186, 17
    %v1196 = vpop.permute.xlu0 %1195
    %1197 = vrot.lane.b32.xlu0 %v1187, 17
    %v1198 = vpop.permute.xlu0 %1197
    %1199 = vrot.lane.b32.xlu0 %v1188, 17
    %v1200 = vpop.permute.xlu0 %1199
    %v1201 = vsel %vm309, %v1198, %v1200
    %v1202 = vsel %vm309, %v1196, %v1198
    %v1203 = vsel %vm309, %v1194, %v1196
    %v1204 = vsel %vm309, %v1200, %v1194
    %v1205 = vmul.f32 %v1204, %v317
    %v1206 = vmul.f32 %v1203, %v321
    %v1207 = vmul.f32 %v1202, %v325
    %v1208 = vmul.f32 %v1201, %v329
    %1209 = vrot.lane.b32.xlu0 %v1185, 16
    %v1210 = vpop.permute.xlu0 %1209
    %1211 = vrot.lane.b32.xlu0 %v1186, 16
    %v1212 = vpop.permute.xlu0 %1211
    %1213 = vrot.lane.b32.xlu0 %v1187, 16
    %v1214 = vpop.permute.xlu0 %1213
    %1215 = vrot.lane.b32.xlu0 %v1188, 16
    %v1216 = vpop.permute.xlu0 %1215
    %v1217 = vsel %vm342, %v1214, %v1216
    %v1218 = vsel %vm342, %v1212, %v1214
    %v1219 = vsel %vm342, %v1210, %v1212
    %v1220 = vsel %vm342, %v1216, %v1210
    %v1221 = vmul.f32 %v1220, %v350
    %v1222 = vmul.f32 %v1219, %v354
    %v1223 = vmul.f32 %v1218, %v358
    %v1224 = vmul.f32 %v1217, %v362
    %1225 = vrot.lane.b32.xlu0 %v1185, 15
    %v1226 = vpop.permute.xlu0 %1225
    %1227 = vrot.lane.b32.xlu0 %v1186, 15
    %v1228 = vpop.permute.xlu0 %1227
    %1229 = vrot.lane.b32.xlu0 %v1187, 15
    %v1230 = vpop.permute.xlu0 %1229
    %1231 = vrot.lane.b32.xlu0 %v1188, 15
    %v1232 = vpop.permute.xlu0 %1231
    %v1233 = vsel %vm375, %v1230, %v1232
    %v1234 = vsel %vm375, %v1228, %v1230
    %v1235 = vsel %vm375, %v1226, %v1228
    %v1236 = vsel %vm375, %v1232, %v1226
    %v1237 = vmul.f32 %v1236, %v383
    %v1238 = vmul.f32 %v1235, %v387
    %v1239 = vmul.f32 %v1234, %v391
    %v1240 = vmul.f32 %v1233, %v395
    %1241 = vrot.lane.b32.xlu0 %v1185, 1
    %v1242 = vpop.permute.xlu0 %1241
    %1243 = vrot.lane.b32.xlu0 %v1186, 1
    %v1244 = vpop.permute.xlu0 %1243
    %1245 = vrot.lane.b32.xlu0 %v1187, 1
    %v1246 = vpop.permute.xlu0 %1245
    %1247 = vrot.lane.b32.xlu0 %v1188, 1
    %v1248 = vpop.permute.xlu0 %1247
    %v1249 = vsel %vm408, %v1246, %v1248
    %v1250 = vsel %vm408, %v1244, %v1246
    %v1251 = vsel %vm408, %v1242, %v1244
    %v1252 = vsel %vm408, %v1248, %v1242
    %v1253 = vmul.f32 %v1252, %v416
    %v1254 = vmul.f32 %v1251, %v420
    %v1255 = vmul.f32 %v1250, %v424
    %v1256 = vmul.f32 %v1249, %v428
    %1257 = vrot.lane.b32.xlu0 %v1185, 127
    %v1258 = vpop.permute.xlu0 %1257
    %1259 = vrot.lane.b32.xlu0 %v1186, 127
    %v1260 = vpop.permute.xlu0 %1259
    %1261 = vrot.lane.b32.xlu0 %v1187, 127
    %v1262 = vpop.permute.xlu0 %1261
    %1263 = vrot.lane.b32.xlu0 %v1188, 127
    %v1264 = vpop.permute.xlu0 %1263
    %v1265 = vsel %vm441, %v1262, %v1264
    %v1266 = vsel %vm441, %v1260, %v1262
    %v1267 = vsel %vm441, %v1258, %v1260
    %v1268 = vsel %vm441, %v1264, %v1258
    %v1269 = vmul.f32 %v1267, %v449
    %v1270 = vmul.f32 %v1266, %v453
    %v1271 = vmul.f32 %v1265, %v457
    %v1272 = vmul.f32 %v1268, %v461
    %1273 = vrot.lane.b32.xlu0 %v1185, 113
    %v1274 = vpop.permute.xlu0 %1273
    %1275 = vrot.lane.b32.xlu0 %v1186, 113
    %v1276 = vpop.permute.xlu0 %1275
    %1277 = vrot.lane.b32.xlu0 %v1187, 113
    %v1278 = vpop.permute.xlu0 %1277
    %1279 = vrot.lane.b32.xlu0 %v1188, 113
    %v1280 = vpop.permute.xlu0 %1279
    %v1281 = vsel %vm474, %v1278, %v1280
    %v1282 = vsel %vm474, %v1276, %v1278
    %v1283 = vsel %vm474, %v1274, %v1276
    %v1284 = vsel %vm474, %v1280, %v1274
    %v1285 = vmul.f32 %v1283, %v482
    %v1286 = vmul.f32 %v1282, %v486
    %v1287 = vmul.f32 %v1281, %v490
    %v1288 = vmul.f32 %v1284, %v494
    %1289 = vrot.lane.b32.xlu0 %v1185, 112
    %v1290 = vpop.permute.xlu0 %1289
    %1291 = vrot.lane.b32.xlu0 %v1186, 112
    %v1292 = vpop.permute.xlu0 %1291
    %1293 = vrot.lane.b32.xlu0 %v1187, 112
    %v1294 = vpop.permute.xlu0 %1293
    %1295 = vrot.lane.b32.xlu0 %v1188, 112
    %v1296 = vpop.permute.xlu0 %1295
    %v1297 = vsel %vm507, %v1294, %v1296
    %v1298 = vsel %vm507, %v1292, %v1294
    %v1299 = vsel %vm507, %v1290, %v1292
    %v1300 = vsel %vm507, %v1296, %v1290
    %v1301 = vmul.f32 %v1299, %v515
    %v1302 = vmul.f32 %v1298, %v519
    %v1303 = vmul.f32 %v1297, %v523
    %v1304 = vmul.f32 %v1300, %v527
    %1305 = vrot.lane.b32.xlu0 %v1185, 111
    %v1306 = vpop.permute.xlu0 %1305
    %1307 = vrot.lane.b32.xlu0 %v1186, 111
    %v1308 = vpop.permute.xlu0 %1307
    %1309 = vrot.lane.b32.xlu0 %v1187, 111
    %v1310 = vpop.permute.xlu0 %1309
    %1311 = vrot.lane.b32.xlu0 %v1188, 111
    %v1312 = vpop.permute.xlu0 %1311
    %v1313 = vsel %vm540, %v1310, %v1312
    %v1314 = vsel %vm540, %v1308, %v1310
    %v1315 = vsel %vm540, %v1306, %v1308
    %v1316 = vsel %vm540, %v1312, %v1306
    %v1317 = vmul.f32 %v1315, %v548
    %v1318 = vmul.f32 %v1314, %v552
    %v1319 = vmul.f32 %v1313, %v556
    %v1320 = vmul.f32 %v1316, %v560
    %v1325 = vrot.slane %v1221, 4
    %v1326 = vrot.slane %v1222, 4
    %v1327 = vrot.slane %v1223, 4
    %v1328 = vrot.slane %v1224, 4
    %v1337 = vrot.slane %v1253, 4
    %v1338 = vrot.slane %v1254, 4
    %v1339 = vrot.slane %v1255, 4
    %v1340 = vrot.slane %v1256, 4
    %v1349 = vrot.slane %v1269, 4
    %v1350 = vrot.slane %v1270, 4
    %v1351 = vrot.slane %v1271, 4
    %v1352 = vrot.slane %v1272, 4
    %v1361 = vrot.slane %v1301, 4
    %v1362 = vrot.slane %v1302, 4
    %v1363 = vrot.slane %v1303, 4
    %v1364 = vrot.slane %v1304, 4
    %v1369 = vsel %vm613, %v1205, %v1325
    %v1370 = vsel %vm613, %v1206, %v1326
    %v1371 = vsel %vm613, %v1207, %v1327
    %v1372 = vsel %vm613, %v1208, %v1328
    %v1373 = vsel %vm613, %v1237, %v1337
    %v1374 = vsel %vm613, %v1238, %v1338
    %v1375 = vsel %vm613, %v1239, %v1339
    %v1376 = vsel %vm613, %v1240, %v1340
    %v1377 = vsel %vm613, %v1185, %v1349
    %v1378 = vsel %vm613, %v1186, %v1350
    %v1379 = vsel %vm613, %v1187, %v1351
    %v1380 = vsel %vm613, %v1188, %v1352
    %v1381 = vsel %vm613, %v1285, %v1361
    %v1382 = vsel %vm613, %v1286, %v1362
    %v1383 = vsel %vm613, %v1287, %v1363
    %v1384 = vsel %vm613, %v1288, %v1364
    %v1385 = vpack.c.bf16 %v1373, %v1369
    %v1386 = vpack.c.bf16 %v1374, %v1370
    %v1387 = vpack.c.bf16 %v1375, %v1371
    %v1388 = vpack.c.bf16 %v1376, %v1372
    %v1389 = vpack.c.bf16 %v1381, %v1377
    %v1390 = vpack.c.bf16 %v1382, %v1378
    %v1391 = vpack.c.bf16 %v1383, %v1379
    %v1392 = vpack.c.bf16 %v1384, %v1380
    %v1393 = vpack.c.bf16 %v1317, %v1317
    %v1394 = vpack.c.bf16 %v1318, %v1318
    %v1395 = vpack.c.bf16 %v1319, %v1319
    %v1396 = vpack.c.bf16 %v1320, %v1320
    %s1397 = scalar_lea.vmem %s5, 4
    %v1398 = vld [vmem:[%s1397] sm:$0x3]
    %v1400 = vsel %vm643, %v1398, 0
    %v1403 = vsel %vm647, %v1393, 0
    %v1406 = vsel %vm647, %v1394, 0
    %v1409 = vsel %vm647, %v1395, 0
    %v1412 = vsel %vm647, %v1396, 0
    %1414 = vmatprep.subr.bf16.mxu0 0
    %1415 = vmatpush1.bf16.msra.mxu0 0
    %1416 = vmatprep.subr.bf16.mxu0 0
    %1417 = vmatpush1.bf16.msra.mxu0 0
    %1418 = vmatprep.subr.bf16.mxu0 0
    %1419 = vmatpush1.bf16.msra.mxu0 0
    %1420 = vmatprep.subr.bf16.mxu0 0
    %1421 = vmatpush1.bf16.msra.mxu0 0
    %1422 = vmatprep.subr.bf16.mxu0 0
    %1423 = vmatpush1.bf16.msra.mxu0 0
    %1424 = vmatprep.subr.bf16.mxu0 %v1406
    %1425 = vmatpush1.bf16.msra.mxu0 %v1403
    %1426 = vmatprep.subr.bf16.mxu0 %v1390
    %1427 = vmatpush1.bf16.msra.mxu0 %v1389
    %1428 = vmatprep.subr.bf16.mxu0 %v1386
    %1429 = vmatpush1.bf16.msra.mxu0 %v1385
    %1430 = vmatprep.subr.bf16.mxu0 0
    %1431 = vmatpush2.bf16.msra.mxu0 0
    %1432 = vmatprep.subr.bf16.mxu0 0
    %1433 = vmatpush2.bf16.msra.mxu0 0
    %1434 = vmatprep.subr.bf16.mxu0 0
    %1435 = vmatpush2.bf16.msra.mxu0 0
    %1436 = vmatprep.subr.bf16.mxu0 0
    %1437 = vmatpush2.bf16.msra.mxu0 0
    %1438 = vmatprep.subr.bf16.mxu0 0
    %1439 = vmatpush2.bf16.msra.mxu0 0
    %1440 = vmatprep.subr.bf16.mxu0 0
    %1441 = vmatpush2.bf16.msra.mxu0 0
    %1442 = vmatprep.subr.bf16.mxu0 0
    %1443 = vmatpush2.bf16.msra.mxu0 0
    %1444 = vmatprep.subr.bf16.mxu0 0
    %1445 = vmatpush2.bf16.msra.mxu0 0
    %1446 = vmatprep.mubr.bf16.mxu0 0
    %1447 = vmatmul.mubr.bf16.gmra.mxu0 %v1400
    %v1448 = vpop.f32.mrf.mxu0
    %v1449 = vadd.f32 0.0, %v1448
    %v1450 = vpop.f32.mrf.mxu0
    %v1451 = vadd.f32 0.0, %v1450
    %v1452 = vpop.f32.mrf.mxu0
    %v1453 = vpop.f32.mrf.mxu0
    %1454 = vdwg.mxu0
    %1455 = vmatprep.subr.bf16.mxu0 0
    %1456 = vmatpush1.bf16.msra.mxu0 0
    %1457 = vmatprep.subr.bf16.mxu0 0
    %1458 = vmatpush1.bf16.msra.mxu0 0
    %1459 = vmatprep.subr.bf16.mxu0 0
    %1460 = vmatpush1.bf16.msra.mxu0 0
    %1461 = vmatprep.subr.bf16.mxu0 0
    %1462 = vmatpush1.bf16.msra.mxu0 0
    %1463 = vmatprep.subr.bf16.mxu0 0
    %1464 = vmatpush1.bf16.msra.mxu0 0
    %1465 = vmatprep.subr.bf16.mxu0 %v1412
    %1466 = vmatpush1.bf16.msra.mxu0 %v1409
    %1467 = vmatprep.subr.bf16.mxu0 %v1392
    %1468 = vmatpush1.bf16.msra.mxu0 %v1391
    %1469 = vmatprep.subr.bf16.mxu0 %v1388
    %1470 = vmatpush1.bf16.msra.mxu0 %v1387
    %1471 = vmatprep.subr.bf16.mxu0 0
    %1472 = vmatpush2.bf16.msra.mxu0 0
    %1473 = vmatprep.subr.bf16.mxu0 0
    %1474 = vmatpush2.bf16.msra.mxu0 0
    %1475 = vmatprep.subr.bf16.mxu0 0
    %1476 = vmatpush2.bf16.msra.mxu0 0
    %1477 = vmatprep.subr.bf16.mxu0 0
    %1478 = vmatpush2.bf16.msra.mxu0 0
    %1479 = vmatprep.subr.bf16.mxu0 0
    %1480 = vmatpush2.bf16.msra.mxu0 0
    %1481 = vmatprep.subr.bf16.mxu0 0
    %1482 = vmatpush2.bf16.msra.mxu0 0
    %1483 = vmatprep.subr.bf16.mxu0 0
    %1484 = vmatpush2.bf16.msra.mxu0 0
    %1485 = vmatprep.subr.bf16.mxu0 0
    %1486 = vmatpush2.bf16.msra.mxu0 0
    %1487 = vmatprep.mubr.bf16.mxu0 0
    %1488 = vmatmul.mubr.bf16.gmra.mxu0 %v1400
    %v1489 = vpop.f32.mrf.mxu0
    %v1490 = vadd.f32 0.0, %v1489
    %v1491 = vpop.f32.mrf.mxu0
    %v1492 = vadd.f32 0.0, %v1491
    %v1493 = vpop.f32.mrf.mxu0
    %v1494 = vpop.f32.mrf.mxu0
    %1495 = vdwg.mxu0
    %v1496 = vsel %vm613, %v1449, 0.0
    %v1497 = vsel %vm613, %v1451, 0.0
    %v1498 = vadd.f32 %v1496, %v1497
    %1499 = vadd.xlane.f32.xlu0 %v1498
    %v1500 = vpop.xlane.xlu0 %1499
    %v1501 = vmul.f32 %v1500, %v192
    %v1502 = vmul.f32 %v1449, %v1449
    %v1503 = vmul.f32 %v1451, %v1451
    %v1504 = vsel %vm613, %v1502, 0.0
    %v1505 = vsel %vm613, %v1503, 0.0
    %v1506 = vadd.f32 %v1504, %v1505
    %1507 = vadd.xlane.f32.xlu0 %v1506
    %v1508 = vpop.xlane.xlu0 %1507
    %v1509 = vmul.f32 %v1508, %v192
    %v1510 = vmul.f32 %v1501, %v1501
    %v1511 = vsub.f32 %v1509, %v1510
    %v1512 = vmax.f32 %v1511, 0.0
    %v1513 = vsub.f32 %v1449, %v1501
    %v1514 = vsub.f32 %v1451, %v1501
    %v1515 = vadd.f32 %v1512, 1e-05
    %v1516 = vrsqrt.pop %v1515
    %v1517 = vmul.f32 %v1513, %v1516
    %v1518 = vmul.f32 %v1514, %v1516
    %v1519 = vsel %vm613, %v1490, 0.0
    %v1520 = vsel %vm613, %v1492, 0.0
    %v1521 = vadd.f32 %v1519, %v1520
    %1522 = vadd.xlane.f32.xlu0 %v1521
    %v1523 = vpop.xlane.xlu0 %1522
    %v1524 = vmul.f32 %v1523, %v192
    %v1525 = vmul.f32 %v1490, %v1490
    %v1526 = vmul.f32 %v1492, %v1492
    %v1527 = vsel %vm613, %v1525, 0.0
    %v1528 = vsel %vm613, %v1526, 0.0
    %v1529 = vadd.f32 %v1527, %v1528
    %1530 = vadd.xlane.f32.xlu0 %v1529
    %v1531 = vpop.xlane.xlu0 %1530
    %v1532 = vmul.f32 %v1531, %v192
    %v1533 = vmul.f32 %v1524, %v1524
    %v1534 = vsub.f32 %v1532, %v1533
    %v1535 = vmax.f32 %v1534, 0.0
    %v1536 = vsub.f32 %v1490, %v1524
    %v1537 = vsub.f32 %v1492, %v1524
    %v1538 = vadd.f32 %v1535, 1e-05
    %v1539 = vrsqrt.pop %v1538
    %v1540 = vmul.f32 %v1536, %v1539
    %v1541 = vmul.f32 %v1537, %v1539
    %vm1542 = vcmp.ge.f32.partialorder %v1517, 0.0
    %vm1543 = vcmp.ge.f32.partialorder %v1518, 0.0
    %vm1544 = vcmp.ge.f32.partialorder %v1540, 0.0
    %vm1545 = vcmp.ge.f32.partialorder %v1541, 0.0
    %v1546 = vmul.f32 %v1517, 0.01
    %v1547 = vmul.f32 %v1518, 0.01
    %v1548 = vmul.f32 %v1540, 0.01
    %v1549 = vmul.f32 %v1541, 0.01
    %v1550 = vsel %vm1542, %v1517, %v1546
    %v1551 = vsel %vm1543, %v1518, %v1547
    %v1552 = vsel %vm1544, %v1540, %v1548
    %v1553 = vsel %vm1545, %v1541, %v1549
    %v1554 = vsel %vm613, %v279, 0.0
    %v1555 = vrot.slane %v1554, 4
    %v1556 = vadd.f32 %v1554, %v1555
    %v1557 = vrot.slane %v1556, 2
    %v1558 = vadd.f32 %v1556, %v1557
    %v1559 = vrot.slane %v1558, 1
    %v1560 = vadd.f32 %v1558, %v1559
    %v1561 = vsel %vm613, %v280, 0.0
    %v1562 = vrot.slane %v1561, 4
    %v1563 = vadd.f32 %v1561, %v1562
    %v1564 = vrot.slane %v1563, 2
    %v1565 = vadd.f32 %v1563, %v1564
    %v1566 = vrot.slane %v1565, 1
    %v1567 = vadd.f32 %v1565, %v1566
    %v1568 = vsel %vm613, %v281, 0.0
    %v1569 = vrot.slane %v1568, 4
    %v1570 = vadd.f32 %v1568, %v1569
    %v1571 = vrot.slane %v1570, 2
    %v1572 = vadd.f32 %v1570, %v1571
    %v1573 = vrot.slane %v1572, 1
    %v1574 = vadd.f32 %v1572, %v1573
    %v1575 = vsel %vm613, %v282, 0.0
    %v1576 = vrot.slane %v1575, 4
    %v1577 = vadd.f32 %v1575, %v1576
    %v1578 = vrot.slane %v1577, 2
    %v1579 = vadd.f32 %v1577, %v1578
    %v1580 = vrot.slane %v1579, 1
    %v1581 = vadd.f32 %v1579, %v1580
    %v1582 = vrcp.pop 4.0
    %v1583 = vmul.f32 %v1560, %v1582
    %v1584 = vmul.f32 %v1567, %v1582
    %v1585 = vmul.f32 %v1574, %v1582
    %v1586 = vmul.f32 %v1581, %v1582
    %v1587 = vsel %vm613, %v796, 0.0
    %v1588 = vrot.slane %v1587, 4
    %v1589 = vadd.f32 %v1587, %v1588
    %v1590 = vrot.slane %v1589, 2
    %v1591 = vadd.f32 %v1589, %v1590
    %v1592 = vrot.slane %v1591, 1
    %v1593 = vadd.f32 %v1591, %v1592
    %v1594 = vsel %vm613, %v797, 0.0
    %v1595 = vrot.slane %v1594, 4
    %v1596 = vadd.f32 %v1594, %v1595
    %v1597 = vrot.slane %v1596, 2
    %v1598 = vadd.f32 %v1596, %v1597
    %v1599 = vrot.slane %v1598, 1
    %v1600 = vadd.f32 %v1598, %v1599
    %v1601 = vsel %vm613, %v798, 0.0
    %v1602 = vrot.slane %v1601, 4
    %v1603 = vadd.f32 %v1601, %v1602
    %v1604 = vrot.slane %v1603, 2
    %v1605 = vadd.f32 %v1603, %v1604
    %v1606 = vrot.slane %v1605, 1
    %v1607 = vadd.f32 %v1605, %v1606
    %v1608 = vsel %vm613, %v799, 0.0
    %v1609 = vrot.slane %v1608, 4
    %v1610 = vadd.f32 %v1608, %v1609
    %v1611 = vrot.slane %v1610, 2
    %v1612 = vadd.f32 %v1610, %v1611
    %v1613 = vrot.slane %v1612, 1
    %v1614 = vadd.f32 %v1612, %v1613
    %v1615 = vmul.f32 %v1593, %v1582
    %v1616 = vmul.f32 %v1600, %v1582
    %v1617 = vmul.f32 %v1607, %v1582
    %v1618 = vmul.f32 %v1614, %v1582
    %v1619 = vsel %vm613, %v1161, 0.0
    %v1620 = vrot.slane %v1619, 4
    %v1621 = vadd.f32 %v1619, %v1620
    %v1622 = vrot.slane %v1621, 2
    %v1623 = vadd.f32 %v1621, %v1622
    %v1624 = vrot.slane %v1623, 1
    %v1625 = vadd.f32 %v1623, %v1624
    %v1626 = vsel %vm613, %v1162, 0.0
    %v1627 = vrot.slane %v1626, 4
    %v1628 = vadd.f32 %v1626, %v1627
    %v1629 = vrot.slane %v1628, 2
    %v1630 = vadd.f32 %v1628, %v1629
    %v1631 = vrot.slane %v1630, 1
    %v1632 = vadd.f32 %v1630, %v1631
    %v1633 = vsel %vm613, %v1163, 0.0
    %v1634 = vrot.slane %v1633, 4
    %v1635 = vadd.f32 %v1633, %v1634
    %v1636 = vrot.slane %v1635, 2
    %v1637 = vadd.f32 %v1635, %v1636
    %v1638 = vrot.slane %v1637, 1
    %v1639 = vadd.f32 %v1637, %v1638
    %v1640 = vsel %vm613, %v1164, 0.0
    %v1641 = vrot.slane %v1640, 4
    %v1642 = vadd.f32 %v1640, %v1641
    %v1643 = vrot.slane %v1642, 2
    %v1644 = vadd.f32 %v1642, %v1643
    %v1645 = vrot.slane %v1644, 1
    %v1646 = vadd.f32 %v1644, %v1645
    %v1647 = vmul.f32 %v1625, %v1582
    %v1648 = vmul.f32 %v1632, %v1582
    %v1649 = vmul.f32 %v1639, %v1582
    %v1650 = vmul.f32 %v1646, %v1582
    %v1651 = vsel %vm613, %v1550, 0.0
    %v1652 = vrot.slane %v1651, 4
    %v1653 = vadd.f32 %v1651, %v1652
    %v1654 = vrot.slane %v1653, 2
    %v1655 = vadd.f32 %v1653, %v1654
    %v1656 = vrot.slane %v1655, 1
    %v1657 = vadd.f32 %v1655, %v1656
    %v1658 = vsel %vm613, %v1551, 0.0
    %v1659 = vrot.slane %v1658, 4
    %v1660 = vadd.f32 %v1658, %v1659
    %v1661 = vrot.slane %v1660, 2
    %v1662 = vadd.f32 %v1660, %v1661
    %v1663 = vrot.slane %v1662, 1
    %v1664 = vadd.f32 %v1662, %v1663
    %v1665 = vsel %vm613, %v1552, 0.0
    %v1666 = vrot.slane %v1665, 4
    %v1667 = vadd.f32 %v1665, %v1666
    %v1668 = vrot.slane %v1667, 2
    %v1669 = vadd.f32 %v1667, %v1668
    %v1670 = vrot.slane %v1669, 1
    %v1671 = vadd.f32 %v1669, %v1670
    %v1672 = vsel %vm613, %v1553, 0.0
    %v1673 = vrot.slane %v1672, 4
    %v1674 = vadd.f32 %v1672, %v1673
    %v1675 = vrot.slane %v1674, 2
    %v1676 = vadd.f32 %v1674, %v1675
    %v1677 = vrot.slane %v1676, 1
    %v1678 = vadd.f32 %v1676, %v1677
    %v1679 = vmul.f32 %v1657, %v1582
    %v1680 = vmul.f32 %v1664, %v1582
    %v1681 = vmul.f32 %v1671, %v1582
    %v1682 = vmul.f32 %v1678, %v1582
    %v1683 = vsel %vm613, %v279, -inf
    %v1684 = vrot.slane %v1683, 4
    %v1685 = vmax.f32 %v1683, %v1684
    %v1686 = vrot.slane %v1685, 2
    %v1687 = vmax.f32 %v1685, %v1686
    %v1688 = vrot.slane %v1687, 1
    %v1689 = vmax.f32 %v1687, %v1688
    %v1690 = vsel %vm613, %v280, -inf
    %v1691 = vrot.slane %v1690, 4
    %v1692 = vmax.f32 %v1690, %v1691
    %v1693 = vrot.slane %v1692, 2
    %v1694 = vmax.f32 %v1692, %v1693
    %v1695 = vrot.slane %v1694, 1
    %v1696 = vmax.f32 %v1694, %v1695
    %v1697 = vsel %vm613, %v281, -inf
    %v1698 = vrot.slane %v1697, 4
    %v1699 = vmax.f32 %v1697, %v1698
    %v1700 = vrot.slane %v1699, 2
    %v1701 = vmax.f32 %v1699, %v1700
    %v1702 = vrot.slane %v1701, 1
    %v1703 = vmax.f32 %v1701, %v1702
    %v1704 = vsel %vm613, %v282, -inf
    %v1705 = vrot.slane %v1704, 4
    %v1706 = vmax.f32 %v1704, %v1705
    %v1707 = vrot.slane %v1706, 2
    %v1708 = vmax.f32 %v1706, %v1707
    %v1709 = vrot.slane %v1708, 1
    %v1710 = vmax.f32 %v1708, %v1709
    %v1711 = vsel %vm613, %v796, -inf
    %v1712 = vrot.slane %v1711, 4
    %v1713 = vmax.f32 %v1711, %v1712
    %v1714 = vrot.slane %v1713, 2
    %v1715 = vmax.f32 %v1713, %v1714
    %v1716 = vrot.slane %v1715, 1
    %v1717 = vmax.f32 %v1715, %v1716
    %v1718 = vsel %vm613, %v797, -inf
    %v1719 = vrot.slane %v1718, 4
    %v1720 = vmax.f32 %v1718, %v1719
    %v1721 = vrot.slane %v1720, 2
    %v1722 = vmax.f32 %v1720, %v1721
    %v1723 = vrot.slane %v1722, 1
    %v1724 = vmax.f32 %v1722, %v1723
    %v1725 = vsel %vm613, %v798, -inf
    %v1726 = vrot.slane %v1725, 4
    %v1727 = vmax.f32 %v1725, %v1726
    %v1728 = vrot.slane %v1727, 2
    %v1729 = vmax.f32 %v1727, %v1728
    %v1730 = vrot.slane %v1729, 1
    %v1731 = vmax.f32 %v1729, %v1730
    %v1732 = vsel %vm613, %v799, -inf
    %v1733 = vrot.slane %v1732, 4
    %v1734 = vmax.f32 %v1732, %v1733
    %v1735 = vrot.slane %v1734, 2
    %v1736 = vmax.f32 %v1734, %v1735
    %v1737 = vrot.slane %v1736, 1
    %v1738 = vmax.f32 %v1736, %v1737
    %v1739 = vsel %vm613, %v1161, -inf
    %v1740 = vrot.slane %v1739, 4
    %v1741 = vmax.f32 %v1739, %v1740
    %v1742 = vrot.slane %v1741, 2
    %v1743 = vmax.f32 %v1741, %v1742
    %v1744 = vrot.slane %v1743, 1
    %v1745 = vmax.f32 %v1743, %v1744
    %v1746 = vsel %vm613, %v1162, -inf
    %v1747 = vrot.slane %v1746, 4
    %v1748 = vmax.f32 %v1746, %v1747
    %v1749 = vrot.slane %v1748, 2
    %v1750 = vmax.f32 %v1748, %v1749
    %v1751 = vrot.slane %v1750, 1
    %v1752 = vmax.f32 %v1750, %v1751
    %v1753 = vsel %vm613, %v1163, -inf
    %v1754 = vrot.slane %v1753, 4
    %v1755 = vmax.f32 %v1753, %v1754
    %v1756 = vrot.slane %v1755, 2
    %v1757 = vmax.f32 %v1755, %v1756
    %v1758 = vrot.slane %v1757, 1
    %v1759 = vmax.f32 %v1757, %v1758
    %v1760 = vsel %vm613, %v1164, -inf
    %v1761 = vrot.slane %v1760, 4
    %v1762 = vmax.f32 %v1760, %v1761
    %v1763 = vrot.slane %v1762, 2
    %v1764 = vmax.f32 %v1762, %v1763
    %v1765 = vrot.slane %v1764, 1
    %v1766 = vmax.f32 %v1764, %v1765
    %v1767 = vsel %vm613, %v1550, -inf
    %v1768 = vrot.slane %v1767, 4
    %v1769 = vmax.f32 %v1767, %v1768
    %v1770 = vrot.slane %v1769, 2
    %v1771 = vmax.f32 %v1769, %v1770
    %v1772 = vrot.slane %v1771, 1
    %v1773 = vmax.f32 %v1771, %v1772
    %v1774 = vsel %vm613, %v1551, -inf
    %v1775 = vrot.slane %v1774, 4
    %v1776 = vmax.f32 %v1774, %v1775
    %v1777 = vrot.slane %v1776, 2
    %v1778 = vmax.f32 %v1776, %v1777
    %v1779 = vrot.slane %v1778, 1
    %v1780 = vmax.f32 %v1778, %v1779
    %v1781 = vsel %vm613, %v1552, -inf
    %v1782 = vrot.slane %v1781, 4
    %v1783 = vmax.f32 %v1781, %v1782
    %v1784 = vrot.slane %v1783, 2
    %v1785 = vmax.f32 %v1783, %v1784
    %v1786 = vrot.slane %v1785, 1
    %v1787 = vmax.f32 %v1785, %v1786
    %v1788 = vsel %vm613, %v1553, -inf
    %v1789 = vrot.slane %v1788, 4
    %v1790 = vmax.f32 %v1788, %v1789
    %v1791 = vrot.slane %v1790, 2
    %v1792 = vmax.f32 %v1790, %v1791
    %v1793 = vrot.slane %v1792, 1
    %v1794 = vmax.f32 %v1792, %v1793
    %vm1795 = vcmask 1040384
    %v1796 = vsel %vm1795, %v1583, %v1615
    %v1797 = vsel %vm1795, %v1584, %v1616
    %v1798 = vsel %vm1795, %v1585, %v1617
    %v1799 = vsel %vm1795, %v1586, %v1618
    %v1800 = vsel %vm647, %v1796, %v1647
    %v1801 = vsel %vm647, %v1797, %v1648
    %v1802 = vsel %vm647, %v1798, %v1649
    %v1803 = vsel %vm647, %v1799, %v1650
    %vm1804 = vcmask 1042432
    %v1805 = vsel %vm1804, %v1800, %v1679
    %v1806 = vsel %vm1804, %v1801, %v1680
    %v1807 = vsel %vm1804, %v1802, %v1681
    %v1808 = vsel %vm1804, %v1803, %v1682
    %v1809 = vsel %vm613, %v1805, %v1689
    %v1810 = vsel %vm613, %v1806, %v1696
    %v1811 = vsel %vm613, %v1807, %v1703
    %v1812 = vsel %vm613, %v1808, %v1710
    %vm1813 = vcmask 1044480
    %v1814 = vsel %vm1813, %v1809, %v1717
    %v1815 = vsel %vm1813, %v1810, %v1724
    %v1816 = vsel %vm1813, %v1811, %v1731
    %v1817 = vsel %vm1813, %v1812, %v1738
    %vm1818 = vcmask 1045504
    %v1819 = vsel %vm1818, %v1814, %v1745
    %v1820 = vsel %vm1818, %v1815, %v1752
    %v1821 = vsel %vm1818, %v1816, %v1759
    %v1822 = vsel %vm1818, %v1817, %v1766
    %vm1823 = vcmask 1046528
    %v1824 = vsel %vm1823, %v1819, %v1773
    %v1825 = vsel %vm1823, %v1820, %v1780
    %v1826 = vsel %vm1823, %v1821, %v1787
    %v1827 = vsel %vm1823, %v1822, %v1794
    %v1828 = vld [vmem:[%s2] sm:$0xff]
    %1829 = vrot.lane.b32.xlu0 %v1824, 17
    %v1830 = vpop.permute.xlu0 %1829
    %1831 = vrot.lane.b32.xlu0 %v1825, 17
    %v1832 = vpop.permute.xlu0 %1831
    %1833 = vrot.lane.b32.xlu0 %v1826, 17
    %v1834 = vpop.permute.xlu0 %1833
    %1835 = vrot.lane.b32.xlu0 %v1827, 17
    %v1836 = vpop.permute.xlu0 %1835
    %v1837 = vsel %vm309, %v1834, %v1836
    %v1838 = vsel %vm309, %v1832, %v1834
    %v1839 = vsel %vm309, %v1830, %v1832
    %v1840 = vsel %vm309, %v1836, %v1830
    %v1841 = vmul.f32 %v1840, %v317
    %v1842 = vmul.f32 %v1839, %v321
    %v1843 = vmul.f32 %v1838, %v325
    %v1844 = vmul.f32 %v1837, %v329
    %1846 = vset.pattern.permute.xlu0 0
    %1847 = vperm.xlu0 %1846, %v1828
    %v1848 = vpop.permute.xlu0 %1847
    %v1850 = vmul.f32 %v1841, %v1848
    %v1851 = vmul.f32 %v1842, %v1848
    %v1852 = vmul.f32 %v1843, %v1848
    %v1853 = vmul.f32 %v1844, %v1848
    %v1854 = vadd.f32 %v1850, 0.0
    %v1855 = vadd.f32 %v1851, 0.0
    %v1856 = vadd.f32 %v1852, 0.0
    %v1857 = vadd.f32 %v1853, 0.0
    %v1862 = vrot.slane %v1850, 4
    %v1863 = vrot.slane %v1851, 4
    %v1864 = vrot.slane %v1852, 4
    %v1865 = vrot.slane %v1853, 4
    %v1870 = vadd.f32 %v1854, %v1862
    %v1871 = vadd.f32 %v1855, %v1863
    %v1872 = vadd.f32 %v1856, %v1864
    %v1873 = vadd.f32 %v1857, %v1865
    %1874 = vrot.lane.b32.xlu0 %v1824, 16
    %v1875 = vpop.permute.xlu0 %1874
    %1876 = vrot.lane.b32.xlu0 %v1825, 16
    %v1877 = vpop.permute.xlu0 %1876
    %1878 = vrot.lane.b32.xlu0 %v1826, 16
    %v1879 = vpop.permute.xlu0 %1878
    %1880 = vrot.lane.b32.xlu0 %v1827, 16
    %v1881 = vpop.permute.xlu0 %1880
    %v1882 = vsel %vm342, %v1879, %v1881
    %v1883 = vsel %vm342, %v1877, %v1879
    %v1884 = vsel %vm342, %v1875, %v1877
    %v1885 = vsel %vm342, %v1881, %v1875
    %v1886 = vmul.f32 %v1885, %v350
    %v1887 = vmul.f32 %v1884, %v354
    %v1888 = vmul.f32 %v1883, %v358
    %v1889 = vmul.f32 %v1882, %v362
    %1890 = vset.pattern.permute.xlu0 1
    %1891 = vperm.xlu0 %1890, %v1828
    %v1892 = vpop.permute.xlu0 %1891
    %v1894 = vmul.f32 %v1886, %v1892
    %v1895 = vmul.f32 %v1887, %v1892
    %v1896 = vmul.f32 %v1888, %v1892
    %v1897 = vmul.f32 %v1889, %v1892
    %v1898 = vadd.f32 %v1870, %v1894
    %v1899 = vadd.f32 %v1871, %v1895
    %v1900 = vadd.f32 %v1872, %v1896
    %v1901 = vadd.f32 %v1873, %v1897
    %v1906 = vrot.slane %v1894, 4
    %v1907 = vrot.slane %v1895, 4
    %v1908 = vrot.slane %v1896, 4
    %v1909 = vrot.slane %v1897, 4
    %v1914 = vadd.f32 %v1898, %v1906
    %v1915 = vadd.f32 %v1899, %v1907
    %v1916 = vadd.f32 %v1900, %v1908
    %v1917 = vadd.f32 %v1901, %v1909
    %1918 = vrot.lane.b32.xlu0 %v1824, 15
    %v1919 = vpop.permute.xlu0 %1918
    %1920 = vrot.lane.b32.xlu0 %v1825, 15
    %v1921 = vpop.permute.xlu0 %1920
    %1922 = vrot.lane.b32.xlu0 %v1826, 15
    %v1923 = vpop.permute.xlu0 %1922
    %1924 = vrot.lane.b32.xlu0 %v1827, 15
    %v1925 = vpop.permute.xlu0 %1924
    %v1926 = vsel %vm375, %v1923, %v1925
    %v1927 = vsel %vm375, %v1921, %v1923
    %v1928 = vsel %vm375, %v1919, %v1921
    %v1929 = vsel %vm375, %v1925, %v1919
    %v1930 = vmul.f32 %v1929, %v383
    %v1931 = vmul.f32 %v1928, %v387
    %v1932 = vmul.f32 %v1927, %v391
    %v1933 = vmul.f32 %v1926, %v395
    %1934 = vset.pattern.permute.xlu0 2
    %1935 = vperm.xlu0 %1934, %v1828
    %v1936 = vpop.permute.xlu0 %1935
    %v1938 = vmul.f32 %v1930, %v1936
    %v1939 = vmul.f32 %v1931, %v1936
    %v1940 = vmul.f32 %v1932, %v1936
    %v1941 = vmul.f32 %v1933, %v1936
    %v1942 = vadd.f32 %v1914, %v1938
    %v1943 = vadd.f32 %v1915, %v1939
    %v1944 = vadd.f32 %v1916, %v1940
    %v1945 = vadd.f32 %v1917, %v1941
    %v1950 = vrot.slane %v1938, 4
    %v1951 = vrot.slane %v1939, 4
    %v1952 = vrot.slane %v1940, 4
    %v1953 = vrot.slane %v1941, 4
    %v1958 = vadd.f32 %v1942, %v1950
    %v1959 = vadd.f32 %v1943, %v1951
    %v1960 = vadd.f32 %v1944, %v1952
    %v1961 = vadd.f32 %v1945, %v1953
    %1962 = vrot.lane.b32.xlu0 %v1824, 1
    %v1963 = vpop.permute.xlu0 %1962
    %1964 = vrot.lane.b32.xlu0 %v1825, 1
    %v1965 = vpop.permute.xlu0 %1964
    %1966 = vrot.lane.b32.xlu0 %v1826, 1
    %v1967 = vpop.permute.xlu0 %1966
    %1968 = vrot.lane.b32.xlu0 %v1827, 1
    %v1969 = vpop.permute.xlu0 %1968
    %v1970 = vsel %vm408, %v1967, %v1969
    %v1971 = vsel %vm408, %v1965, %v1967
    %v1972 = vsel %vm408, %v1963, %v1965
    %v1973 = vsel %vm408, %v1969, %v1963
    %v1974 = vmul.f32 %v1973, %v416
    %v1975 = vmul.f32 %v1972, %v420
    %v1976 = vmul.f32 %v1971, %v424
    %v1977 = vmul.f32 %v1970, %v428
    %1978 = vset.pattern.permute.xlu0 3
    %1979 = vperm.xlu0 %1978, %v1828
    %v1980 = vpop.permute.xlu0 %1979
    %v1982 = vmul.f32 %v1974, %v1980
    %v1983 = vmul.f32 %v1975, %v1980
    %v1984 = vmul.f32 %v1976, %v1980
    %v1985 = vmul.f32 %v1977, %v1980
    %v1986 = vadd.f32 %v1958, %v1982
    %v1987 = vadd.f32 %v1959, %v1983
    %v1988 = vadd.f32 %v1960, %v1984
    %v1989 = vadd.f32 %v1961, %v1985
    %v1994 = vrot.slane %v1982, 4
    %v1995 = vrot.slane %v1983, 4
    %v1996 = vrot.slane %v1984, 4
    %v1997 = vrot.slane %v1985, 4
    %v2002 = vadd.f32 %v1986, %v1994
    %v2003 = vadd.f32 %v1987, %v1995
    %v2004 = vadd.f32 %v1988, %v1996
    %v2005 = vadd.f32 %v1989, %v1997
    %2006 = vset.pattern.permute.xlu0 4
    %2007 = vperm.xlu0 %2006, %v1828
    %v2008 = vpop.permute.xlu0 %2007
    %v2010 = vmul.f32 %v1824, %v2008
    %v2011 = vmul.f32 %v1825, %v2008
    %v2012 = vmul.f32 %v1826, %v2008
    %v2013 = vmul.f32 %v1827, %v2008
    %v2014 = vadd.f32 %v2002, %v2010
    %v2015 = vadd.f32 %v2003, %v2011
    %v2016 = vadd.f32 %v2004, %v2012
    %v2017 = vadd.f32 %v2005, %v2013
    %v2022 = vrot.slane %v2010, 4
    %v2023 = vrot.slane %v2011, 4
    %v2024 = vrot.slane %v2012, 4
    %v2025 = vrot.slane %v2013, 4
    %v2030 = vadd.f32 %v2014, %v2022
    %v2031 = vadd.f32 %v2015, %v2023
    %v2032 = vadd.f32 %v2016, %v2024
    %v2033 = vadd.f32 %v2017, %v2025
    %2034 = vrot.lane.b32.xlu0 %v1824, 127
    %v2035 = vpop.permute.xlu0 %2034
    %2036 = vrot.lane.b32.xlu0 %v1825, 127
    %v2037 = vpop.permute.xlu0 %2036
    %2038 = vrot.lane.b32.xlu0 %v1826, 127
    %v2039 = vpop.permute.xlu0 %2038
    %2040 = vrot.lane.b32.xlu0 %v1827, 127
    %v2041 = vpop.permute.xlu0 %2040
    %v2042 = vsel %vm441, %v2039, %v2041
    %v2043 = vsel %vm441, %v2037, %v2039
    %v2044 = vsel %vm441, %v2035, %v2037
    %v2045 = vsel %vm441, %v2041, %v2035
    %v2046 = vmul.f32 %v2044, %v449
    %v2047 = vmul.f32 %v2043, %v453
    %v2048 = vmul.f32 %v2042, %v457
    %v2049 = vmul.f32 %v2045, %v461
    %2050 = vset.pattern.permute.xlu0 5
    %2051 = vperm.xlu0 %2050, %v1828
    %v2052 = vpop.permute.xlu0 %2051
    %v2054 = vmul.f32 %v2046, %v2052
    %v2055 = vmul.f32 %v2047, %v2052
    %v2056 = vmul.f32 %v2048, %v2052
    %v2057 = vmul.f32 %v2049, %v2052
    %v2058 = vadd.f32 %v2030, %v2054
    %v2059 = vadd.f32 %v2031, %v2055
    %v2060 = vadd.f32 %v2032, %v2056
    %v2061 = vadd.f32 %v2033, %v2057
    %v2066 = vrot.slane %v2054, 4
    %v2067 = vrot.slane %v2055, 4
    %v2068 = vrot.slane %v2056, 4
    %v2069 = vrot.slane %v2057, 4
    %v2074 = vadd.f32 %v2058, %v2066
    %v2075 = vadd.f32 %v2059, %v2067
    %v2076 = vadd.f32 %v2060, %v2068
    %v2077 = vadd.f32 %v2061, %v2069
    %2078 = vrot.lane.b32.xlu0 %v1824, 113
    %v2079 = vpop.permute.xlu0 %2078
    %2080 = vrot.lane.b32.xlu0 %v1825, 113
    %v2081 = vpop.permute.xlu0 %2080
    %2082 = vrot.lane.b32.xlu0 %v1826, 113
    %v2083 = vpop.permute.xlu0 %2082
    %2084 = vrot.lane.b32.xlu0 %v1827, 113
    %v2085 = vpop.permute.xlu0 %2084
    %v2086 = vsel %vm474, %v2083, %v2085
    %v2087 = vsel %vm474, %v2081, %v2083
    %v2088 = vsel %vm474, %v2079, %v2081
    %v2089 = vsel %vm474, %v2085, %v2079
    %v2090 = vmul.f32 %v2088, %v482
    %v2091 = vmul.f32 %v2087, %v486
    %v2092 = vmul.f32 %v2086, %v490
    %v2093 = vmul.f32 %v2089, %v494
    %2094 = vset.pattern.permute.xlu0 6
    %2095 = vperm.xlu0 %2094, %v1828
    %v2096 = vpop.permute.xlu0 %2095
    %v2098 = vmul.f32 %v2090, %v2096
    %v2099 = vmul.f32 %v2091, %v2096
    %v2100 = vmul.f32 %v2092, %v2096
    %v2101 = vmul.f32 %v2093, %v2096
    %v2102 = vadd.f32 %v2074, %v2098
    %v2103 = vadd.f32 %v2075, %v2099
    %v2104 = vadd.f32 %v2076, %v2100
    %v2105 = vadd.f32 %v2077, %v2101
    %v2110 = vrot.slane %v2098, 4
    %v2111 = vrot.slane %v2099, 4
    %v2112 = vrot.slane %v2100, 4
    %v2113 = vrot.slane %v2101, 4
    %v2118 = vadd.f32 %v2102, %v2110
    %v2119 = vadd.f32 %v2103, %v2111
    %v2120 = vadd.f32 %v2104, %v2112
    %v2121 = vadd.f32 %v2105, %v2113
    %2122 = vrot.lane.b32.xlu0 %v1824, 112
    %v2123 = vpop.permute.xlu0 %2122
    %2124 = vrot.lane.b32.xlu0 %v1825, 112
    %v2125 = vpop.permute.xlu0 %2124
    %2126 = vrot.lane.b32.xlu0 %v1826, 112
    %v2127 = vpop.permute.xlu0 %2126
    %2128 = vrot.lane.b32.xlu0 %v1827, 112
    %v2129 = vpop.permute.xlu0 %2128
    %v2130 = vsel %vm507, %v2127, %v2129
    %v2131 = vsel %vm507, %v2125, %v2127
    %v2132 = vsel %vm507, %v2123, %v2125
    %v2133 = vsel %vm507, %v2129, %v2123
    %v2134 = vmul.f32 %v2132, %v515
    %v2135 = vmul.f32 %v2131, %v519
    %v2136 = vmul.f32 %v2130, %v523
    %v2137 = vmul.f32 %v2133, %v527
    %2138 = vset.pattern.permute.xlu0 7
    %2139 = vperm.xlu0 %2138, %v1828
    %v2140 = vpop.permute.xlu0 %2139
    %v2142 = vmul.f32 %v2134, %v2140
    %v2143 = vmul.f32 %v2135, %v2140
    %v2144 = vmul.f32 %v2136, %v2140
    %v2145 = vmul.f32 %v2137, %v2140
    %v2146 = vadd.f32 %v2118, %v2142
    %v2147 = vadd.f32 %v2119, %v2143
    %v2148 = vadd.f32 %v2120, %v2144
    %v2149 = vadd.f32 %v2121, %v2145
    %v2154 = vrot.slane %v2142, 4
    %v2155 = vrot.slane %v2143, 4
    %v2156 = vrot.slane %v2144, 4
    %v2157 = vrot.slane %v2145, 4
    %v2162 = vadd.f32 %v2146, %v2154
    %v2163 = vadd.f32 %v2147, %v2155
    %v2164 = vadd.f32 %v2148, %v2156
    %v2165 = vadd.f32 %v2149, %v2157
    %2166 = vrot.lane.b32.xlu0 %v1824, 111
    %v2167 = vpop.permute.xlu0 %2166
    %2168 = vrot.lane.b32.xlu0 %v1825, 111
    %v2169 = vpop.permute.xlu0 %2168
    %2170 = vrot.lane.b32.xlu0 %v1826, 111
    %v2171 = vpop.permute.xlu0 %2170
    %2172 = vrot.lane.b32.xlu0 %v1827, 111
    %v2173 = vpop.permute.xlu0 %2172
    %v2174 = vsel %vm540, %v2171, %v2173
    %v2175 = vsel %vm540, %v2169, %v2171
    %v2176 = vsel %vm540, %v2167, %v2169
    %v2177 = vsel %vm540, %v2173, %v2167
    %v2178 = vmul.f32 %v2176, %v548
    %v2179 = vmul.f32 %v2175, %v552
    %v2180 = vmul.f32 %v2174, %v556
    %v2181 = vmul.f32 %v2177, %v560
    %2182 = vset.pattern.permute.xlu0 8
    %2183 = vperm.xlu0 %2182, %v1828
    %v2184 = vpop.permute.xlu0 %2183
    %v2186 = vmul.f32 %v2178, %v2184
    %v2187 = vmul.f32 %v2179, %v2184
    %v2188 = vmul.f32 %v2180, %v2184
    %v2189 = vmul.f32 %v2181, %v2184
    %v2190 = vadd.f32 %v2162, %v2186
    %v2191 = vadd.f32 %v2163, %v2187
    %v2192 = vadd.f32 %v2164, %v2188
    %v2193 = vadd.f32 %v2165, %v2189
    %v2198 = vrot.slane %v2186, 4
    %v2199 = vrot.slane %v2187, 4
    %v2200 = vrot.slane %v2188, 4
    %v2201 = vrot.slane %v2189, 4
    %v2206 = vadd.f32 %v2190, %v2198
    %v2207 = vadd.f32 %v2191, %v2199
    %v2208 = vadd.f32 %v2192, %v2200
    %v2209 = vadd.f32 %v2193, %v2201
    %v2210 = vld [vmem:[#allocation2] sm:$0x1]
    %v2212 = vlaneseq
    %v2213 = vshrl.u32 %v2212, 7
    %v2214 = vsub.s32 0, %v2213
    %v2215 = vrot.slane %v2210, %v2214
    %2216 = vset.pattern.permute.xlu0 0
    %2217 = vperm.xlu0 %2216, %v2215
    %v2218 = vpop.permute.xlu0 %2217
    %v2220 = vadd.f32 %v2206, %v2218
    %v2221 = vadd.f32 %v2207, %v2218
    %v2222 = vadd.f32 %v2208, %v2218
    %v2223 = vadd.f32 %v2209, %v2218
    %v2224 = vmul.f32 %v2220, 0.5
    %v2225 = vmul.f32 %v2221, 0.5
    %v2226 = vmul.f32 %v2222, 0.5
    %v2227 = vmul.f32 %v2223, 0.5
    %v2228 = vtanh.pop %v2224
    %v2229 = vtanh.pop %v2225
    %v2230 = vtanh.pop %v2226
    %v2231 = vtanh.pop %v2227
    %v2232 = vadd.f32 %v2228, 1.0
    %v2233 = vadd.f32 %v2229, 1.0
    %v2234 = vadd.f32 %v2230, 1.0
    %v2235 = vadd.f32 %v2231, 1.0
    %v2236 = vmul.f32 %v2232, 0.5
    %v2237 = vmul.f32 %v2233, 0.5
    %v2238 = vmul.f32 %v2234, 0.5
    %v2239 = vmul.f32 %v2235, 0.5
    %v2240 = vlaneseq
    %v2241 = vshrl.u32 %v2240, 7
    %v2242 = vsub.s32 0, %v2241
    %v2243 = vrot.slane %v2236, %v2242
    %v2244 = vlaneseq
    %v2245 = vshrl.u32 %v2244, 7
    %v2246 = vsub.s32 0, %v2245
    %v2247 = vrot.slane %v2237, %v2246
    %v2248 = vlaneseq
    %v2249 = vshrl.u32 %v2248, 7
    %v2250 = vsub.s32 0, %v2249
    %v2251 = vrot.slane %v2238, %v2250
    %v2252 = vlaneseq
    %v2253 = vshrl.u32 %v2252, 7
    %v2254 = vsub.s32 0, %v2253
    %v2255 = vrot.slane %v2239, %v2254
    %v2256 = vmul.f32 %v279, %v2243
    %v2257 = vmul.f32 %v280, %v2247
    %v2258 = vmul.f32 %v281, %v2251
    %v2259 = vmul.f32 %v282, %v2255
    %v2260 = vlaneseq
    %v2261 = vshrl.u32 %v2260, 7
    %v2262 = vsub.s32 1, %v2261
    %v2263 = vrot.slane %v2236, %v2262
    %v2264 = vlaneseq
    %v2265 = vshrl.u32 %v2264, 7
    %v2266 = vsub.s32 1, %v2265
    %v2267 = vrot.slane %v2237, %v2266
    %v2268 = vlaneseq
    %v2269 = vshrl.u32 %v2268, 7
    %v2270 = vsub.s32 1, %v2269
    %v2271 = vrot.slane %v2238, %v2270
    %v2272 = vlaneseq
    %v2273 = vshrl.u32 %v2272, 7
    %v2274 = vsub.s32 1, %v2273
    %v2275 = vrot.slane %v2239, %v2274
    %v2276 = vmul.f32 %v796, %v2263
    %v2277 = vmul.f32 %v797, %v2267
    %v2278 = vmul.f32 %v798, %v2271
    %v2279 = vmul.f32 %v799, %v2275
    %v2280 = vlaneseq
    %v2281 = vshrl.u32 %v2280, 7
    %v2282 = vsub.s32 2, %v2281
    %v2283 = vrot.slane %v2236, %v2282
    %v2284 = vlaneseq
    %v2285 = vshrl.u32 %v2284, 7
    %v2286 = vsub.s32 2, %v2285
    %v2287 = vrot.slane %v2237, %v2286
    %v2288 = vlaneseq
    %v2289 = vshrl.u32 %v2288, 7
    %v2290 = vsub.s32 2, %v2289
    %v2291 = vrot.slane %v2238, %v2290
    %v2292 = vlaneseq
    %v2293 = vshrl.u32 %v2292, 7
    %v2294 = vsub.s32 2, %v2293
    %v2295 = vrot.slane %v2239, %v2294
    %v2296 = vmul.f32 %v1161, %v2283
    %v2297 = vmul.f32 %v1162, %v2287
    %v2298 = vmul.f32 %v1163, %v2291
    %v2299 = vmul.f32 %v1164, %v2295
    %v2300 = vlaneseq
    %v2301 = vshrl.u32 %v2300, 7
    %v2302 = vsub.s32 3, %v2301
    %v2303 = vrot.slane %v2236, %v2302
    %v2304 = vlaneseq
    %v2305 = vshrl.u32 %v2304, 7
    %v2306 = vsub.s32 3, %v2305
    %v2307 = vrot.slane %v2237, %v2306
    %v2308 = vlaneseq
    %v2309 = vshrl.u32 %v2308, 7
    %v2310 = vsub.s32 3, %v2309
    %v2311 = vrot.slane %v2238, %v2310
    %v2312 = vlaneseq
    %v2313 = vshrl.u32 %v2312, 7
    %v2314 = vsub.s32 3, %v2313
    %v2315 = vrot.slane %v2239, %v2314
    %v2316 = vmul.f32 %v1550, %v2303
    %v2317 = vmul.f32 %v1551, %v2307
    %v2318 = vmul.f32 %v1552, %v2311
    %v2319 = vmul.f32 %v1553, %v2315
    %v2324 = vrot.slane %v2276, 4
    %v2325 = vrot.slane %v2277, 4
    %v2326 = vrot.slane %v2278, 4
    %v2327 = vrot.slane %v2279, 4
    %v2336 = vrot.slane %v2316, 4
    %v2337 = vrot.slane %v2317, 4
    %v2338 = vrot.slane %v2318, 4
    %v2339 = vrot.slane %v2319, 4
    %v2344 = vsel %vm613, %v2256, %v2324
    %v2345 = vsel %vm613, %v2257, %v2325
    %v2346 = vsel %vm613, %v2258, %v2326
    %v2347 = vsel %vm613, %v2259, %v2327
    %v2348 = vsel %vm613, %v2296, %v2336
    %v2349 = vsel %vm613, %v2297, %v2337
    %v2350 = vsel %vm613, %v2298, %v2338
    %v2351 = vsel %vm613, %v2299, %v2339
    %v2352 = vld [vmem:[%s6] sm:$0xff]
    %v2353 = vld [vmem:[%s6 + $0x8] sm:$0xff]
    %v2354 = vld [vmem:[#allocation3] sm:$0x1]
    %v2355 = vld [vmem:[%s8] sm:$0xff]
    %v2356 = vld [vmem:[%s8 + $0x8] sm:$0xff]
    %v2357 = vld [vmem:[%s9] sm:$0xff]
    %v2358 = vld [vmem:[%s9 + $0x8] sm:$0xff]
    %v2359 = vadd.f32 %v2344, %v2345
    %2360 = vadd.xlane.f32.xlu0 %v2359
    %v2361 = vpop.xlane.xlu0 %2360
    %v2362 = vadd.f32 %v2348, %v2349
    %2363 = vadd.xlane.f32.xlu0 %v2362
    %v2364 = vpop.xlane.xlu0 %2363
    %v2365 = vmul.f32 %v2361, %v192
    %v2366 = vmul.f32 %v2364, %v192
    %v2367 = vmul.f32 %v2352, %v2365
    %v2368 = vmul.f32 %v2353, %v2366
    %vm2369 = vcmask 7168
    %v2370 = vsel %vm2369, %v2367, 0.0
    %v2371 = vsel %vm2369, %v2368, 0.0
    %v2372 = vadd.f32 %v2370, %v2371
    %v2373 = vrot.slane %v2372, 4
    %v2374 = vadd.f32 %v2372, %v2373
    %v2375 = vrot.slane %v2374, 2
    %v2376 = vadd.f32 %v2374, %v2375
    %v2377 = vrot.slane %v2376, 1
    %v2378 = vadd.f32 %v2376, %v2377
    %v2379 = vadd.f32 %v2378, %v2354
    %v2380 = vmul.f32 %v2379, 0.5
    %v2381 = vmul.f32 %v2379, 0.70710677
    %v2382 = vand.u32 2147483647, %v2381
    %v2383 = vmul.f32 %v2382, 0.3275911
    %v2384 = vadd.f32 %v2383, 1.0
    %v2385 = vrcp.pop %v2384
    %v2386 = vmul.f32 1.0, %v2385
    %v2387 = vmul.f32 %v2386, 1.0614054
    %v2388 = vadd.f32 %v2387, -1.4531521
    %v2389 = vmul.f32 %v2388, %v2386
    %v2390 = vadd.f32 %v2389, 1.4214138
    %v2391 = vmul.f32 %v2390, %v2386
    %v2392 = vadd.f32 %v2391, -0.28449672
    %v2393 = vmul.f32 %v2392, %v2386
    %v2394 = vadd.f32 %v2393, 0.2548296
    %v2395 = vmul.f32 %v2394, %v2386
    %v2396 = vsub.f32 0.0, %v2382
    %v2397 = vmul.f32 %v2396, %v2382
    %v2398 = vmul.f32 %v2397, 1.442695
    %v2399 = vpow.pop %v2398
    %v2400 = vmul.f32 %v2395, %v2399
    %v2401 = vsub.f32 1.0, %v2400
    %vm2402 = vcmp.ge.f32.partialorder %v2381, 0.0
    %v2403 = vsub.f32 0.0, %v2401
    %v2404 = vsel %vm2402, %v2401, %v2403
    %v2405 = vadd.f32 %v2404, 1.0
    %v2406 = vmul.f32 %v2380, %v2405
    %v2407 = vlaneseq
    %v2408 = vshrl.u32 %v2407, 7
    %v2409 = vsub.s32 0, %v2408
    %v2410 = vrot.slane %v2406, %v2409
    %v2411 = vmul.f32 %v2355, %v2410
    %v2412 = vmul.f32 %v2356, %v2410
    %v2413 = vadd.f32 %v2411, 0.0
    %v2414 = vadd.f32 %v2412, 0.0
    %v2415 = vadd.f32 %v2413, %v2357
    %v2416 = vadd.f32 %v2414, %v2358
    %v2417 = vmul.f32 %v2415, 0.5
    %v2418 = vmul.f32 %v2416, 0.5
    %v2419 = vtanh.pop %v2417
    %v2420 = vtanh.pop %v2418
    %v2421 = vadd.f32 %v2419, 1.0
    %v2422 = vadd.f32 %v2420, 1.0
    %v2423 = vmul.f32 %v2421, 0.5
    %v2424 = vmul.f32 %v2422, 0.5
    %v2425 = vld [vmem:[#allocation4] sm:$0xff]
    %v2426 = vld [vmem:[#allocation4 + $0x8] sm:$0xff]
    %v2427 = vld [vmem:[#allocation4 + $0x20] sm:$0xff]
    %v2428 = vld [vmem:[#allocation4 + $0x28] sm:$0xff]
    %2430 = vset.pattern.permute.xlu0 0
    %2431 = vperm.xlu0 %2430, %v2423
    %v2432 = vpop.permute.xlu0 %2431
    %2435 = vset.pattern.permute.xlu0 0
    %2436 = vperm.xlu0 %2435, %v2424
    %v2437 = vpop.permute.xlu0 %2436
    %v2439 = vmul.f32 %v2344, %v2432
    %v2440 = vmul.f32 %v2345, %v2432
    %v2441 = vmul.f32 %v2348, %v2437
    %v2442 = vmul.f32 %v2349, %v2437
    %v2443 = vadd.f32 %v2439, %v2425
    %v2444 = vadd.f32 %v2440, %v2426
    %v2445 = vadd.f32 %v2441, %v2427
    %v2446 = vadd.f32 %v2442, %v2428
    %vm2447 = vcmp.ge.f32.partialorder %v2443, 0.0
    %vm2448 = vcmp.ge.f32.partialorder %v2444, 0.0
    %vm2449 = vcmp.ge.f32.partialorder %v2445, 0.0
    %vm2450 = vcmp.ge.f32.partialorder %v2446, 0.0
    %v2451 = vmul.f32 %v2443, 0.01
    %v2452 = vmul.f32 %v2444, 0.01
    %v2453 = vmul.f32 %v2445, 0.01
    %v2454 = vmul.f32 %v2446, 0.01
    %v2455 = vsel %vm2447, %v2443, %v2451
    %v2456 = vsel %vm2448, %v2444, %v2452
    %v2457 = vsel %vm2449, %v2445, %v2453
    %v2458 = vsel %vm2450, %v2446, %v2454
    %2459 = vst [vmem:[#allocation9] sm:$0xff] %v2455
    %2460 = vst [vmem:[#allocation9 + $0x8] sm:$0xff] %v2456
    %2461 = vst [vmem:[#allocation9 + $0x20] sm:$0xff] %v2457
    %2462 = vst [vmem:[#allocation9 + $0x28] sm:$0xff] %v2458
    %v2463 = vadd.f32 %v2346, %v2347
    %2464 = vadd.xlane.f32.xlu0 %v2463
    %v2465 = vpop.xlane.xlu0 %2464
    %v2466 = vadd.f32 %v2350, %v2351
    %2467 = vadd.xlane.f32.xlu0 %v2466
    %v2468 = vpop.xlane.xlu0 %2467
    %v2469 = vmul.f32 %v2465, %v192
    %v2470 = vmul.f32 %v2468, %v192
    %v2471 = vmul.f32 %v2352, %v2469
    %v2472 = vmul.f32 %v2353, %v2470
    %v2473 = vsel %vm2369, %v2471, 0.0
    %v2474 = vsel %vm2369, %v2472, 0.0
    %v2475 = vadd.f32 %v2473, %v2474
    %v2476 = vrot.slane %v2475, 4
    %v2477 = vadd.f32 %v2475, %v2476
    %v2478 = vrot.slane %v2477, 2
    %v2479 = vadd.f32 %v2477, %v2478
    %v2480 = vrot.slane %v2479, 1
    %v2481 = vadd.f32 %v2479, %v2480
    %v2482 = vadd.f32 %v2481, %v2354
    %v2483 = vmul.f32 %v2482, 0.5
    %v2484 = vmul.f32 %v2482, 0.70710677
    %v2485 = vand.u32 2147483647, %v2484
    %v2486 = vmul.f32 %v2485, 0.3275911
    %v2487 = vadd.f32 %v2486, 1.0
    %v2488 = vrcp.pop %v2487
    %v2489 = vmul.f32 1.0, %v2488
    %v2490 = vmul.f32 %v2489, 1.0614054
    %v2491 = vadd.f32 %v2490, -1.4531521
    %v2492 = vmul.f32 %v2491, %v2489
    %v2493 = vadd.f32 %v2492, 1.4214138
    %v2494 = vmul.f32 %v2493, %v2489
    %v2495 = vadd.f32 %v2494, -0.28449672
    %v2496 = vmul.f32 %v2495, %v2489
    %v2497 = vadd.f32 %v2496, 0.2548296
    %v2498 = vmul.f32 %v2497, %v2489
    %v2499 = vsub.f32 0.0, %v2485
    %v2500 = vmul.f32 %v2499, %v2485
    %v2501 = vmul.f32 %v2500, 1.442695
    %v2502 = vpow.pop %v2501
    %v2503 = vmul.f32 %v2498, %v2502
    %v2504 = vsub.f32 1.0, %v2503
    %vm2505 = vcmp.ge.f32.partialorder %v2484, 0.0
    %v2506 = vsub.f32 0.0, %v2504
    %v2507 = vsel %vm2505, %v2504, %v2506
    %v2508 = vadd.f32 %v2507, 1.0
    %v2509 = vmul.f32 %v2483, %v2508
    %v2510 = vlaneseq
    %v2511 = vshrl.u32 %v2510, 7
    %v2512 = vsub.s32 0, %v2511
    %v2513 = vrot.slane %v2509, %v2512
    %v2514 = vmul.f32 %v2355, %v2513
    %v2515 = vmul.f32 %v2356, %v2513
    %v2516 = vadd.f32 %v2514, 0.0
    %v2517 = vadd.f32 %v2515, 0.0
    %v2518 = vadd.f32 %v2516, %v2357
    %v2519 = vadd.f32 %v2517, %v2358
    %v2520 = vmul.f32 %v2518, 0.5
    %v2521 = vmul.f32 %v2519, 0.5
    %v2522 = vtanh.pop %v2520
    %v2523 = vtanh.pop %v2521
    %v2524 = vadd.f32 %v2522, 1.0
    %v2525 = vadd.f32 %v2523, 1.0
    %v2526 = vmul.f32 %v2524, 0.5
    %v2527 = vmul.f32 %v2525, 0.5
    %v2528 = vld [vmem:[#allocation4 + $0x10] sm:$0xff]
    %v2529 = vld [vmem:[#allocation4 + $0x18] sm:$0xff]
    %v2530 = vld [vmem:[#allocation4 + $0x30] sm:$0xff]
    %v2531 = vld [vmem:[#allocation4 + $0x38] sm:$0xff]
    %2533 = vset.pattern.permute.xlu0 0
    %2534 = vperm.xlu0 %2533, %v2526
    %v2535 = vpop.permute.xlu0 %2534
    %2538 = vset.pattern.permute.xlu0 0
    %2539 = vperm.xlu0 %2538, %v2527
    %v2540 = vpop.permute.xlu0 %2539
    %v2542 = vmul.f32 %v2346, %v2535
    %v2543 = vmul.f32 %v2347, %v2535
    %v2544 = vmul.f32 %v2350, %v2540
    %v2545 = vmul.f32 %v2351, %v2540
    %v2546 = vadd.f32 %v2542, %v2528
    %v2547 = vadd.f32 %v2543, %v2529
    %v2548 = vadd.f32 %v2544, %v2530
    %v2549 = vadd.f32 %v2545, %v2531
    %vm2550 = vcmp.ge.f32.partialorder %v2546, 0.0
    %vm2551 = vcmp.ge.f32.partialorder %v2547, 0.0
    %vm2552 = vcmp.ge.f32.partialorder %v2548, 0.0
    %vm2553 = vcmp.ge.f32.partialorder %v2549, 0.0
    %v2554 = vmul.f32 %v2546, 0.01
    %v2555 = vmul.f32 %v2547, 0.01
    %v2556 = vmul.f32 %v2548, 0.01
    %v2557 = vmul.f32 %v2549, 0.01
    %v2558 = vsel %vm2550, %v2546, %v2554
    %v2559 = vsel %vm2551, %v2547, %v2555
    %v2560 = vsel %vm2552, %v2548, %v2556
    %v2561 = vsel %vm2553, %v2549, %v2557
    %2562 = vst [vmem:[#allocation9 + $0x10] sm:$0xff] %v2558
    %2563 = vst [vmem:[#allocation9 + $0x18] sm:$0xff] %v2559
    %2564 = vst [vmem:[#allocation9 + $0x30] sm:$0xff] %v2560
    %2565 = vst [vmem:[#allocation9 + $0x38] sm:$0xff] %v2561
    // Predicated region
    $region50: #{tpu_custom_call.1} parent=1 // pred_check
      _
    $region51: #{tpu_custom_call.1} parent=1 // pred_check_branch
      %2567 = sbr.rel (0) target = $region53
    $region52: #{tpu_custom_call.1} parent=1 // pred_region
      %s2569 = ssub.s32 1024, 1024
      %2570 = vsyncadd [#allocation6], %s2569
      %s2571 = sshll.u32 [#allocation9], 4
      %s2572 = int_to_ptr.vmem [resolvable:$true] %s2571
      %2577 = dma.vmem_to_hbm [thread:$0]  %s2572, 1024, %s10, [#allocation6], 512, 512, 32
    $region53: #{tpu_custom_call.1} parent=1 // pred_fallthru
      _
    // Predicated region
    $region54: #{tpu_custom_call.1} parent=1 // pred_check
      _
    $region55: #{tpu_custom_call.1} parent=1 // pred_check_branch
      %2579 = sbr.rel (0) target = $region57
    $region56: #{tpu_custom_call.1} parent=1 // pred_region
      %2580 = dma.done [#allocation6], 1024
    $region57: #{tpu_custom_call.1} parent=1 // pred_fallthru
      _
    %2581 = vsyncpa [#allocation5], 1
    %2582 = vsyncpa [#allocation8], 1
    %2583 = vsyncpa [#allocation6], 1

</llo_original>
